<compile_context>
chip_gen: v7x
topology: tpu7x:2x2x1
jax: 0.10.0
libtpu: 0.0.40
codegen_flags: <defaults>
</compile_context>

<pallas_src>
import functools

import jax
import jax.numpy as jnp
from jax import lax
from jax.experimental import pallas as pl
from jax.experimental.pallas import tpu as pltpu

# ----------------------------------------------------------------------------
# Sizes (toy shapes consistent with the module)
# ----------------------------------------------------------------------------
HIDDEN = 32        # hidden_dim of the model
N_PAD = 32         # all node sets padded to 32 rows (P already has 32)
K_PAD = 32         # per-type raw feature slab width (max raw feat dim is 24)
N_TYPES = 4

USE_NODES = ["P", "A", "F", "V"]                 # type order; index 0 = main node
MP = [("P", "A"), ("P", "F"), ("P", "V")]        # meta-path: P -> A/F/V
SCHEMA = [("A", "P"), ("F", "P"), ("V", "P")]    # schema:    A/F/V -> P

# schema relation r is the MASKED emb2 relation of view VIEW_OF_REL[r]:
#   rel1 (F,P) -> view0 (loss1), rel0 (A,P) -> view1 (loss2), rel2 (V,P) -> view2 (loss3)
VIEW_OF_REL = (1, 0, 2)
# unmasked schema relations summed into h1 for each view (schema_dict1/2/3)
H1_PAIRS = ((0, 2), (1, 2), (0, 1))

NEG_INF = -1e9     # additive adjacency mask value (finite, exp underflows to 0)


# ----------------------------------------------------------------------------
# Kernel helpers (operate on values; fully unrolled at trace time)
# ----------------------------------------------------------------------------

def _prelu(x, slope):
    return jnp.where(x > 0, x, slope * x)


def _attention(a_d, a_s, adj_bias):
    # PyG-style masked segment softmax over incoming edges of every dst row.
    e = a_d + a_s                             # (Nd, Ns): att_dst[i] + att_src[j]
    e = jnp.where(e > 0, e, 0.01 * e)         # F.leaky_relu (default slope)
    e = e + adj_bias                          # additive 0 / -1e9 adjacency mask
    m = jnp.max(e, axis=-1, keepdims=True)
    p = jnp.exp(e - m)
    den = jnp.sum(p, axis=-1, keepdims=True)  # >= 1 for every row
    # att_drop is identity (eval mode); approx reciprocal runs on the EUP slot.
    return p * pl.reciprocal(den, approx=True)


def _bn_prelu(out, rmask, gamma, beta, slope):
    # BatchNorm1d with training-mode batch statistics over valid rows + PReLU.
    # Padded / invalid dst rows are zeroed on output (robust even if a padded
    # row had no valid incoming edge under the additive mask).
    cnt = jnp.sum(rmask, axis=0, keepdims=True)
    inv = 1.0 / cnt
    mean = jnp.sum(out * rmask, axis=0, keepdims=True) * inv
    xc = out - mean
    var = jnp.sum(xc * xc * rmask, axis=0, keepdims=True) * inv
    y = xc * lax.rsqrt(var + 1e-5) * gamma + beta
    return _prelu(y, slope) * rmask


# ----------------------------------------------------------------------------
# The single fused kernel
# ----------------------------------------------------------------------------

def _cross_view_kernel(xcat_ref, wbig_ref, pprm_ref,
                       adjb_mp_ref, prm_mp_ref, rmask_mp_ref,
                       adjb_sc_ref, prm_sc_ref, p_rmask_ref,
                       mvec_ref, loss_ref):
    f32 = jnp.float32
    H = HIDDEN

    # --- 1) all four Linear+PReLU projections: one block-diag 128-wide matmul
    hcat = jnp.dot(xcat_ref[...], wbig_ref[...], preferred_element_type=f32)
    pprm = pprm_ref[...]                                   # (2, 4H): bias ; slope
    hcat = _prelu(hcat + pprm[0:1, :], pprm[1:2, :])       # (N, 4H)
    h = [hcat[:, t * H:(t + 1) * H] for t in range(N_TYPES)]  # P, A, F, V
    h_p = h[0]
    h_p_b = h_p.astype(jnp.bfloat16)

    # --- 2) meta-path GAT+BN+PReLU (P -> A/F/V): shared src operand h[P],
    #        the 3 relations' alpha blocks stacked along M into one MXU matmul.
    alphas, mp_prm = [], []
    for r in range(len(MP)):
        prm = prm_mp_ref[r]                                # (6, H) packed params
        a_s = lax.dot_general(prm[0:1, :], h_p, (((1,), (1,)), ((), ())),
                              preferred_element_type=f32)  # (1, N) src scores
        a_d = jnp.sum(h[r + 1] * prm[1:2, :], axis=-1, keepdims=True)  # (N, 1)
        alphas.append(_attention(a_d, a_s, adjb_mp_ref[r]))
        mp_prm.append(prm)
    alpha_stack = jnp.concatenate(alphas, axis=0).astype(jnp.bfloat16)  # (3N, N)
    agg = jnp.dot(alpha_stack, h_p_b, preferred_element_type=f32)       # (3N, H)
    h_mp = []
    for r in range(len(MP)):
        prm = mp_prm[r]
        out = agg[r * N_PAD:(r + 1) * N_PAD, :] + prm[2:3, :]
        h_mp.append(_bn_prelu(out, rmask_mp_ref[r],
                              prm[3:4, :], prm[4:5, :], prm[5:6, :]))

    # --- 3) schema GAT+BN+PReLU (A/F/V -> P): each relation is evaluated once
    #        unmasked (for the h1 sums) and once with the masked main_h of the
    #        view that reconstructs through it.  a_s, adjacency and the src
    #        operand are shared; the masked alpha only differs through
    #        a_d * fmask (zeroing the dst features row-scales the dst score).
    p_rm = p_rmask_ref[...]                                # (N, 1) all-valid here
    unmasked = [None] * len(SCHEMA)
    masked = [None] * len(SCHEMA)                          # indexed by view
    for r in range(len(SCHEMA)):
        prm = prm_sc_ref[r]
        xs = h_mp[r]                                       # h[A/F/V] after mp stage
        a_s = lax.dot_general(prm[0:1, :], xs, (((1,), (1,)), ((), ())),
                              preferred_element_type=f32)  # (1, N)
        a_d = jnp.sum(h_p * prm[1:2, :], axis=-1, keepdims=True)        # (N, 1)
        adjb = adjb_sc_ref[r]
        v = VIEW_OF_REL[r]
        fmask = 1.0 - mvec_ref[v]                          # (N, 1): 0 on masked rows
        alpha2 = jnp.concatenate(
            [_attention(a_d, a_s, adjb),                   # xd = h[P]
             _attention(a_d * fmask, a_s, adjb)],          # xd = masked main_h
            axis=0).astype(jnp.bfloat16)                   # (2N, N)
        agg2 = jnp.dot(alpha2, xs.astype(jnp.bfloat16),
                       preferred_element_type=f32)         # (2N, H)
        bias, gamma = prm[2:3, :], prm[3:4, :]
        beta, slope = prm[4:5, :], prm[5:6, :]
        unmasked[r] = _bn_prelu(agg2[:N_PAD] + bias, p_rm, gamma, beta, slope)
        masked[v] = _bn_prelu(agg2[N_PAD:] + bias, p_rm, gamma, beta, slope)

    # --- 4) masked SCE reconstruction losses, one per view, accumulated.
    # TODO(synk): h1.detach() only affects backward; the forward value is identical.
    total = jnp.zeros((1, 1), f32)
    for v in range(len(SCHEMA)):
        a_i, b_i = H1_PAIRS[v]
        h1 = unmasked[a_i] + unmasked[b_i]
        emb2 = masked[v]
        w = mvec_ref[v]                                    # (N, 1): 1.0 on masked rows
        xn = emb2 * lax.rsqrt(jnp.maximum(
            jnp.sum(emb2 * emb2, axis=-1, keepdims=True), 1e-24))
        yn = h1 * lax.rsqrt(jnp.maximum(
            jnp.sum(h1 * h1, axis=-1, keepdims=True), 1e-24))
        cos = jnp.sum(xn * yn, axis=-1, keepdims=True)     # (N, 1)
        n_mask = jnp.sum(w, axis=0, keepdims=True)         # (1, 1)
        total = total + jnp.sum((1.0 - cos) * w, axis=0, keepdims=True) / n_mask

    loss_ref[...] = total


# ----------------------------------------------------------------------------
# Forward pass: one pallas_call, everything VMEM resident
# ----------------------------------------------------------------------------

def cross_view_forward(params, data, mask_keys, rates):
    n_main = N_PAD
    # per-view dense mask vectors for the main node type P (1.0 on masked rows)
    mvecs = []
    for v in range(3):
        perm = jax.random.permutation(mask_keys[v], n_main)
        n_mask = int(rates[v] * n_main)
        mvecs.append(jnp.zeros((n_main,), jnp.float32).at[perm[:n_mask]].set(1.0))
    mvecs = jnp.stack(mvecs)[..., None]                    # (3, N, 1)

    n_inputs = 10
    out = pl.pallas_call(
        _cross_view_kernel,
        out_shape=jax.ShapeDtypeStruct((1, 1), jnp.float32),
        in_specs=[pl.BlockSpec(memory_space=pltpu.MemorySpace.VMEM)
                  for _ in range(n_inputs)],
        out_specs=pl.BlockSpec(memory_space=pltpu.MemorySpace.VMEM),
    )(data["x_cat"], params["w_big"], params["proj_prm"],
      data["adjb_mp"], params["prm_mp"], data["rmask_mp"],
      data["adjb_sc"], params["prm_sc"], data["p_rmask"], mvecs)
    return out[0, 0]


# ----------------------------------------------------------------------------
# Deterministic parameter / data construction
# ----------------------------------------------------------------------------

def xavier_normal(key, fan_in, fan_out, gain):
    std = gain * (2.0 / (fan_in + fan_out)) ** 0.5
    return std * jax.random.normal(key, (fan_in, fan_out), dtype=jnp.float32)


def glorot_uniform(key, shape):
    a = (6.0 / (shape[-2] + shape[-1])) ** 0.5
    return jax.random.uniform(key, shape, jnp.float32, -a, a)


def make_gat_params(key):
    # packed rows: [att_src, att_dst, gat_bias, bn_gamma, bn_beta, prelu_slope]
    k1, k2 = jax.random.split(key)
    return jnp.concatenate([
        glorot_uniform(k1, (1, HIDDEN)),
        glorot_uniform(k2, (1, HIDDEN)),
        jnp.zeros((1, HIDDEN), jnp.float32),          # GAT bias
        jnp.ones((1, HIDDEN), jnp.float32),           # BN gamma
        jnp.zeros((1, HIDDEN), jnp.float32),          # BN beta
        jnp.full((1, HIDDEN), 0.25, jnp.float32),     # PReLU slope
    ], axis=0)                                        # (6, HIDDEN)


def rand_adj_bias(key, n_dst, n_src, p=0.3):
    # dense adjacency adj[dst, src] as an additive softmax bias (0 / -1e9)
    a = jax.random.uniform(key, (n_dst, n_src)) < p
    a = a.at[:, 0].set(True)        # every valid dst node has >= 1 incoming edge
    a = jnp.pad(a, ((0, N_PAD - n_dst), (0, N_PAD - n_src)))
    return jnp.where(a, 0.0, NEG_INF).astype(jnp.float32)


if __name__ == "__main__":
    key = jax.random.PRNGKey(0)
    n_nodes = {"P": 32, "A": 24, "F": 16, "V": 8}
    feat_dims = {"P": 24, "A": 16, "F": 16, "V": 8}
    keys = iter(jax.random.split(key, 64))

    # raw features packed into one (N, 4*K) slab and the four Linear layers
    # packed into one block-diagonal (4*K, 4*H) weight (zero blocks -> exact).
    x_cat = jnp.zeros((N_PAD, N_TYPES * K_PAD), jnp.float32)
    w_big = jnp.zeros((N_TYPES * K_PAD, N_TYPES * HIDDEN), jnp.float32)
    proj_bias = []
    for t, nt in enumerate(USE_NODES):
        x = jax.random.normal(next(keys), (n_nodes[nt], feat_dims[nt]),
                              jnp.float32)
        x_cat = x_cat.at[:n_nodes[nt],
                         t * K_PAD:t * K_PAD + feat_dims[nt]].set(x)
        w = xavier_normal(next(keys), feat_dims[nt], HIDDEN, 1.414)
        b = jax.random.uniform(next(keys), (HIDDEN,), jnp.float32,
                               -1.0 / feat_dims[nt] ** 0.5,
                               1.0 / feat_dims[nt] ** 0.5)
        w_big = w_big.at[t * K_PAD:t * K_PAD + feat_dims[nt],
                         t * HIDDEN:(t + 1) * HIDDEN].set(w)
        proj_bias.append(b)
    proj_prm = jnp.stack([jnp.concatenate(proj_bias),
                          jnp.full((N_TYPES * HIDDEN,), 0.25, jnp.float32)])

    params = {
        "w_big": w_big.astype(jnp.bfloat16),              # pure MXU operand
        "proj_prm": proj_prm,                              # (2, 128)
        "prm_mp": jnp.stack([make_gat_params(next(keys)) for _ in MP]),
        "prm_sc": jnp.stack([make_gat_params(next(keys)) for _ in SCHEMA]),
    }

    adjb_mp = jnp.stack([rand_adj_bias(next(keys), n_nodes[dst], n_nodes[src])
                         for src, dst in MP])
    adjb_sc = jnp.stack([rand_adj_bias(next(keys), n_nodes[dst], n_nodes[src])
                         for src, dst in SCHEMA])

    row = jnp.arange(N_PAD, dtype=jnp.int32)[:, None]
    rmask_mp = jnp.stack([(row < n_nodes[dst]).astype(jnp.float32)
                          for src, dst in MP])             # (3, N, 1)
    p_rmask = (row < n_nodes["P"]).astype(jnp.float32)     # (N, 1)

    data = {
        "x_cat": x_cat.astype(jnp.bfloat16),               # pure MXU operand
        "adjb_mp": adjb_mp, "adjb_sc": adjb_sc,
        "rmask_mp": rmask_mp, "p_rmask": p_rmask,
    }

    rates = (0.5, 0.5, 0.5)            # r1, r2, r3
    mask_keys = jax.random.split(next(keys), 3)

    fwd = jax.jit(functools.partial(cross_view_forward, rates=rates))
    loss = fwd(params, data, mask_keys)
    jax.block_until_ready(loss)
    assert loss.shape == () and bool(jnp.isfinite(loss))
    print("KERNEL_OK")
</pallas_src>

<mosaic_0001>
module attributes {stable_mosaic.version = 11 : i64} {
  func.func @_cross_view_kernel(%arg0: memref<32x128xbf16, #tpu.memory_space<vmem>>, %arg1: memref<128x128xbf16, #tpu.memory_space<vmem>>, %arg2: memref<2x128xf32, #tpu.memory_space<vmem>>, %arg3: memref<3x32x32xf32, #tpu.memory_space<vmem>>, %arg4: memref<3x6x32xf32, #tpu.memory_space<vmem>>, %arg5: memref<3x32x1xf32, #tpu.memory_space<vmem>>, %arg6: memref<3x32x32xf32, #tpu.memory_space<vmem>>, %arg7: memref<3x6x32xf32, #tpu.memory_space<vmem>>, %arg8: memref<32x1xf32, #tpu.memory_space<vmem>>, %arg9: memref<3x32x1xf32, #tpu.memory_space<vmem>>, %arg10: memref<1x1xf32, #tpu.memory_space<vmem>>) attributes {dimension_semantics = [], scalar_prefetch = 0 : i64, scratch_operands = 0 : i64, tpu.core_type = #tpu.core_type<tc>} {
    %c0 = arith.constant 0 : index
    %c0_0 = arith.constant 0 : index
    %0 = vector.load %arg0[%c0, %c0_0] : memref<32x128xbf16, #tpu.memory_space<vmem>>, vector<32x128xbf16>
    %c0_1 = arith.constant 0 : index
    %c0_2 = arith.constant 0 : index
    %1 = vector.load %arg1[%c0_1, %c0_2] : memref<128x128xbf16, #tpu.memory_space<vmem>>, vector<128x128xbf16>
    %cst = arith.constant dense<0.000000e+00> : vector<32x128xf32>
    %2 = tpu.matmul %0, %1, %cst {dimension_numbers = #tpu.dot_dimension_numbers<[1], [0], [0], [1], [0, 0, 1, 1], [], []>} : vector<32x128xbf16>, vector<128x128xbf16>, vector<32x128xf32> -> vector<32x128xf32>
    %c0_3 = arith.constant 0 : index
    %c0_4 = arith.constant 0 : index
    %3 = vector.load %arg2[%c0_3, %c0_4] : memref<2x128xf32, #tpu.memory_space<vmem>>, vector<2x128xf32>
    %4 = vector.extract_strided_slice %3 {offsets = [0, 0], sizes = [1, 128], strides = [1, 1]} : vector<2x128xf32> to vector<1x128xf32>
    %5 = vector.broadcast %4 : vector<1x128xf32> to vector<32x128xf32>
    %6 = arith.addf %2, %5 : vector<32x128xf32>
    %7 = vector.extract_strided_slice %3 {offsets = [1, 0], sizes = [1, 128], strides = [1, 1]} : vector<2x128xf32> to vector<1x128xf32>
    %cst_5 = arith.constant 0.000000e+00 : f32
    %8 = vector.broadcast %cst_5 : f32 to vector<32x128xf32>
    %9 = arith.cmpf ogt, %6, %8 : vector<32x128xf32>
    %10 = vector.broadcast %7 : vector<1x128xf32> to vector<32x128xf32>
    %11 = arith.mulf %10, %6 : vector<32x128xf32>
    %12 = arith.select %9, %6, %11 : vector<32x128xi1>, vector<32x128xf32>
    %13 = vector.extract_strided_slice %12 {offsets = [0, 0], sizes = [32, 32], strides = [1, 1]} : vector<32x128xf32> to vector<32x32xf32>
    %14 = vector.extract_strided_slice %12 {offsets = [0, 32], sizes = [32, 32], strides = [1, 1]} : vector<32x128xf32> to vector<32x32xf32>
    %15 = vector.extract_strided_slice %12 {offsets = [0, 64], sizes = [32, 32], strides = [1, 1]} : vector<32x128xf32> to vector<32x32xf32>
    %16 = vector.extract_strided_slice %12 {offsets = [0, 96], sizes = [32, 32], strides = [1, 1]} : vector<32x128xf32> to vector<32x32xf32>
    %17 = arith.truncf %13 : vector<32x32xf32> to vector<32x32xbf16>
    %c0_6 = arith.constant 0 : index
    %c0_7 = arith.constant 0 : index
    %c0_8 = arith.constant 0 : index
    %18 = vector.load %arg4[%c0_6, %c0_7, %c0_8] : memref<3x6x32xf32, #tpu.memory_space<vmem>>, vector<1x6x32xf32>
    %19 = vector.shape_cast %18 : vector<1x6x32xf32> to vector<6x32xf32>
    %20 = vector.extract_strided_slice %19 {offsets = [0, 0], sizes = [1, 32], strides = [1, 1]} : vector<6x32xf32> to vector<1x32xf32>
    %cst_9 = arith.constant dense<0.000000e+00> : vector<1x32xf32>
    %21 = tpu.matmul %20, %13, %cst_9 {dimension_numbers = #tpu.dot_dimension_numbers<[1], [1], [0], [0], [0, 0, 1, 0], [], []>} : vector<1x32xf32>, vector<32x32xf32>, vector<1x32xf32> -> vector<1x32xf32>
    %22 = vector.extract_strided_slice %19 {offsets = [1, 0], sizes = [1, 32], strides = [1, 1]} : vector<6x32xf32> to vector<1x32xf32>
    %23 = vector.broadcast %22 : vector<1x32xf32> to vector<32x32xf32>
    %24 = arith.mulf %14, %23 : vector<32x32xf32>
    %cst_10 = arith.constant dense<0.000000e+00> : vector<32xf32>
    %25 = vector.multi_reduction <add>, %24, %cst_10 [1] : vector<32x32xf32> to vector<32xf32>
    %26 = vector.shape_cast %25 : vector<32xf32> to vector<32x1xf32>
    %c0_11 = arith.constant 0 : index
    %c0_12 = arith.constant 0 : index
    %c0_13 = arith.constant 0 : index
    %27 = vector.load %arg3[%c0_11, %c0_12, %c0_13] : memref<3x32x32xf32, #tpu.memory_space<vmem>>, vector<1x32x32xf32>
    %28 = vector.shape_cast %27 : vector<1x32x32xf32> to vector<32x32xf32>
    %29 = vector.broadcast %26 : vector<32x1xf32> to vector<32x32xf32>
    %30 = vector.broadcast %21 : vector<1x32xf32> to vector<32x32xf32>
    %31 = arith.addf %29, %30 : vector<32x32xf32>
    %cst_14 = arith.constant 0.000000e+00 : f32
    %32 = vector.broadcast %cst_14 : f32 to vector<32x32xf32>
    %33 = arith.cmpf ogt, %31, %32 : vector<32x32xf32>
    %cst_15 = arith.constant 0.00999999977 : f32
    %34 = vector.broadcast %cst_15 : f32 to vector<32x32xf32>
    %35 = arith.mulf %34, %31 : vector<32x32xf32>
    %36 = arith.select %33, %31, %35 : vector<32x32xi1>, vector<32x32xf32>
    %37 = arith.addf %36, %28 : vector<32x32xf32>
    %cst_16 = arith.constant dense<0xFF800000> : vector<32xf32>
    %38 = vector.multi_reduction <maximumf>, %37, %cst_16 [1] : vector<32x32xf32> to vector<32xf32>
    %39 = vector.shape_cast %38 : vector<32xf32> to vector<32x1xf32>
    %40 = vector.broadcast %39 : vector<32x1xf32> to vector<32x32xf32>
    %41 = arith.subf %37, %40 : vector<32x32xf32>
    %42 = math.exp %41 : vector<32x32xf32>
    %cst_17 = arith.constant dense<0.000000e+00> : vector<32xf32>
    %43 = vector.multi_reduction <add>, %42, %cst_17 [1] : vector<32x32xf32> to vector<32xf32>
    %44 = vector.shape_cast %43 : vector<32xf32> to vector<32x1xf32>
    %45 = tpu.reciprocal %44 {approx = true} : vector<32x1xf32> -> vector<32x1xf32>
    %46 = vector.broadcast %45 : vector<32x1xf32> to vector<32x32xf32>
    %47 = arith.mulf %42, %46 : vector<32x32xf32>
    %c1 = arith.constant 1 : index
    %c0_18 = arith.constant 0 : index
    %c0_19 = arith.constant 0 : index
    %48 = vector.load %arg4[%c1, %c0_18, %c0_19] : memref<3x6x32xf32, #tpu.memory_space<vmem>>, vector<1x6x32xf32>
    %49 = vector.shape_cast %48 : vector<1x6x32xf32> to vector<6x32xf32>
    %50 = vector.extract_strided_slice %49 {offsets = [0, 0], sizes = [1, 32], strides = [1, 1]} : vector<6x32xf32> to vector<1x32xf32>
    %cst_20 = arith.constant dense<0.000000e+00> : vector<1x32xf32>
    %51 = tpu.matmul %50, %13, %cst_20 {dimension_numbers = #tpu.dot_dimension_numbers<[1], [1], [0], [0], [0, 0, 1, 0], [], []>} : vector<1x32xf32>, vector<32x32xf32>, vector<1x32xf32> -> vector<1x32xf32>
    %52 = vector.extract_strided_slice %49 {offsets = [1, 0], sizes = [1, 32], strides = [1, 1]} : vector<6x32xf32> to vector<1x32xf32>
    %53 = vector.broadcast %52 : vector<1x32xf32> to vector<32x32xf32>
    %54 = arith.mulf %15, %53 : vector<32x32xf32>
    %cst_21 = arith.constant dense<0.000000e+00> : vector<32xf32>
    %55 = vector.multi_reduction <add>, %54, %cst_21 [1] : vector<32x32xf32> to vector<32xf32>
    %56 = vector.shape_cast %55 : vector<32xf32> to vector<32x1xf32>
    %c1_22 = arith.constant 1 : index
    %c0_23 = arith.constant 0 : index
    %c0_24 = arith.constant 0 : index
    %57 = vector.load %arg3[%c1_22, %c0_23, %c0_24] : memref<3x32x32xf32, #tpu.memory_space<vmem>>, vector<1x32x32xf32>
    %58 = vector.shape_cast %57 : vector<1x32x32xf32> to vector<32x32xf32>
    %59 = vector.broadcast %56 : vector<32x1xf32> to vector<32x32xf32>
    %60 = vector.broadcast %51 : vector<1x32xf32> to vector<32x32xf32>
    %61 = arith.addf %59, %60 : vector<32x32xf32>
    %cst_25 = arith.constant 0.000000e+00 : f32
    %62 = vector.broadcast %cst_25 : f32 to vector<32x32xf32>
    %63 = arith.cmpf ogt, %61, %62 : vector<32x32xf32>
    %cst_26 = arith.constant 0.00999999977 : f32
    %64 = vector.broadcast %cst_26 : f32 to vector<32x32xf32>
    %65 = arith.mulf %64, %61 : vector<32x32xf32>
    %66 = arith.select %63, %61, %65 : vector<32x32xi1>, vector<32x32xf32>
    %67 = arith.addf %66, %58 : vector<32x32xf32>
    %cst_27 = arith.constant dense<0xFF800000> : vector<32xf32>
    %68 = vector.multi_reduction <maximumf>, %67, %cst_27 [1] : vector<32x32xf32> to vector<32xf32>
    %69 = vector.shape_cast %68 : vector<32xf32> to vector<32x1xf32>
    %70 = vector.broadcast %69 : vector<32x1xf32> to vector<32x32xf32>
    %71 = arith.subf %67, %70 : vector<32x32xf32>
    %72 = math.exp %71 : vector<32x32xf32>
    %cst_28 = arith.constant dense<0.000000e+00> : vector<32xf32>
    %73 = vector.multi_reduction <add>, %72, %cst_28 [1] : vector<32x32xf32> to vector<32xf32>
    %74 = vector.shape_cast %73 : vector<32xf32> to vector<32x1xf32>
    %75 = tpu.reciprocal %74 {approx = true} : vector<32x1xf32> -> vector<32x1xf32>
    %76 = vector.broadcast %75 : vector<32x1xf32> to vector<32x32xf32>
    %77 = arith.mulf %72, %76 : vector<32x32xf32>
    %c2 = arith.constant 2 : index
    %c0_29 = arith.constant 0 : index
    %c0_30 = arith.constant 0 : index
    %78 = vector.load %arg4[%c2, %c0_29, %c0_30] : memref<3x6x32xf32, #tpu.memory_space<vmem>>, vector<1x6x32xf32>
    %79 = vector.shape_cast %78 : vector<1x6x32xf32> to vector<6x32xf32>
    %80 = vector.extract_strided_slice %79 {offsets = [0, 0], sizes = [1, 32], strides = [1, 1]} : vector<6x32xf32> to vector<1x32xf32>
    %cst_31 = arith.constant dense<0.000000e+00> : vector<1x32xf32>
    %81 = tpu.matmul %80, %13, %cst_31 {dimension_numbers = #tpu.dot_dimension_numbers<[1], [1], [0], [0], [0, 0, 1, 0], [], []>} : vector<1x32xf32>, vector<32x32xf32>, vector<1x32xf32> -> vector<1x32xf32>
    %82 = vector.extract_strided_slice %79 {offsets = [1, 0], sizes = [1, 32], strides = [1, 1]} : vector<6x32xf32> to vector<1x32xf32>
    %83 = vector.broadcast %82 : vector<1x32xf32> to vector<32x32xf32>
    %84 = arith.mulf %16, %83 : vector<32x32xf32>
    %cst_32 = arith.constant dense<0.000000e+00> : vector<32xf32>
    %85 = vector.multi_reduction <add>, %84, %cst_32 [1] : vector<32x32xf32> to vector<32xf32>
    %86 = vector.shape_cast %85 : vector<32xf32> to vector<32x1xf32>
    %c2_33 = arith.constant 2 : index
    %c0_34 = arith.constant 0 : index
    %c0_35 = arith.constant 0 : index
    %87 = vector.load %arg3[%c2_33, %c0_34, %c0_35] : memref<3x32x32xf32, #tpu.memory_space<vmem>>, vector<1x32x32xf32>
    %88 = vector.shape_cast %87 : vector<1x32x32xf32> to vector<32x32xf32>
    %89 = vector.broadcast %86 : vector<32x1xf32> to vector<32x32xf32>
    %90 = vector.broadcast %81 : vector<1x32xf32> to vector<32x32xf32>
    %91 = arith.addf %89, %90 : vector<32x32xf32>
    %cst_36 = arith.constant 0.000000e+00 : f32
    %92 = vector.broadcast %cst_36 : f32 to vector<32x32xf32>
    %93 = arith.cmpf ogt, %91, %92 : vector<32x32xf32>
    %cst_37 = arith.constant 0.00999999977 : f32
    %94 = vector.broadcast %cst_37 : f32 to vector<32x32xf32>
    %95 = arith.mulf %94, %91 : vector<32x32xf32>
    %96 = arith.select %93, %91, %95 : vector<32x32xi1>, vector<32x32xf32>
    %97 = arith.addf %96, %88 : vector<32x32xf32>
    %cst_38 = arith.constant dense<0xFF800000> : vector<32xf32>
    %98 = vector.multi_reduction <maximumf>, %97, %cst_38 [1] : vector<32x32xf32> to vector<32xf32>
    %99 = vector.shape_cast %98 : vector<32xf32> to vector<32x1xf32>
    %100 = vector.broadcast %99 : vector<32x1xf32> to vector<32x32xf32>
    %101 = arith.subf %97, %100 : vector<32x32xf32>
    %102 = math.exp %101 : vector<32x32xf32>
    %cst_39 = arith.constant dense<0.000000e+00> : vector<32xf32>
    %103 = vector.multi_reduction <add>, %102, %cst_39 [1] : vector<32x32xf32> to vector<32xf32>
    %104 = vector.shape_cast %103 : vector<32xf32> to vector<32x1xf32>
    %105 = tpu.reciprocal %104 {approx = true} : vector<32x1xf32> -> vector<32x1xf32>
    %106 = vector.broadcast %105 : vector<32x1xf32> to vector<32x32xf32>
    %107 = arith.mulf %102, %106 : vector<32x32xf32>
    %108 = tpu.concatenate %47, %77, %107 in 0 : vector<32x32xf32>, vector<32x32xf32>, vector<32x32xf32> -> vector<96x32xf32>
    %109 = arith.truncf %108 : vector<96x32xf32> to vector<96x32xbf16>
    %cst_40 = arith.constant dense<0.000000e+00> : vector<96x32xf32>
    %110 = tpu.matmul %109, %17, %cst_40 {dimension_numbers = #tpu.dot_dimension_numbers<[1], [0], [0], [1], [0, 0, 1, 1], [], []>} : vector<96x32xbf16>, vector<32x32xbf16>, vector<96x32xf32> -> vector<96x32xf32>
    %111 = vector.extract_strided_slice %110 {offsets = [0, 0], sizes = [32, 32], strides = [1, 1]} : vector<96x32xf32> to vector<32x32xf32>
    %112 = vector.extract_strided_slice %19 {offsets = [2, 0], sizes = [1, 32], strides = [1, 1]} : vector<6x32xf32> to vector<1x32xf32>
    %113 = vector.broadcast %112 : vector<1x32xf32> to vector<32x32xf32>
    %114 = arith.addf %111, %113 : vector<32x32xf32>
    %c0_41 = arith.constant 0 : index
    %c0_42 = arith.constant 0 : index
    %c0_43 = arith.constant 0 : index
    %115 = vector.load %arg5[%c0_41, %c0_42, %c0_43] : memref<3x32x1xf32, #tpu.memory_space<vmem>>, vector<1x32x1xf32>
    %116 = vector.shape_cast %115 : vector<1x32x1xf32> to vector<32x1xf32>
    %117 = vector.extract_strided_slice %19 {offsets = [3, 0], sizes = [1, 32], strides = [1, 1]} : vector<6x32xf32> to vector<1x32xf32>
    %118 = vector.extract_strided_slice %19 {offsets = [4, 0], sizes = [1, 32], strides = [1, 1]} : vector<6x32xf32> to vector<1x32xf32>
    %119 = vector.extract_strided_slice %19 {offsets = [5, 0], sizes = [1, 32], strides = [1, 1]} : vector<6x32xf32> to vector<1x32xf32>
    %cst_44 = arith.constant dense<0.000000e+00> : vector<1xf32>
    %120 = vector.multi_reduction <add>, %116, %cst_44 [0] : vector<32x1xf32> to vector<1xf32>
    %121 = vector.shape_cast %120 : vector<1xf32> to vector<1x1xf32>
    %cst_45 = arith.constant 1.000000e+00 : f32
    %122 = vector.broadcast %cst_45 : f32 to vector<1x1xf32>
    %123 = arith.divf %122, %121 : vector<1x1xf32>
    %124 = vector.broadcast %116 : vector<32x1xf32> to vector<32x32xf32>
    %125 = arith.mulf %114, %124 : vector<32x32xf32>
    %cst_46 = arith.constant dense<0.000000e+00> : vector<32xf32>
    %126 = vector.multi_reduction <add>, %125, %cst_46 [0] : vector<32x32xf32> to vector<32xf32>
    %127 = vector.shape_cast %126 : vector<32xf32> to vector<1x32xf32>
    %128 = vector.broadcast %123 : vector<1x1xf32> to vector<1x32xf32>
    %129 = arith.mulf %127, %128 : vector<1x32xf32>
    %130 = vector.broadcast %129 : vector<1x32xf32> to vector<32x32xf32>
    %131 = arith.subf %114, %130 : vector<32x32xf32>
    %132 = arith.mulf %131, %131 : vector<32x32xf32>
    %133 = vector.broadcast %116 : vector<32x1xf32> to vector<32x32xf32>
    %134 = arith.mulf %132, %133 : vector<32x32xf32>
    %cst_47 = arith.constant dense<0.000000e+00> : vector<32xf32>
    %135 = vector.multi_reduction <add>, %134, %cst_47 [0] : vector<32x32xf32> to vector<32xf32>
    %136 = vector.shape_cast %135 : vector<32xf32> to vector<1x32xf32>
    %137 = vector.broadcast %123 : vector<1x1xf32> to vector<1x32xf32>
    %138 = arith.mulf %136, %137 : vector<1x32xf32>
    %cst_48 = arith.constant 9.99999974E-6 : f32
    %139 = vector.broadcast %cst_48 : f32 to vector<1x32xf32>
    %140 = arith.addf %138, %139 : vector<1x32xf32>
    %141 = math.rsqrt %140 : vector<1x32xf32>
    %142 = vector.broadcast %141 : vector<1x32xf32> to vector<32x32xf32>
    %143 = arith.mulf %131, %142 : vector<32x32xf32>
    %144 = vector.broadcast %117 : vector<1x32xf32> to vector<32x32xf32>
    %145 = arith.mulf %143, %144 : vector<32x32xf32>
    %146 = vector.broadcast %118 : vector<1x32xf32> to vector<32x32xf32>
    %147 = arith.addf %145, %146 : vector<32x32xf32>
    %cst_49 = arith.constant 0.000000e+00 : f32
    %148 = vector.broadcast %cst_49 : f32 to vector<32x32xf32>
    %149 = arith.cmpf ogt, %147, %148 : vector<32x32xf32>
    %150 = vector.broadcast %119 : vector<1x32xf32> to vector<32x32xf32>
    %151 = arith.mulf %150, %147 : vector<32x32xf32>
    %152 = arith.select %149, %147, %151 : vector<32x32xi1>, vector<32x32xf32>
    %153 = vector.broadcast %116 : vector<32x1xf32> to vector<32x32xf32>
    %154 = arith.mulf %152, %153 : vector<32x32xf32>
    %155 = vector.extract_strided_slice %110 {offsets = [32, 0], sizes = [32, 32], strides = [1, 1]} : vector<96x32xf32> to vector<32x32xf32>
    %156 = vector.extract_strided_slice %49 {offsets = [2, 0], sizes = [1, 32], strides = [1, 1]} : vector<6x32xf32> to vector<1x32xf32>
    %157 = vector.broadcast %156 : vector<1x32xf32> to vector<32x32xf32>
    %158 = arith.addf %155, %157 : vector<32x32xf32>
    %c1_50 = arith.constant 1 : index
    %c0_51 = arith.constant 0 : index
    %c0_52 = arith.constant 0 : index
    %159 = vector.load %arg5[%c1_50, %c0_51, %c0_52] : memref<3x32x1xf32, #tpu.memory_space<vmem>>, vector<1x32x1xf32>
    %160 = vector.shape_cast %159 : vector<1x32x1xf32> to vector<32x1xf32>
    %161 = vector.extract_strided_slice %49 {offsets = [3, 0], sizes = [1, 32], strides = [1, 1]} : vector<6x32xf32> to vector<1x32xf32>
    %162 = vector.extract_strided_slice %49 {offsets = [4, 0], sizes = [1, 32], strides = [1, 1]} : vector<6x32xf32> to vector<1x32xf32>
    %163 = vector.extract_strided_slice %49 {offsets = [5, 0], sizes = [1, 32], strides = [1, 1]} : vector<6x32xf32> to vector<1x32xf32>
    %cst_53 = arith.constant dense<0.000000e+00> : vector<1xf32>
    %164 = vector.multi_reduction <add>, %160, %cst_53 [0] : vector<32x1xf32> to vector<1xf32>
    %165 = vector.shape_cast %164 : vector<1xf32> to vector<1x1xf32>
    %cst_54 = arith.constant 1.000000e+00 : f32
    %166 = vector.broadcast %cst_54 : f32 to vector<1x1xf32>
    %167 = arith.divf %166, %165 : vector<1x1xf32>
    %168 = vector.broadcast %160 : vector<32x1xf32> to vector<32x32xf32>
    %169 = arith.mulf %158, %168 : vector<32x32xf32>
    %cst_55 = arith.constant dense<0.000000e+00> : vector<32xf32>
    %170 = vector.multi_reduction <add>, %169, %cst_55 [0] : vector<32x32xf32> to vector<32xf32>
    %171 = vector.shape_cast %170 : vector<32xf32> to vector<1x32xf32>
    %172 = vector.broadcast %167 : vector<1x1xf32> to vector<1x32xf32>
    %173 = arith.mulf %171, %172 : vector<1x32xf32>
    %174 = vector.broadcast %173 : vector<1x32xf32> to vector<32x32xf32>
    %175 = arith.subf %158, %174 : vector<32x32xf32>
    %176 = arith.mulf %175, %175 : vector<32x32xf32>
    %177 = vector.broadcast %160 : vector<32x1xf32> to vector<32x32xf32>
    %178 = arith.mulf %176, %177 : vector<32x32xf32>
    %cst_56 = arith.constant dense<0.000000e+00> : vector<32xf32>
    %179 = vector.multi_reduction <add>, %178, %cst_56 [0] : vector<32x32xf32> to vector<32xf32>
    %180 = vector.shape_cast %179 : vector<32xf32> to vector<1x32xf32>
    %181 = vector.broadcast %167 : vector<1x1xf32> to vector<1x32xf32>
    %182 = arith.mulf %180, %181 : vector<1x32xf32>
    %cst_57 = arith.constant 9.99999974E-6 : f32
    %183 = vector.broadcast %cst_57 : f32 to vector<1x32xf32>
    %184 = arith.addf %182, %183 : vector<1x32xf32>
    %185 = math.rsqrt %184 : vector<1x32xf32>
    %186 = vector.broadcast %185 : vector<1x32xf32> to vector<32x32xf32>
    %187 = arith.mulf %175, %186 : vector<32x32xf32>
    %188 = vector.broadcast %161 : vector<1x32xf32> to vector<32x32xf32>
    %189 = arith.mulf %187, %188 : vector<32x32xf32>
    %190 = vector.broadcast %162 : vector<1x32xf32> to vector<32x32xf32>
    %191 = arith.addf %189, %190 : vector<32x32xf32>
    %cst_58 = arith.constant 0.000000e+00 : f32
    %192 = vector.broadcast %cst_58 : f32 to vector<32x32xf32>
    %193 = arith.cmpf ogt, %191, %192 : vector<32x32xf32>
    %194 = vector.broadcast %163 : vector<1x32xf32> to vector<32x32xf32>
    %195 = arith.mulf %194, %191 : vector<32x32xf32>
    %196 = arith.select %193, %191, %195 : vector<32x32xi1>, vector<32x32xf32>
    %197 = vector.broadcast %160 : vector<32x1xf32> to vector<32x32xf32>
    %198 = arith.mulf %196, %197 : vector<32x32xf32>
    %199 = vector.extract_strided_slice %110 {offsets = [64, 0], sizes = [32, 32], strides = [1, 1]} : vector<96x32xf32> to vector<32x32xf32>
    %200 = vector.extract_strided_slice %79 {offsets = [2, 0], sizes = [1, 32], strides = [1, 1]} : vector<6x32xf32> to vector<1x32xf32>
    %201 = vector.broadcast %200 : vector<1x32xf32> to vector<32x32xf32>
    %202 = arith.addf %199, %201 : vector<32x32xf32>
    %c2_59 = arith.constant 2 : index
    %c0_60 = arith.constant 0 : index
    %c0_61 = arith.constant 0 : index
    %203 = vector.load %arg5[%c2_59, %c0_60, %c0_61] : memref<3x32x1xf32, #tpu.memory_space<vmem>>, vector<1x32x1xf32>
    %204 = vector.shape_cast %203 : vector<1x32x1xf32> to vector<32x1xf32>
    %205 = vector.extract_strided_slice %79 {offsets = [3, 0], sizes = [1, 32], strides = [1, 1]} : vector<6x32xf32> to vector<1x32xf32>
    %206 = vector.extract_strided_slice %79 {offsets = [4, 0], sizes = [1, 32], strides = [1, 1]} : vector<6x32xf32> to vector<1x32xf32>
    %207 = vector.extract_strided_slice %79 {offsets = [5, 0], sizes = [1, 32], strides = [1, 1]} : vector<6x32xf32> to vector<1x32xf32>
    %cst_62 = arith.constant dense<0.000000e+00> : vector<1xf32>
    %208 = vector.multi_reduction <add>, %204, %cst_62 [0] : vector<32x1xf32> to vector<1xf32>
    %209 = vector.shape_cast %208 : vector<1xf32> to vector<1x1xf32>
    %cst_63 = arith.constant 1.000000e+00 : f32
    %210 = vector.broadcast %cst_63 : f32 to vector<1x1xf32>
    %211 = arith.divf %210, %209 : vector<1x1xf32>
    %212 = vector.broadcast %204 : vector<32x1xf32> to vector<32x32xf32>
    %213 = arith.mulf %202, %212 : vector<32x32xf32>
    %cst_64 = arith.constant dense<0.000000e+00> : vector<32xf32>
    %214 = vector.multi_reduction <add>, %213, %cst_64 [0] : vector<32x32xf32> to vector<32xf32>
    %215 = vector.shape_cast %214 : vector<32xf32> to vector<1x32xf32>
    %216 = vector.broadcast %211 : vector<1x1xf32> to vector<1x32xf32>
    %217 = arith.mulf %215, %216 : vector<1x32xf32>
    %218 = vector.broadcast %217 : vector<1x32xf32> to vector<32x32xf32>
    %219 = arith.subf %202, %218 : vector<32x32xf32>
    %220 = arith.mulf %219, %219 : vector<32x32xf32>
    %221 = vector.broadcast %204 : vector<32x1xf32> to vector<32x32xf32>
    %222 = arith.mulf %220, %221 : vector<32x32xf32>
    %cst_65 = arith.constant dense<0.000000e+00> : vector<32xf32>
    %223 = vector.multi_reduction <add>, %222, %cst_65 [0] : vector<32x32xf32> to vector<32xf32>
    %224 = vector.shape_cast %223 : vector<32xf32> to vector<1x32xf32>
    %225 = vector.broadcast %211 : vector<1x1xf32> to vector<1x32xf32>
    %226 = arith.mulf %224, %225 : vector<1x32xf32>
    %cst_66 = arith.constant 9.99999974E-6 : f32
    %227 = vector.broadcast %cst_66 : f32 to vector<1x32xf32>
    %228 = arith.addf %226, %227 : vector<1x32xf32>
    %229 = math.rsqrt %228 : vector<1x32xf32>
    %230 = vector.broadcast %229 : vector<1x32xf32> to vector<32x32xf32>
    %231 = arith.mulf %219, %230 : vector<32x32xf32>
    %232 = vector.broadcast %205 : vector<1x32xf32> to vector<32x32xf32>
    %233 = arith.mulf %231, %232 : vector<32x32xf32>
    %234 = vector.broadcast %206 : vector<1x32xf32> to vector<32x32xf32>
    %235 = arith.addf %233, %234 : vector<32x32xf32>
    %cst_67 = arith.constant 0.000000e+00 : f32
    %236 = vector.broadcast %cst_67 : f32 to vector<32x32xf32>
    %237 = arith.cmpf ogt, %235, %236 : vector<32x32xf32>
    %238 = vector.broadcast %207 : vector<1x32xf32> to vector<32x32xf32>
    %239 = arith.mulf %238, %235 : vector<32x32xf32>
    %240 = arith.select %237, %235, %239 : vector<32x32xi1>, vector<32x32xf32>
    %241 = vector.broadcast %204 : vector<32x1xf32> to vector<32x32xf32>
    %242 = arith.mulf %240, %241 : vector<32x32xf32>
    %c0_68 = arith.constant 0 : index
    %c0_69 = arith.constant 0 : index
    %243 = vector.load %arg8[%c0_68, %c0_69] : memref<32x1xf32, #tpu.memory_space<vmem>>, vector<32x1xf32>
    %c0_70 = arith.constant 0 : index
    %c0_71 = arith.constant 0 : index
    %c0_72 = arith.constant 0 : index
    %244 = vector.load %arg7[%c0_70, %c0_71, %c0_72] : memref<3x6x32xf32, #tpu.memory_space<vmem>>, vector<1x6x32xf32>
    %245 = vector.shape_cast %244 : vector<1x6x32xf32> to vector<6x32xf32>
    %246 = vector.extract_strided_slice %245 {offsets = [0, 0], sizes = [1, 32], strides = [1, 1]} : vector<6x32xf32> to vector<1x32xf32>
    %cst_73 = arith.constant dense<0.000000e+00> : vector<1x32xf32>
    %247 = tpu.matmul %246, %154, %cst_73 {dimension_numbers = #tpu.dot_dimension_numbers<[1], [1], [0], [0], [0, 0, 1, 0], [], []>} : vector<1x32xf32>, vector<32x32xf32>, vector<1x32xf32> -> vector<1x32xf32>
    %248 = vector.extract_strided_slice %245 {offsets = [1, 0], sizes = [1, 32], strides = [1, 1]} : vector<6x32xf32> to vector<1x32xf32>
    %249 = vector.broadcast %248 : vector<1x32xf32> to vector<32x32xf32>
    %250 = arith.mulf %13, %249 : vector<32x32xf32>
    %cst_74 = arith.constant dense<0.000000e+00> : vector<32xf32>
    %251 = vector.multi_reduction <add>, %250, %cst_74 [1] : vector<32x32xf32> to vector<32xf32>
    %252 = vector.shape_cast %251 : vector<32xf32> to vector<32x1xf32>
    %c0_75 = arith.constant 0 : index
    %c0_76 = arith.constant 0 : index
    %c0_77 = arith.constant 0 : index
    %253 = vector.load %arg6[%c0_75, %c0_76, %c0_77] : memref<3x32x32xf32, #tpu.memory_space<vmem>>, vector<1x32x32xf32>
    %254 = vector.shape_cast %253 : vector<1x32x32xf32> to vector<32x32xf32>
    %c1_78 = arith.constant 1 : index
    %c0_79 = arith.constant 0 : index
    %c0_80 = arith.constant 0 : index
    %255 = vector.load %arg9[%c1_78, %c0_79, %c0_80] : memref<3x32x1xf32, #tpu.memory_space<vmem>>, vector<1x32x1xf32>
    %256 = vector.shape_cast %255 : vector<1x32x1xf32> to vector<32x1xf32>
    %cst_81 = arith.constant 1.000000e+00 : f32
    %257 = vector.broadcast %cst_81 : f32 to vector<32x1xf32>
    %258 = arith.subf %257, %256 : vector<32x1xf32>
    %259 = vector.broadcast %252 : vector<32x1xf32> to vector<32x32xf32>
    %260 = vector.broadcast %247 : vector<1x32xf32> to vector<32x32xf32>
    %261 = arith.addf %259, %260 : vector<32x32xf32>
    %cst_82 = arith.constant 0.000000e+00 : f32
    %262 = vector.broadcast %cst_82 : f32 to vector<32x32xf32>
    %263 = arith.cmpf ogt, %261, %262 : vector<32x32xf32>
    %cst_83 = arith.constant 0.00999999977 : f32
    %264 = vector.broadcast %cst_83 : f32 to vector<32x32xf32>
    %265 = arith.mulf %264, %261 : vector<32x32xf32>
    %266 = arith.select %263, %261, %265 : vector<32x32xi1>, vector<32x32xf32>
    %267 = arith.addf %266, %254 : vector<32x32xf32>
    %cst_84 = arith.constant dense<0xFF800000> : vector<32xf32>
    %268 = vector.multi_reduction <maximumf>, %267, %cst_84 [1] : vector<32x32xf32> to vector<32xf32>
    %269 = vector.shape_cast %268 : vector<32xf32> to vector<32x1xf32>
    %270 = vector.broadcast %269 : vector<32x1xf32> to vector<32x32xf32>
    %271 = arith.subf %267, %270 : vector<32x32xf32>
    %272 = math.exp %271 : vector<32x32xf32>
    %cst_85 = arith.constant dense<0.000000e+00> : vector<32xf32>
    %273 = vector.multi_reduction <add>, %272, %cst_85 [1] : vector<32x32xf32> to vector<32xf32>
    %274 = vector.shape_cast %273 : vector<32xf32> to vector<32x1xf32>
    %275 = tpu.reciprocal %274 {approx = true} : vector<32x1xf32> -> vector<32x1xf32>
    %276 = vector.broadcast %275 : vector<32x1xf32> to vector<32x32xf32>
    %277 = arith.mulf %272, %276 : vector<32x32xf32>
    %278 = arith.mulf %252, %258 : vector<32x1xf32>
    %279 = vector.broadcast %278 : vector<32x1xf32> to vector<32x32xf32>
    %280 = vector.broadcast %247 : vector<1x32xf32> to vector<32x32xf32>
    %281 = arith.addf %279, %280 : vector<32x32xf32>
    %cst_86 = arith.constant 0.000000e+00 : f32
    %282 = vector.broadcast %cst_86 : f32 to vector<32x32xf32>
    %283 = arith.cmpf ogt, %281, %282 : vector<32x32xf32>
    %cst_87 = arith.constant 0.00999999977 : f32
    %284 = vector.broadcast %cst_87 : f32 to vector<32x32xf32>
    %285 = arith.mulf %284, %281 : vector<32x32xf32>
    %286 = arith.select %283, %281, %285 : vector<32x32xi1>, vector<32x32xf32>
    %287 = arith.addf %286, %254 : vector<32x32xf32>
    %cst_88 = arith.constant dense<0xFF800000> : vector<32xf32>
    %288 = vector.multi_reduction <maximumf>, %287, %cst_88 [1] : vector<32x32xf32> to vector<32xf32>
    %289 = vector.shape_cast %288 : vector<32xf32> to vector<32x1xf32>
    %290 = vector.broadcast %289 : vector<32x1xf32> to vector<32x32xf32>
    %291 = arith.subf %287, %290 : vector<32x32xf32>
    %292 = math.exp %291 : vector<32x32xf32>
    %cst_89 = arith.constant dense<0.000000e+00> : vector<32xf32>
    %293 = vector.multi_reduction <add>, %292, %cst_89 [1] : vector<32x32xf32> to vector<32xf32>
    %294 = vector.shape_cast %293 : vector<32xf32> to vector<32x1xf32>
    %295 = tpu.reciprocal %294 {approx = true} : vector<32x1xf32> -> vector<32x1xf32>
    %296 = vector.broadcast %295 : vector<32x1xf32> to vector<32x32xf32>
    %297 = arith.mulf %292, %296 : vector<32x32xf32>
    %298 = tpu.concatenate %277, %297 in 0 : vector<32x32xf32>, vector<32x32xf32> -> vector<64x32xf32>
    %299 = arith.truncf %298 : vector<64x32xf32> to vector<64x32xbf16>
    %300 = arith.truncf %154 : vector<32x32xf32> to vector<32x32xbf16>
    %cst_90 = arith.constant dense<0.000000e+00> : vector<64x32xf32>
    %301 = tpu.matmul %299, %300, %cst_90 {dimension_numbers = #tpu.dot_dimension_numbers<[1], [0], [0], [1], [0, 0, 1, 1], [], []>} : vector<64x32xbf16>, vector<32x32xbf16>, vector<64x32xf32> -> vector<64x32xf32>
    %302 = vector.extract_strided_slice %245 {offsets = [2, 0], sizes = [1, 32], strides = [1, 1]} : vector<6x32xf32> to vector<1x32xf32>
    %303 = vector.extract_strided_slice %245 {offsets = [3, 0], sizes = [1, 32], strides = [1, 1]} : vector<6x32xf32> to vector<1x32xf32>
    %304 = vector.extract_strided_slice %245 {offsets = [4, 0], sizes = [1, 32], strides = [1, 1]} : vector<6x32xf32> to vector<1x32xf32>
    %305 = vector.extract_strided_slice %245 {offsets = [5, 0], sizes = [1, 32], strides = [1, 1]} : vector<6x32xf32> to vector<1x32xf32>
    %306 = vector.extract_strided_slice %301 {offsets = [0, 0], sizes = [32, 32], strides = [1, 1]} : vector<64x32xf32> to vector<32x32xf32>
    %307 = vector.broadcast %302 : vector<1x32xf32> to vector<32x32xf32>
    %308 = arith.addf %306, %307 : vector<32x32xf32>
    %cst_91 = arith.constant dense<0.000000e+00> : vector<1xf32>
    %309 = vector.multi_reduction <add>, %243, %cst_91 [0] : vector<32x1xf32> to vector<1xf32>
    %310 = vector.shape_cast %309 : vector<1xf32> to vector<1x1xf32>
    %cst_92 = arith.constant 1.000000e+00 : f32
    %311 = vector.broadcast %cst_92 : f32 to vector<1x1xf32>
    %312 = arith.divf %311, %310 : vector<1x1xf32>
    %313 = vector.broadcast %243 : vector<32x1xf32> to vector<32x32xf32>
    %314 = arith.mulf %308, %313 : vector<32x32xf32>
    %cst_93 = arith.constant dense<0.000000e+00> : vector<32xf32>
    %315 = vector.multi_reduction <add>, %314, %cst_93 [0] : vector<32x32xf32> to vector<32xf32>
    %316 = vector.shape_cast %315 : vector<32xf32> to vector<1x32xf32>
    %317 = vector.broadcast %312 : vector<1x1xf32> to vector<1x32xf32>
    %318 = arith.mulf %316, %317 : vector<1x32xf32>
    %319 = vector.broadcast %318 : vector<1x32xf32> to vector<32x32xf32>
    %320 = arith.subf %308, %319 : vector<32x32xf32>
    %321 = arith.mulf %320, %320 : vector<32x32xf32>
    %322 = vector.broadcast %243 : vector<32x1xf32> to vector<32x32xf32>
    %323 = arith.mulf %321, %322 : vector<32x32xf32>
    %cst_94 = arith.constant dense<0.000000e+00> : vector<32xf32>
    %324 = vector.multi_reduction <add>, %323, %cst_94 [0] : vector<32x32xf32> to vector<32xf32>
    %325 = vector.shape_cast %324 : vector<32xf32> to vector<1x32xf32>
    %326 = vector.broadcast %312 : vector<1x1xf32> to vector<1x32xf32>
    %327 = arith.mulf %325, %326 : vector<1x32xf32>
    %cst_95 = arith.constant 9.99999974E-6 : f32
    %328 = vector.broadcast %cst_95 : f32 to vector<1x32xf32>
    %329 = arith.addf %327, %328 : vector<1x32xf32>
    %330 = math.rsqrt %329 : vector<1x32xf32>
    %331 = vector.broadcast %330 : vector<1x32xf32> to vector<32x32xf32>
    %332 = arith.mulf %320, %331 : vector<32x32xf32>
    %333 = vector.broadcast %303 : vector<1x32xf32> to vector<32x32xf32>
    %334 = arith.mulf %332, %333 : vector<32x32xf32>
    %335 = vector.broadcast %304 : vector<1x32xf32> to vector<32x32xf32>
    %336 = arith.addf %334, %335 : vector<32x32xf32>
    %cst_96 = arith.constant 0.000000e+00 : f32
    %337 = vector.broadcast %cst_96 : f32 to vector<32x32xf32>
    %338 = arith.cmpf ogt, %336, %337 : vector<32x32xf32>
    %339 = vector.broadcast %305 : vector<1x32xf32> to vector<32x32xf32>
    %340 = arith.mulf %339, %336 : vector<32x32xf32>
    %341 = arith.select %338, %336, %340 : vector<32x32xi1>, vector<32x32xf32>
    %342 = vector.broadcast %243 : vector<32x1xf32> to vector<32x32xf32>
    %343 = arith.mulf %341, %342 : vector<32x32xf32>
    %344 = vector.extract_strided_slice %301 {offsets = [32, 0], sizes = [32, 32], strides = [1, 1]} : vector<64x32xf32> to vector<32x32xf32>
    %345 = vector.broadcast %302 : vector<1x32xf32> to vector<32x32xf32>
    %346 = arith.addf %344, %345 : vector<32x32xf32>
    %cst_97 = arith.constant dense<0.000000e+00> : vector<1xf32>
    %347 = vector.multi_reduction <add>, %243, %cst_97 [0] : vector<32x1xf32> to vector<1xf32>
    %348 = vector.shape_cast %347 : vector<1xf32> to vector<1x1xf32>
    %cst_98 = arith.constant 1.000000e+00 : f32
    %349 = vector.broadcast %cst_98 : f32 to vector<1x1xf32>
    %350 = arith.divf %349, %348 : vector<1x1xf32>
    %351 = vector.broadcast %243 : vector<32x1xf32> to vector<32x32xf32>
    %352 = arith.mulf %346, %351 : vector<32x32xf32>
    %cst_99 = arith.constant dense<0.000000e+00> : vector<32xf32>
    %353 = vector.multi_reduction <add>, %352, %cst_99 [0] : vector<32x32xf32> to vector<32xf32>
    %354 = vector.shape_cast %353 : vector<32xf32> to vector<1x32xf32>
    %355 = vector.broadcast %350 : vector<1x1xf32> to vector<1x32xf32>
    %356 = arith.mulf %354, %355 : vector<1x32xf32>
    %357 = vector.broadcast %356 : vector<1x32xf32> to vector<32x32xf32>
    %358 = arith.subf %346, %357 : vector<32x32xf32>
    %359 = arith.mulf %358, %358 : vector<32x32xf32>
    %360 = vector.broadcast %243 : vector<32x1xf32> to vector<32x32xf32>
    %361 = arith.mulf %359, %360 : vector<32x32xf32>
    %cst_100 = arith.constant dense<0.000000e+00> : vector<32xf32>
    %362 = vector.multi_reduction <add>, %361, %cst_100 [0] : vector<32x32xf32> to vector<32xf32>
    %363 = vector.shape_cast %362 : vector<32xf32> to vector<1x32xf32>
    %364 = vector.broadcast %350 : vector<1x1xf32> to vector<1x32xf32>
    %365 = arith.mulf %363, %364 : vector<1x32xf32>
    %cst_101 = arith.constant 9.99999974E-6 : f32
    %366 = vector.broadcast %cst_101 : f32 to vector<1x32xf32>
    %367 = arith.addf %365, %366 : vector<1x32xf32>
    %368 = math.rsqrt %367 : vector<1x32xf32>
    %369 = vector.broadcast %368 : vector<1x32xf32> to vector<32x32xf32>
    %370 = arith.mulf %358, %369 : vector<32x32xf32>
    %371 = vector.broadcast %303 : vector<1x32xf32> to vector<32x32xf32>
    %372 = arith.mulf %370, %371 : vector<32x32xf32>
    %373 = vector.broadcast %304 : vector<1x32xf32> to vector<32x32xf32>
    %374 = arith.addf %372, %373 : vector<32x32xf32>
    %cst_102 = arith.constant 0.000000e+00 : f32
    %375 = vector.broadcast %cst_102 : f32 to vector<32x32xf32>
    %376 = arith.cmpf ogt, %374, %375 : vector<32x32xf32>
    %377 = vector.broadcast %305 : vector<1x32xf32> to vector<32x32xf32>
    %378 = arith.mulf %377, %374 : vector<32x32xf32>
    %379 = arith.select %376, %374, %378 : vector<32x32xi1>, vector<32x32xf32>
    %380 = vector.broadcast %243 : vector<32x1xf32> to vector<32x32xf32>
    %381 = arith.mulf %379, %380 : vector<32x32xf32>
    %c1_103 = arith.constant 1 : index
    %c0_104 = arith.constant 0 : index
    %c0_105 = arith.constant 0 : index
    %382 = vector.load %arg7[%c1_103, %c0_104, %c0_105] : memref<3x6x32xf32, #tpu.memory_space<vmem>>, vector<1x6x32xf32>
    %383 = vector.shape_cast %382 : vector<1x6x32xf32> to vector<6x32xf32>
    %384 = vector.extract_strided_slice %383 {offsets = [0, 0], sizes = [1, 32], strides = [1, 1]} : vector<6x32xf32> to vector<1x32xf32>
    %cst_106 = arith.constant dense<0.000000e+00> : vector<1x32xf32>
    %385 = tpu.matmul %384, %198, %cst_106 {dimension_numbers = #tpu.dot_dimension_numbers<[1], [1], [0], [0], [0, 0, 1, 0], [], []>} : vector<1x32xf32>, vector<32x32xf32>, vector<1x32xf32> -> vector<1x32xf32>
    %386 = vector.extract_strided_slice %383 {offsets = [1, 0], sizes = [1, 32], strides = [1, 1]} : vector<6x32xf32> to vector<1x32xf32>
    %387 = vector.broadcast %386 : vector<1x32xf32> to vector<32x32xf32>
    %388 = arith.mulf %13, %387 : vector<32x32xf32>
    %cst_107 = arith.constant dense<0.000000e+00> : vector<32xf32>
    %389 = vector.multi_reduction <add>, %388, %cst_107 [1] : vector<32x32xf32> to vector<32xf32>
    %390 = vector.shape_cast %389 : vector<32xf32> to vector<32x1xf32>
    %c1_108 = arith.constant 1 : index
    %c0_109 = arith.constant 0 : index
    %c0_110 = arith.constant 0 : index
    %391 = vector.load %arg6[%c1_108, %c0_109, %c0_110] : memref<3x32x32xf32, #tpu.memory_space<vmem>>, vector<1x32x32xf32>
    %392 = vector.shape_cast %391 : vector<1x32x32xf32> to vector<32x32xf32>
    %c0_111 = arith.constant 0 : index
    %c0_112 = arith.constant 0 : index
    %c0_113 = arith.constant 0 : index
    %393 = vector.load %arg9[%c0_111, %c0_112, %c0_113] : memref<3x32x1xf32, #tpu.memory_space<vmem>>, vector<1x32x1xf32>
    %394 = vector.shape_cast %393 : vector<1x32x1xf32> to vector<32x1xf32>
    %cst_114 = arith.constant 1.000000e+00 : f32
    %395 = vector.broadcast %cst_114 : f32 to vector<32x1xf32>
    %396 = arith.subf %395, %394 : vector<32x1xf32>
    %397 = vector.broadcast %390 : vector<32x1xf32> to vector<32x32xf32>
    %398 = vector.broadcast %385 : vector<1x32xf32> to vector<32x32xf32>
    %399 = arith.addf %397, %398 : vector<32x32xf32>
    %cst_115 = arith.constant 0.000000e+00 : f32
    %400 = vector.broadcast %cst_115 : f32 to vector<32x32xf32>
    %401 = arith.cmpf ogt, %399, %400 : vector<32x32xf32>
    %cst_116 = arith.constant 0.00999999977 : f32
    %402 = vector.broadcast %cst_116 : f32 to vector<32x32xf32>
    %403 = arith.mulf %402, %399 : vector<32x32xf32>
    %404 = arith.select %401, %399, %403 : vector<32x32xi1>, vector<32x32xf32>
    %405 = arith.addf %404, %392 : vector<32x32xf32>
    %cst_117 = arith.constant dense<0xFF800000> : vector<32xf32>
    %406 = vector.multi_reduction <maximumf>, %405, %cst_117 [1] : vector<32x32xf32> to vector<32xf32>
    %407 = vector.shape_cast %406 : vector<32xf32> to vector<32x1xf32>
    %408 = vector.broadcast %407 : vector<32x1xf32> to vector<32x32xf32>
    %409 = arith.subf %405, %408 : vector<32x32xf32>
    %410 = math.exp %409 : vector<32x32xf32>
    %cst_118 = arith.constant dense<0.000000e+00> : vector<32xf32>
    %411 = vector.multi_reduction <add>, %410, %cst_118 [1] : vector<32x32xf32> to vector<32xf32>
    %412 = vector.shape_cast %411 : vector<32xf32> to vector<32x1xf32>
    %413 = tpu.reciprocal %412 {approx = true} : vector<32x1xf32> -> vector<32x1xf32>
    %414 = vector.broadcast %413 : vector<32x1xf32> to vector<32x32xf32>
    %415 = arith.mulf %410, %414 : vector<32x32xf32>
    %416 = arith.mulf %390, %396 : vector<32x1xf32>
    %417 = vector.broadcast %416 : vector<32x1xf32> to vector<32x32xf32>
    %418 = vector.broadcast %385 : vector<1x32xf32> to vector<32x32xf32>
    %419 = arith.addf %417, %418 : vector<32x32xf32>
    %cst_119 = arith.constant 0.000000e+00 : f32
    %420 = vector.broadcast %cst_119 : f32 to vector<32x32xf32>
    %421 = arith.cmpf ogt, %419, %420 : vector<32x32xf32>
    %cst_120 = arith.constant 0.00999999977 : f32
    %422 = vector.broadcast %cst_120 : f32 to vector<32x32xf32>
    %423 = arith.mulf %422, %419 : vector<32x32xf32>
    %424 = arith.select %421, %419, %423 : vector<32x32xi1>, vector<32x32xf32>
    %425 = arith.addf %424, %392 : vector<32x32xf32>
    %cst_121 = arith.constant dense<0xFF800000> : vector<32xf32>
    %426 = vector.multi_reduction <maximumf>, %425, %cst_121 [1] : vector<32x32xf32> to vector<32xf32>
    %427 = vector.shape_cast %426 : vector<32xf32> to vector<32x1xf32>
    %428 = vector.broadcast %427 : vector<32x1xf32> to vector<32x32xf32>
    %429 = arith.subf %425, %428 : vector<32x32xf32>
    %430 = math.exp %429 : vector<32x32xf32>
    %cst_122 = arith.constant dense<0.000000e+00> : vector<32xf32>
    %431 = vector.multi_reduction <add>, %430, %cst_122 [1] : vector<32x32xf32> to vector<32xf32>
    %432 = vector.shape_cast %431 : vector<32xf32> to vector<32x1xf32>
    %433 = tpu.reciprocal %432 {approx = true} : vector<32x1xf32> -> vector<32x1xf32>
    %434 = vector.broadcast %433 : vector<32x1xf32> to vector<32x32xf32>
    %435 = arith.mulf %430, %434 : vector<32x32xf32>
    %436 = tpu.concatenate %415, %435 in 0 : vector<32x32xf32>, vector<32x32xf32> -> vector<64x32xf32>
    %437 = arith.truncf %436 : vector<64x32xf32> to vector<64x32xbf16>
    %438 = arith.truncf %198 : vector<32x32xf32> to vector<32x32xbf16>
    %cst_123 = arith.constant dense<0.000000e+00> : vector<64x32xf32>
    %439 = tpu.matmul %437, %438, %cst_123 {dimension_numbers = #tpu.dot_dimension_numbers<[1], [0], [0], [1], [0, 0, 1, 1], [], []>} : vector<64x32xbf16>, vector<32x32xbf16>, vector<64x32xf32> -> vector<64x32xf32>
    %440 = vector.extract_strided_slice %383 {offsets = [2, 0], sizes = [1, 32], strides = [1, 1]} : vector<6x32xf32> to vector<1x32xf32>
    %441 = vector.extract_strided_slice %383 {offsets = [3, 0], sizes = [1, 32], strides = [1, 1]} : vector<6x32xf32> to vector<1x32xf32>
    %442 = vector.extract_strided_slice %383 {offsets = [4, 0], sizes = [1, 32], strides = [1, 1]} : vector<6x32xf32> to vector<1x32xf32>
    %443 = vector.extract_strided_slice %383 {offsets = [5, 0], sizes = [1, 32], strides = [1, 1]} : vector<6x32xf32> to vector<1x32xf32>
    %444 = vector.extract_strided_slice %439 {offsets = [0, 0], sizes = [32, 32], strides = [1, 1]} : vector<64x32xf32> to vector<32x32xf32>
    %445 = vector.broadcast %440 : vector<1x32xf32> to vector<32x32xf32>
    %446 = arith.addf %444, %445 : vector<32x32xf32>
    %cst_124 = arith.constant dense<0.000000e+00> : vector<1xf32>
    %447 = vector.multi_reduction <add>, %243, %cst_124 [0] : vector<32x1xf32> to vector<1xf32>
    %448 = vector.shape_cast %447 : vector<1xf32> to vector<1x1xf32>
    %cst_125 = arith.constant 1.000000e+00 : f32
    %449 = vector.broadcast %cst_125 : f32 to vector<1x1xf32>
    %450 = arith.divf %449, %448 : vector<1x1xf32>
    %451 = vector.broadcast %243 : vector<32x1xf32> to vector<32x32xf32>
    %452 = arith.mulf %446, %451 : vector<32x32xf32>
    %cst_126 = arith.constant dense<0.000000e+00> : vector<32xf32>
    %453 = vector.multi_reduction <add>, %452, %cst_126 [0] : vector<32x32xf32> to vector<32xf32>
    %454 = vector.shape_cast %453 : vector<32xf32> to vector<1x32xf32>
    %455 = vector.broadcast %450 : vector<1x1xf32> to vector<1x32xf32>
    %456 = arith.mulf %454, %455 : vector<1x32xf32>
    %457 = vector.broadcast %456 : vector<1x32xf32> to vector<32x32xf32>
    %458 = arith.subf %446, %457 : vector<32x32xf32>
    %459 = arith.mulf %458, %458 : vector<32x32xf32>
    %460 = vector.broadcast %243 : vector<32x1xf32> to vector<32x32xf32>
    %461 = arith.mulf %459, %460 : vector<32x32xf32>
    %cst_127 = arith.constant dense<0.000000e+00> : vector<32xf32>
    %462 = vector.multi_reduction <add>, %461, %cst_127 [0] : vector<32x32xf32> to vector<32xf32>
    %463 = vector.shape_cast %462 : vector<32xf32> to vector<1x32xf32>
    %464 = vector.broadcast %450 : vector<1x1xf32> to vector<1x32xf32>
    %465 = arith.mulf %463, %464 : vector<1x32xf32>
    %cst_128 = arith.constant 9.99999974E-6 : f32
    %466 = vector.broadcast %cst_128 : f32 to vector<1x32xf32>
    %467 = arith.addf %465, %466 : vector<1x32xf32>
    %468 = math.rsqrt %467 : vector<1x32xf32>
    %469 = vector.broadcast %468 : vector<1x32xf32> to vector<32x32xf32>
    %470 = arith.mulf %458, %469 : vector<32x32xf32>
    %471 = vector.broadcast %441 : vector<1x32xf32> to vector<32x32xf32>
    %472 = arith.mulf %470, %471 : vector<32x32xf32>
    %473 = vector.broadcast %442 : vector<1x32xf32> to vector<32x32xf32>
    %474 = arith.addf %472, %473 : vector<32x32xf32>
    %cst_129 = arith.constant 0.000000e+00 : f32
    %475 = vector.broadcast %cst_129 : f32 to vector<32x32xf32>
    %476 = arith.cmpf ogt, %474, %475 : vector<32x32xf32>
    %477 = vector.broadcast %443 : vector<1x32xf32> to vector<32x32xf32>
    %478 = arith.mulf %477, %474 : vector<32x32xf32>
    %479 = arith.select %476, %474, %478 : vector<32x32xi1>, vector<32x32xf32>
    %480 = vector.broadcast %243 : vector<32x1xf32> to vector<32x32xf32>
    %481 = arith.mulf %479, %480 : vector<32x32xf32>
    %482 = vector.extract_strided_slice %439 {offsets = [32, 0], sizes = [32, 32], strides = [1, 1]} : vector<64x32xf32> to vector<32x32xf32>
    %483 = vector.broadcast %440 : vector<1x32xf32> to vector<32x32xf32>
    %484 = arith.addf %482, %483 : vector<32x32xf32>
    %cst_130 = arith.constant dense<0.000000e+00> : vector<1xf32>
    %485 = vector.multi_reduction <add>, %243, %cst_130 [0] : vector<32x1xf32> to vector<1xf32>
    %486 = vector.shape_cast %485 : vector<1xf32> to vector<1x1xf32>
    %cst_131 = arith.constant 1.000000e+00 : f32
    %487 = vector.broadcast %cst_131 : f32 to vector<1x1xf32>
    %488 = arith.divf %487, %486 : vector<1x1xf32>
    %489 = vector.broadcast %243 : vector<32x1xf32> to vector<32x32xf32>
    %490 = arith.mulf %484, %489 : vector<32x32xf32>
    %cst_132 = arith.constant dense<0.000000e+00> : vector<32xf32>
    %491 = vector.multi_reduction <add>, %490, %cst_132 [0] : vector<32x32xf32> to vector<32xf32>
    %492 = vector.shape_cast %491 : vector<32xf32> to vector<1x32xf32>
    %493 = vector.broadcast %488 : vector<1x1xf32> to vector<1x32xf32>
    %494 = arith.mulf %492, %493 : vector<1x32xf32>
    %495 = vector.broadcast %494 : vector<1x32xf32> to vector<32x32xf32>
    %496 = arith.subf %484, %495 : vector<32x32xf32>
    %497 = arith.mulf %496, %496 : vector<32x32xf32>
    %498 = vector.broadcast %243 : vector<32x1xf32> to vector<32x32xf32>
    %499 = arith.mulf %497, %498 : vector<32x32xf32>
    %cst_133 = arith.constant dense<0.000000e+00> : vector<32xf32>
    %500 = vector.multi_reduction <add>, %499, %cst_133 [0] : vector<32x32xf32> to vector<32xf32>
    %501 = vector.shape_cast %500 : vector<32xf32> to vector<1x32xf32>
    %502 = vector.broadcast %488 : vector<1x1xf32> to vector<1x32xf32>
    %503 = arith.mulf %501, %502 : vector<1x32xf32>
    %cst_134 = arith.constant 9.99999974E-6 : f32
    %504 = vector.broadcast %cst_134 : f32 to vector<1x32xf32>
    %505 = arith.addf %503, %504 : vector<1x32xf32>
    %506 = math.rsqrt %505 : vector<1x32xf32>
    %507 = vector.broadcast %506 : vector<1x32xf32> to vector<32x32xf32>
    %508 = arith.mulf %496, %507 : vector<32x32xf32>
    %509 = vector.broadcast %441 : vector<1x32xf32> to vector<32x32xf32>
    %510 = arith.mulf %508, %509 : vector<32x32xf32>
    %511 = vector.broadcast %442 : vector<1x32xf32> to vector<32x32xf32>
    %512 = arith.addf %510, %511 : vector<32x32xf32>
    %cst_135 = arith.constant 0.000000e+00 : f32
    %513 = vector.broadcast %cst_135 : f32 to vector<32x32xf32>
    %514 = arith.cmpf ogt, %512, %513 : vector<32x32xf32>
    %515 = vector.broadcast %443 : vector<1x32xf32> to vector<32x32xf32>
    %516 = arith.mulf %515, %512 : vector<32x32xf32>
    %517 = arith.select %514, %512, %516 : vector<32x32xi1>, vector<32x32xf32>
    %518 = vector.broadcast %243 : vector<32x1xf32> to vector<32x32xf32>
    %519 = arith.mulf %517, %518 : vector<32x32xf32>
    %c2_136 = arith.constant 2 : index
    %c0_137 = arith.constant 0 : index
    %c0_138 = arith.constant 0 : index
    %520 = vector.load %arg7[%c2_136, %c0_137, %c0_138] : memref<3x6x32xf32, #tpu.memory_space<vmem>>, vector<1x6x32xf32>
    %521 = vector.shape_cast %520 : vector<1x6x32xf32> to vector<6x32xf32>
    %522 = vector.extract_strided_slice %521 {offsets = [0, 0], sizes = [1, 32], strides = [1, 1]} : vector<6x32xf32> to vector<1x32xf32>
    %cst_139 = arith.constant dense<0.000000e+00> : vector<1x32xf32>
    %523 = tpu.matmul %522, %242, %cst_139 {dimension_numbers = #tpu.dot_dimension_numbers<[1], [1], [0], [0], [0, 0, 1, 0], [], []>} : vector<1x32xf32>, vector<32x32xf32>, vector<1x32xf32> -> vector<1x32xf32>
    %524 = vector.extract_strided_slice %521 {offsets = [1, 0], sizes = [1, 32], strides = [1, 1]} : vector<6x32xf32> to vector<1x32xf32>
    %525 = vector.broadcast %524 : vector<1x32xf32> to vector<32x32xf32>
    %526 = arith.mulf %13, %525 : vector<32x32xf32>
    %cst_140 = arith.constant dense<0.000000e+00> : vector<32xf32>
    %527 = vector.multi_reduction <add>, %526, %cst_140 [1] : vector<32x32xf32> to vector<32xf32>
    %528 = vector.shape_cast %527 : vector<32xf32> to vector<32x1xf32>
    %c2_141 = arith.constant 2 : index
    %c0_142 = arith.constant 0 : index
    %c0_143 = arith.constant 0 : index
    %529 = vector.load %arg6[%c2_141, %c0_142, %c0_143] : memref<3x32x32xf32, #tpu.memory_space<vmem>>, vector<1x32x32xf32>
    %530 = vector.shape_cast %529 : vector<1x32x32xf32> to vector<32x32xf32>
    %c2_144 = arith.constant 2 : index
    %c0_145 = arith.constant 0 : index
    %c0_146 = arith.constant 0 : index
    %531 = vector.load %arg9[%c2_144, %c0_145, %c0_146] : memref<3x32x1xf32, #tpu.memory_space<vmem>>, vector<1x32x1xf32>
    %532 = vector.shape_cast %531 : vector<1x32x1xf32> to vector<32x1xf32>
    %cst_147 = arith.constant 1.000000e+00 : f32
    %533 = vector.broadcast %cst_147 : f32 to vector<32x1xf32>
    %534 = arith.subf %533, %532 : vector<32x1xf32>
    %535 = vector.broadcast %528 : vector<32x1xf32> to vector<32x32xf32>
    %536 = vector.broadcast %523 : vector<1x32xf32> to vector<32x32xf32>
    %537 = arith.addf %535, %536 : vector<32x32xf32>
    %cst_148 = arith.constant 0.000000e+00 : f32
    %538 = vector.broadcast %cst_148 : f32 to vector<32x32xf32>
    %539 = arith.cmpf ogt, %537, %538 : vector<32x32xf32>
    %cst_149 = arith.constant 0.00999999977 : f32
    %540 = vector.broadcast %cst_149 : f32 to vector<32x32xf32>
    %541 = arith.mulf %540, %537 : vector<32x32xf32>
    %542 = arith.select %539, %537, %541 : vector<32x32xi1>, vector<32x32xf32>
    %543 = arith.addf %542, %530 : vector<32x32xf32>
    %cst_150 = arith.constant dense<0xFF800000> : vector<32xf32>
    %544 = vector.multi_reduction <maximumf>, %543, %cst_150 [1] : vector<32x32xf32> to vector<32xf32>
    %545 = vector.shape_cast %544 : vector<32xf32> to vector<32x1xf32>
    %546 = vector.broadcast %545 : vector<32x1xf32> to vector<32x32xf32>
    %547 = arith.subf %543, %546 : vector<32x32xf32>
    %548 = math.exp %547 : vector<32x32xf32>
    %cst_151 = arith.constant dense<0.000000e+00> : vector<32xf32>
    %549 = vector.multi_reduction <add>, %548, %cst_151 [1] : vector<32x32xf32> to vector<32xf32>
    %550 = vector.shape_cast %549 : vector<32xf32> to vector<32x1xf32>
    %551 = tpu.reciprocal %550 {approx = true} : vector<32x1xf32> -> vector<32x1xf32>
    %552 = vector.broadcast %551 : vector<32x1xf32> to vector<32x32xf32>
    %553 = arith.mulf %548, %552 : vector<32x32xf32>
    %554 = arith.mulf %528, %534 : vector<32x1xf32>
    %555 = vector.broadcast %554 : vector<32x1xf32> to vector<32x32xf32>
    %556 = vector.broadcast %523 : vector<1x32xf32> to vector<32x32xf32>
    %557 = arith.addf %555, %556 : vector<32x32xf32>
    %cst_152 = arith.constant 0.000000e+00 : f32
    %558 = vector.broadcast %cst_152 : f32 to vector<32x32xf32>
    %559 = arith.cmpf ogt, %557, %558 : vector<32x32xf32>
    %cst_153 = arith.constant 0.00999999977 : f32
    %560 = vector.broadcast %cst_153 : f32 to vector<32x32xf32>
    %561 = arith.mulf %560, %557 : vector<32x32xf32>
    %562 = arith.select %559, %557, %561 : vector<32x32xi1>, vector<32x32xf32>
    %563 = arith.addf %562, %530 : vector<32x32xf32>
    %cst_154 = arith.constant dense<0xFF800000> : vector<32xf32>
    %564 = vector.multi_reduction <maximumf>, %563, %cst_154 [1] : vector<32x32xf32> to vector<32xf32>
    %565 = vector.shape_cast %564 : vector<32xf32> to vector<32x1xf32>
    %566 = vector.broadcast %565 : vector<32x1xf32> to vector<32x32xf32>
    %567 = arith.subf %563, %566 : vector<32x32xf32>
    %568 = math.exp %567 : vector<32x32xf32>
    %cst_155 = arith.constant dense<0.000000e+00> : vector<32xf32>
    %569 = vector.multi_reduction <add>, %568, %cst_155 [1] : vector<32x32xf32> to vector<32xf32>
    %570 = vector.shape_cast %569 : vector<32xf32> to vector<32x1xf32>
    %571 = tpu.reciprocal %570 {approx = true} : vector<32x1xf32> -> vector<32x1xf32>
    %572 = vector.broadcast %571 : vector<32x1xf32> to vector<32x32xf32>
    %573 = arith.mulf %568, %572 : vector<32x32xf32>
    %574 = tpu.concatenate %553, %573 in 0 : vector<32x32xf32>, vector<32x32xf32> -> vector<64x32xf32>
    %575 = arith.truncf %574 : vector<64x32xf32> to vector<64x32xbf16>
    %576 = arith.truncf %242 : vector<32x32xf32> to vector<32x32xbf16>
    %cst_156 = arith.constant dense<0.000000e+00> : vector<64x32xf32>
    %577 = tpu.matmul %575, %576, %cst_156 {dimension_numbers = #tpu.dot_dimension_numbers<[1], [0], [0], [1], [0, 0, 1, 1], [], []>} : vector<64x32xbf16>, vector<32x32xbf16>, vector<64x32xf32> -> vector<64x32xf32>
    %578 = vector.extract_strided_slice %521 {offsets = [2, 0], sizes = [1, 32], strides = [1, 1]} : vector<6x32xf32> to vector<1x32xf32>
    %579 = vector.extract_strided_slice %521 {offsets = [3, 0], sizes = [1, 32], strides = [1, 1]} : vector<6x32xf32> to vector<1x32xf32>
    %580 = vector.extract_strided_slice %521 {offsets = [4, 0], sizes = [1, 32], strides = [1, 1]} : vector<6x32xf32> to vector<1x32xf32>
    %581 = vector.extract_strided_slice %521 {offsets = [5, 0], sizes = [1, 32], strides = [1, 1]} : vector<6x32xf32> to vector<1x32xf32>
    %582 = vector.extract_strided_slice %577 {offsets = [0, 0], sizes = [32, 32], strides = [1, 1]} : vector<64x32xf32> to vector<32x32xf32>
    %583 = vector.broadcast %578 : vector<1x32xf32> to vector<32x32xf32>
    %584 = arith.addf %582, %583 : vector<32x32xf32>
    %cst_157 = arith.constant dense<0.000000e+00> : vector<1xf32>
    %585 = vector.multi_reduction <add>, %243, %cst_157 [0] : vector<32x1xf32> to vector<1xf32>
    %586 = vector.shape_cast %585 : vector<1xf32> to vector<1x1xf32>
    %cst_158 = arith.constant 1.000000e+00 : f32
    %587 = vector.broadcast %cst_158 : f32 to vector<1x1xf32>
    %588 = arith.divf %587, %586 : vector<1x1xf32>
    %589 = vector.broadcast %243 : vector<32x1xf32> to vector<32x32xf32>
    %590 = arith.mulf %584, %589 : vector<32x32xf32>
    %cst_159 = arith.constant dense<0.000000e+00> : vector<32xf32>
    %591 = vector.multi_reduction <add>, %590, %cst_159 [0] : vector<32x32xf32> to vector<32xf32>
    %592 = vector.shape_cast %591 : vector<32xf32> to vector<1x32xf32>
    %593 = vector.broadcast %588 : vector<1x1xf32> to vector<1x32xf32>
    %594 = arith.mulf %592, %593 : vector<1x32xf32>
    %595 = vector.broadcast %594 : vector<1x32xf32> to vector<32x32xf32>
    %596 = arith.subf %584, %595 : vector<32x32xf32>
    %597 = arith.mulf %596, %596 : vector<32x32xf32>
    %598 = vector.broadcast %243 : vector<32x1xf32> to vector<32x32xf32>
    %599 = arith.mulf %597, %598 : vector<32x32xf32>
    %cst_160 = arith.constant dense<0.000000e+00> : vector<32xf32>
    %600 = vector.multi_reduction <add>, %599, %cst_160 [0] : vector<32x32xf32> to vector<32xf32>
    %601 = vector.shape_cast %600 : vector<32xf32> to vector<1x32xf32>
    %602 = vector.broadcast %588 : vector<1x1xf32> to vector<1x32xf32>
    %603 = arith.mulf %601, %602 : vector<1x32xf32>
    %cst_161 = arith.constant 9.99999974E-6 : f32
    %604 = vector.broadcast %cst_161 : f32 to vector<1x32xf32>
    %605 = arith.addf %603, %604 : vector<1x32xf32>
    %606 = math.rsqrt %605 : vector<1x32xf32>
    %607 = vector.broadcast %606 : vector<1x32xf32> to vector<32x32xf32>
    %608 = arith.mulf %596, %607 : vector<32x32xf32>
    %609 = vector.broadcast %579 : vector<1x32xf32> to vector<32x32xf32>
    %610 = arith.mulf %608, %609 : vector<32x32xf32>
    %611 = vector.broadcast %580 : vector<1x32xf32> to vector<32x32xf32>
    %612 = arith.addf %610, %611 : vector<32x32xf32>
    %cst_162 = arith.constant 0.000000e+00 : f32
    %613 = vector.broadcast %cst_162 : f32 to vector<32x32xf32>
    %614 = arith.cmpf ogt, %612, %613 : vector<32x32xf32>
    %615 = vector.broadcast %581 : vector<1x32xf32> to vector<32x32xf32>
    %616 = arith.mulf %615, %612 : vector<32x32xf32>
    %617 = arith.select %614, %612, %616 : vector<32x32xi1>, vector<32x32xf32>
    %618 = vector.broadcast %243 : vector<32x1xf32> to vector<32x32xf32>
    %619 = arith.mulf %617, %618 : vector<32x32xf32>
    %620 = vector.extract_strided_slice %577 {offsets = [32, 0], sizes = [32, 32], strides = [1, 1]} : vector<64x32xf32> to vector<32x32xf32>
    %621 = vector.broadcast %578 : vector<1x32xf32> to vector<32x32xf32>
    %622 = arith.addf %620, %621 : vector<32x32xf32>
    %cst_163 = arith.constant dense<0.000000e+00> : vector<1xf32>
    %623 = vector.multi_reduction <add>, %243, %cst_163 [0] : vector<32x1xf32> to vector<1xf32>
    %624 = vector.shape_cast %623 : vector<1xf32> to vector<1x1xf32>
    %cst_164 = arith.constant 1.000000e+00 : f32
    %625 = vector.broadcast %cst_164 : f32 to vector<1x1xf32>
    %626 = arith.divf %625, %624 : vector<1x1xf32>
    %627 = vector.broadcast %243 : vector<32x1xf32> to vector<32x32xf32>
    %628 = arith.mulf %622, %627 : vector<32x32xf32>
    %cst_165 = arith.constant dense<0.000000e+00> : vector<32xf32>
    %629 = vector.multi_reduction <add>, %628, %cst_165 [0] : vector<32x32xf32> to vector<32xf32>
    %630 = vector.shape_cast %629 : vector<32xf32> to vector<1x32xf32>
    %631 = vector.broadcast %626 : vector<1x1xf32> to vector<1x32xf32>
    %632 = arith.mulf %630, %631 : vector<1x32xf32>
    %633 = vector.broadcast %632 : vector<1x32xf32> to vector<32x32xf32>
    %634 = arith.subf %622, %633 : vector<32x32xf32>
    %635 = arith.mulf %634, %634 : vector<32x32xf32>
    %636 = vector.broadcast %243 : vector<32x1xf32> to vector<32x32xf32>
    %637 = arith.mulf %635, %636 : vector<32x32xf32>
    %cst_166 = arith.constant dense<0.000000e+00> : vector<32xf32>
    %638 = vector.multi_reduction <add>, %637, %cst_166 [0] : vector<32x32xf32> to vector<32xf32>
    %639 = vector.shape_cast %638 : vector<32xf32> to vector<1x32xf32>
    %640 = vector.broadcast %626 : vector<1x1xf32> to vector<1x32xf32>
    %641 = arith.mulf %639, %640 : vector<1x32xf32>
    %cst_167 = arith.constant 9.99999974E-6 : f32
    %642 = vector.broadcast %cst_167 : f32 to vector<1x32xf32>
    %643 = arith.addf %641, %642 : vector<1x32xf32>
    %644 = math.rsqrt %643 : vector<1x32xf32>
    %645 = vector.broadcast %644 : vector<1x32xf32> to vector<32x32xf32>
    %646 = arith.mulf %634, %645 : vector<32x32xf32>
    %647 = vector.broadcast %579 : vector<1x32xf32> to vector<32x32xf32>
    %648 = arith.mulf %646, %647 : vector<32x32xf32>
    %649 = vector.broadcast %580 : vector<1x32xf32> to vector<32x32xf32>
    %650 = arith.addf %648, %649 : vector<32x32xf32>
    %cst_168 = arith.constant 0.000000e+00 : f32
    %651 = vector.broadcast %cst_168 : f32 to vector<32x32xf32>
    %652 = arith.cmpf ogt, %650, %651 : vector<32x32xf32>
    %653 = vector.broadcast %581 : vector<1x32xf32> to vector<32x32xf32>
    %654 = arith.mulf %653, %650 : vector<32x32xf32>
    %655 = arith.select %652, %650, %654 : vector<32x32xi1>, vector<32x32xf32>
    %656 = vector.broadcast %243 : vector<32x1xf32> to vector<32x32xf32>
    %657 = arith.mulf %655, %656 : vector<32x32xf32>
    %cst_169 = arith.constant 0.000000e+00 : f32
    %658 = vector.broadcast %cst_169 : f32 to vector<1x1xf32>
    %659 = arith.addf %343, %619 : vector<32x32xf32>
    %c0_170 = arith.constant 0 : index
    %c0_171 = arith.constant 0 : index
    %c0_172 = arith.constant 0 : index
    %660 = vector.load %arg9[%c0_170, %c0_171, %c0_172] : memref<3x32x1xf32, #tpu.memory_space<vmem>>, vector<1x32x1xf32>
    %661 = vector.shape_cast %660 : vector<1x32x1xf32> to vector<32x1xf32>
    %662 = arith.mulf %519, %519 : vector<32x32xf32>
    %cst_173 = arith.constant dense<0.000000e+00> : vector<32xf32>
    %663 = vector.multi_reduction <add>, %662, %cst_173 [1] : vector<32x32xf32> to vector<32xf32>
    %664 = vector.shape_cast %663 : vector<32xf32> to vector<32x1xf32>
    %cst_174 = arith.constant 1.000000e-24 : f32
    %665 = vector.broadcast %cst_174 : f32 to vector<32x1xf32>
    %666 = arith.maximumf %664, %665 : vector<32x1xf32>
    %667 = math.rsqrt %666 : vector<32x1xf32>
    %668 = vector.broadcast %667 : vector<32x1xf32> to vector<32x32xf32>
    %669 = arith.mulf %519, %668 : vector<32x32xf32>
    %670 = arith.mulf %659, %659 : vector<32x32xf32>
    %cst_175 = arith.constant dense<0.000000e+00> : vector<32xf32>
    %671 = vector.multi_reduction <add>, %670, %cst_175 [1] : vector<32x32xf32> to vector<32xf32>
    %672 = vector.shape_cast %671 : vector<32xf32> to vector<32x1xf32>
    %cst_176 = arith.constant 1.000000e-24 : f32
    %673 = vector.broadcast %cst_176 : f32 to vector<32x1xf32>
    %674 = arith.maximumf %672, %673 : vector<32x1xf32>
    %675 = math.rsqrt %674 : vector<32x1xf32>
    %676 = vector.broadcast %675 : vector<32x1xf32> to vector<32x32xf32>
    %677 = arith.mulf %659, %676 : vector<32x32xf32>
    %678 = arith.mulf %669, %677 : vector<32x32xf32>
    %cst_177 = arith.constant dense<0.000000e+00> : vector<32xf32>
    %679 = vector.multi_reduction <add>, %678, %cst_177 [1] : vector<32x32xf32> to vector<32xf32>
    %680 = vector.shape_cast %679 : vector<32xf32> to vector<32x1xf32>
    %cst_178 = arith.constant dense<0.000000e+00> : vector<1xf32>
    %681 = vector.multi_reduction <add>, %661, %cst_178 [0] : vector<32x1xf32> to vector<1xf32>
    %682 = vector.shape_cast %681 : vector<1xf32> to vector<1x1xf32>
    %cst_179 = arith.constant 1.000000e+00 : f32
    %683 = vector.broadcast %cst_179 : f32 to vector<32x1xf32>
    %684 = arith.subf %683, %680 : vector<32x1xf32>
    %685 = arith.mulf %684, %661 : vector<32x1xf32>
    %cst_180 = arith.constant dense<0.000000e+00> : vector<1xf32>
    %686 = vector.multi_reduction <add>, %685, %cst_180 [0] : vector<32x1xf32> to vector<1xf32>
    %687 = vector.shape_cast %686 : vector<1xf32> to vector<1x1xf32>
    %688 = arith.divf %687, %682 : vector<1x1xf32>
    %689 = arith.addf %658, %688 : vector<1x1xf32>
    %690 = arith.addf %481, %619 : vector<32x32xf32>
    %c1_181 = arith.constant 1 : index
    %c0_182 = arith.constant 0 : index
    %c0_183 = arith.constant 0 : index
    %691 = vector.load %arg9[%c1_181, %c0_182, %c0_183] : memref<3x32x1xf32, #tpu.memory_space<vmem>>, vector<1x32x1xf32>
    %692 = vector.shape_cast %691 : vector<1x32x1xf32> to vector<32x1xf32>
    %693 = arith.mulf %381, %381 : vector<32x32xf32>
    %cst_184 = arith.constant dense<0.000000e+00> : vector<32xf32>
    %694 = vector.multi_reduction <add>, %693, %cst_184 [1] : vector<32x32xf32> to vector<32xf32>
    %695 = vector.shape_cast %694 : vector<32xf32> to vector<32x1xf32>
    %cst_185 = arith.constant 1.000000e-24 : f32
    %696 = vector.broadcast %cst_185 : f32 to vector<32x1xf32>
    %697 = arith.maximumf %695, %696 : vector<32x1xf32>
    %698 = math.rsqrt %697 : vector<32x1xf32>
    %699 = vector.broadcast %698 : vector<32x1xf32> to vector<32x32xf32>
    %700 = arith.mulf %381, %699 : vector<32x32xf32>
    %701 = arith.mulf %690, %690 : vector<32x32xf32>
    %cst_186 = arith.constant dense<0.000000e+00> : vector<32xf32>
    %702 = vector.multi_reduction <add>, %701, %cst_186 [1] : vector<32x32xf32> to vector<32xf32>
    %703 = vector.shape_cast %702 : vector<32xf32> to vector<32x1xf32>
    %cst_187 = arith.constant 1.000000e-24 : f32
    %704 = vector.broadcast %cst_187 : f32 to vector<32x1xf32>
    %705 = arith.maximumf %703, %704 : vector<32x1xf32>
    %706 = math.rsqrt %705 : vector<32x1xf32>
    %707 = vector.broadcast %706 : vector<32x1xf32> to vector<32x32xf32>
    %708 = arith.mulf %690, %707 : vector<32x32xf32>
    %709 = arith.mulf %700, %708 : vector<32x32xf32>
    %cst_188 = arith.constant dense<0.000000e+00> : vector<32xf32>
    %710 = vector.multi_reduction <add>, %709, %cst_188 [1] : vector<32x32xf32> to vector<32xf32>
    %711 = vector.shape_cast %710 : vector<32xf32> to vector<32x1xf32>
    %cst_189 = arith.constant dense<0.000000e+00> : vector<1xf32>
    %712 = vector.multi_reduction <add>, %692, %cst_189 [0] : vector<32x1xf32> to vector<1xf32>
    %713 = vector.shape_cast %712 : vector<1xf32> to vector<1x1xf32>
    %cst_190 = arith.constant 1.000000e+00 : f32
    %714 = vector.broadcast %cst_190 : f32 to vector<32x1xf32>
    %715 = arith.subf %714, %711 : vector<32x1xf32>
    %716 = arith.mulf %715, %692 : vector<32x1xf32>
    %cst_191 = arith.constant dense<0.000000e+00> : vector<1xf32>
    %717 = vector.multi_reduction <add>, %716, %cst_191 [0] : vector<32x1xf32> to vector<1xf32>
    %718 = vector.shape_cast %717 : vector<1xf32> to vector<1x1xf32>
    %719 = arith.divf %718, %713 : vector<1x1xf32>
    %720 = arith.addf %689, %719 : vector<1x1xf32>
    %721 = arith.addf %343, %481 : vector<32x32xf32>
    %c2_192 = arith.constant 2 : index
    %c0_193 = arith.constant 0 : index
    %c0_194 = arith.constant 0 : index
    %722 = vector.load %arg9[%c2_192, %c0_193, %c0_194] : memref<3x32x1xf32, #tpu.memory_space<vmem>>, vector<1x32x1xf32>
    %723 = vector.shape_cast %722 : vector<1x32x1xf32> to vector<32x1xf32>
    %724 = arith.mulf %657, %657 : vector<32x32xf32>
    %cst_195 = arith.constant dense<0.000000e+00> : vector<32xf32>
    %725 = vector.multi_reduction <add>, %724, %cst_195 [1] : vector<32x32xf32> to vector<32xf32>
    %726 = vector.shape_cast %725 : vector<32xf32> to vector<32x1xf32>
    %cst_196 = arith.constant 1.000000e-24 : f32
    %727 = vector.broadcast %cst_196 : f32 to vector<32x1xf32>
    %728 = arith.maximumf %726, %727 : vector<32x1xf32>
    %729 = math.rsqrt %728 : vector<32x1xf32>
    %730 = vector.broadcast %729 : vector<32x1xf32> to vector<32x32xf32>
    %731 = arith.mulf %657, %730 : vector<32x32xf32>
    %732 = arith.mulf %721, %721 : vector<32x32xf32>
    %cst_197 = arith.constant dense<0.000000e+00> : vector<32xf32>
    %733 = vector.multi_reduction <add>, %732, %cst_197 [1] : vector<32x32xf32> to vector<32xf32>
    %734 = vector.shape_cast %733 : vector<32xf32> to vector<32x1xf32>
    %cst_198 = arith.constant 1.000000e-24 : f32
    %735 = vector.broadcast %cst_198 : f32 to vector<32x1xf32>
    %736 = arith.maximumf %734, %735 : vector<32x1xf32>
    %737 = math.rsqrt %736 : vector<32x1xf32>
    %738 = vector.broadcast %737 : vector<32x1xf32> to vector<32x32xf32>
    %739 = arith.mulf %721, %738 : vector<32x32xf32>
    %740 = arith.mulf %731, %739 : vector<32x32xf32>
    %cst_199 = arith.constant dense<0.000000e+00> : vector<32xf32>
    %741 = vector.multi_reduction <add>, %740, %cst_199 [1] : vector<32x32xf32> to vector<32xf32>
    %742 = vector.shape_cast %741 : vector<32xf32> to vector<32x1xf32>
    %cst_200 = arith.constant dense<0.000000e+00> : vector<1xf32>
    %743 = vector.multi_reduction <add>, %723, %cst_200 [0] : vector<32x1xf32> to vector<1xf32>
    %744 = vector.shape_cast %743 : vector<1xf32> to vector<1x1xf32>
    %cst_201 = arith.constant 1.000000e+00 : f32
    %745 = vector.broadcast %cst_201 : f32 to vector<32x1xf32>
    %746 = arith.subf %745, %742 : vector<32x1xf32>
    %747 = arith.mulf %746, %723 : vector<32x1xf32>
    %cst_202 = arith.constant dense<0.000000e+00> : vector<1xf32>
    %748 = vector.multi_reduction <add>, %747, %cst_202 [0] : vector<32x1xf32> to vector<1xf32>
    %749 = vector.shape_cast %748 : vector<1xf32> to vector<1x1xf32>
    %750 = arith.divf %749, %744 : vector<1x1xf32>
    %751 = arith.addf %720, %750 : vector<1x1xf32>
    %c0_203 = arith.constant 0 : index
    %c0_204 = arith.constant 0 : index
    %752 = vector.load %arg10[%c0_203, %c0_204] : memref<1x1xf32, #tpu.memory_space<vmem>>, vector<1x1xf32>
    tpu.vector_store %arg10[%c0_203, %c0_204], %751 {strides = array<i32>} : memref<1x1xf32, #tpu.memory_space<vmem>>, vector<1x1xf32>,
    return
  }
}

</mosaic_0001>

<llo_original>
// kernel: cross_view_forward.1
$region0: #{cross_view_forward.1}
  #allocation0 [shape = 'u32[]', space=smem, size = 0x4, offset = 0x4, fixed_abs, tag = 'smem constant byte address 0x4 - core index']
  #allocation1 [shape = 'u32[144,128]{1,0:T(1,128)}', space=vmem, size = 0x12000, scoped, tag = 'internal scratch']
  %s0 = inlined_call_operand.vmem [shape: bf16[32,128], index: 0, kind: input, shape index: {}]
  %s1 = inlined_call_operand.vmem [shape: bf16[128,128], index: 1, kind: input, shape index: {}]
  %s2 = inlined_call_operand.vmem [shape: f32[2,128], index: 2, kind: input, shape index: {}]
  %s3 = inlined_call_operand.vmem [shape: f32[3,32,32], index: 3, kind: input, shape index: {}]
  %s4 = inlined_call_operand.vmem [shape: f32[3,6,32], index: 4, kind: input, shape index: {}]
  %s5 = inlined_call_operand.vmem [shape: f32[3,32,1], index: 5, kind: input, shape index: {}]
  %s6 = inlined_call_operand.vmem [shape: f32[3,32,32], index: 6, kind: input, shape index: {}]
  %s7 = inlined_call_operand.vmem [shape: f32[3,6,32], index: 7, kind: input, shape index: {}]
  %s8 = inlined_call_operand.vmem [shape: f32[32,1], index: 8, kind: input, shape index: {}]
  %s9 = inlined_call_operand.vmem [shape: f32[3,32,1], index: 9, kind: input, shape index: {}]
  %s10 = inlined_call_operand.hbm [shape: f32[1,1], index: 10, kind: output, shape index: {}]
  %s11 = sld [smem:[#allocation0]]
  $region50: #{cross_view_forward.1} parent=0
    _
  %s13 = ssub.s32 1, %s11
  %s14 = scalar_select 0, %s13, %s11
  $region1: #{cross_view_forward.1} parent=0
    #allocation2 [shape = 'u8[512]{0}', space=vmem, size = 0x400, scoped, tag = 'output window, operand 0, single buffered']
    #allocation3 [shape = 's32[1]{0}', space=sflag, size = 0x4, scoped, tag = 'scoped memory for cross_view_forward.1']
    %15 = vsyncpa [#allocation3], 0
    // Predicated region
    $region2: #{cross_view_forward.1} parent=1 // pred_check
      _
    $region3: #{cross_view_forward.1} parent=1 // pred_check_branch
      %17 = sbr.rel (0) target = $region5
    $region4: #{cross_view_forward.1} parent=1 // pred_region
      _
    $region5: #{cross_view_forward.1} parent=1 // pred_fallthru
      _
    // Predicated region
    $region6: #{cross_view_forward.1} parent=1 // pred_check
      _
    $region7: #{cross_view_forward.1} parent=1 // pred_check_branch
      %19 = sbr.rel (0) target = $region9
    $region8: #{cross_view_forward.1} parent=1 // pred_region
      _
    $region9: #{cross_view_forward.1} parent=1 // pred_fallthru
      _
    // Predicated region
    $region10: #{cross_view_forward.1} parent=1 // pred_check
      _
    $region11: #{cross_view_forward.1} parent=1 // pred_check_branch
      %21 = sbr.rel (0) target = $region13
    $region12: #{cross_view_forward.1} parent=1 // pred_region
      _
    $region13: #{cross_view_forward.1} parent=1 // pred_fallthru
      _
    // Predicated region
    $region14: #{cross_view_forward.1} parent=1 // pred_check
      _
    $region15: #{cross_view_forward.1} parent=1 // pred_check_branch
      %23 = sbr.rel (0) target = $region17
    $region16: #{cross_view_forward.1} parent=1 // pred_region
      _
    $region17: #{cross_view_forward.1} parent=1 // pred_fallthru
      _
    // Predicated region
    $region18: #{cross_view_forward.1} parent=1 // pred_check
      _
    $region19: #{cross_view_forward.1} parent=1 // pred_check_branch
      %25 = sbr.rel (0) target = $region21
    $region20: #{cross_view_forward.1} parent=1 // pred_region
      _
    $region21: #{cross_view_forward.1} parent=1 // pred_fallthru
      _
    // Predicated region
    $region22: #{cross_view_forward.1} parent=1 // pred_check
      _
    $region23: #{cross_view_forward.1} parent=1 // pred_check_branch
      %27 = sbr.rel (0) target = $region25
    $region24: #{cross_view_forward.1} parent=1 // pred_region
      _
    $region25: #{cross_view_forward.1} parent=1 // pred_fallthru
      _
    // Predicated region
    $region26: #{cross_view_forward.1} parent=1 // pred_check
      _
    $region27: #{cross_view_forward.1} parent=1 // pred_check_branch
      %29 = sbr.rel (0) target = $region29
    $region28: #{cross_view_forward.1} parent=1 // pred_region
      _
    $region29: #{cross_view_forward.1} parent=1 // pred_fallthru
      _
    // Predicated region
    $region30: #{cross_view_forward.1} parent=1 // pred_check
      _
    $region31: #{cross_view_forward.1} parent=1 // pred_check_branch
      %31 = sbr.rel (0) target = $region33
    $region32: #{cross_view_forward.1} parent=1 // pred_region
      _
    $region33: #{cross_view_forward.1} parent=1 // pred_fallthru
      _
    // Predicated region
    $region34: #{cross_view_forward.1} parent=1 // pred_check
      _
    $region35: #{cross_view_forward.1} parent=1 // pred_check_branch
      %33 = sbr.rel (0) target = $region37
    $region36: #{cross_view_forward.1} parent=1 // pred_region
      _
    $region37: #{cross_view_forward.1} parent=1 // pred_fallthru
      _
    // Predicated region
    $region38: #{cross_view_forward.1} parent=1 // pred_check
      _
    $region39: #{cross_view_forward.1} parent=1 // pred_check_branch
      %35 = sbr.rel (0) target = $region41
    $region40: #{cross_view_forward.1} parent=1 // pred_region
      _
    $region41: #{cross_view_forward.1} parent=1 // pred_fallthru
      _
    %v37 = vld [vmem:[%s0] sm:$0xf]
    %v38 = vld [vmem:[%s0 + $0x4] sm:$0xf]
    %v39 = vld [vmem:[%s0 + $0x8] sm:$0xf]
    %v40 = vld [vmem:[%s0 + $0xc] sm:$0xf]
    %v41 = vld [vmem:[%s1] sm:$0xf]
    %v42 = vld [vmem:[%s1 + $0x4] sm:$0xf]
    %v43 = vld [vmem:[%s1 + $0x8] sm:$0xf]
    %v44 = vld [vmem:[%s1 + $0xc] sm:$0xf]
    %v45 = vld [vmem:[%s1 + $0x10] sm:$0xf]
    %v46 = vld [vmem:[%s1 + $0x14] sm:$0xf]
    %v47 = vld [vmem:[%s1 + $0x18] sm:$0xf]
    %v48 = vld [vmem:[%s1 + $0x1c] sm:$0xf]
    %v49 = vld [vmem:[%s1 + $0x20] sm:$0xf]
    %v50 = vld [vmem:[%s1 + $0x24] sm:$0xf]
    %v51 = vld [vmem:[%s1 + $0x28] sm:$0xf]
    %v52 = vld [vmem:[%s1 + $0x2c] sm:$0xf]
    %v53 = vld [vmem:[%s1 + $0x30] sm:$0xf]
    %v54 = vld [vmem:[%s1 + $0x34] sm:$0xf]
    %v55 = vld [vmem:[%s1 + $0x38] sm:$0xf]
    %v56 = vld [vmem:[%s1 + $0x3c] sm:$0xf]
    %v57 = vld [vmem:[%s2] sm:$0x3]
    %v58 = vlaneseq
    %v59 = vshrl.u32 %v58, 7
    %v60 = vsub.s32 0, %v59
    %v61 = vrot.slane %v57, %v60
    %v66 = vunpack.c.l.b16 %v37
    %v67 = vunpack.c.l.b16 %v38
    %v68 = vunpack.c.l.b16 %v39
    %v69 = vunpack.c.l.b16 %v40
    %v70 = vpack.c.b16 %v67, %v66
    %v71 = vpack.c.b16 %v69, %v68
    %v90 = vunpack.c.l.b16 %v41
    %v91 = vunpack.c.l.b16 %v42
    %v92 = vunpack.c.l.b16 %v43
    %v93 = vunpack.c.l.b16 %v44
    %v94 = vunpack.c.l.b16 %v45
    %v95 = vunpack.c.l.b16 %v46
    %v96 = vunpack.c.l.b16 %v47
    %v97 = vunpack.c.l.b16 %v48
    %v98 = vunpack.c.l.b16 %v49
    %v99 = vunpack.c.l.b16 %v50
    %v100 = vunpack.c.l.b16 %v51
    %v101 = vunpack.c.l.b16 %v52
    %v102 = vunpack.c.l.b16 %v53
    %v103 = vunpack.c.l.b16 %v54
    %v104 = vunpack.c.l.b16 %v55
    %v105 = vunpack.c.l.b16 %v56
    %v106 = vpack.c.b16 %v91, %v90
    %v107 = vpack.c.b16 %v93, %v92
    %v108 = vpack.c.b16 %v95, %v94
    %v109 = vpack.c.b16 %v97, %v96
    %v110 = vpack.c.b16 %v99, %v98
    %v111 = vpack.c.b16 %v101, %v100
    %v112 = vpack.c.b16 %v103, %v102
    %v113 = vpack.c.b16 %v105, %v104
    %122 = vmatprep.subr.bf16.mxu0 0
    %123 = vmatpush1.bf16.msra.mxu0 %v106
    %124 = vmatprep.subr.bf16.mxu0 0
    %125 = vmatpush1.bf16.msra.mxu0 %v107
    %126 = vmatprep.subr.bf16.mxu0 0
    %127 = vmatpush1.bf16.msra.mxu0 %v108
    %128 = vmatprep.subr.bf16.mxu0 0
    %129 = vmatpush1.bf16.msra.mxu0 %v109
    %130 = vmatprep.subr.bf16.mxu0 0
    %131 = vmatpush1.bf16.msra.mxu0 %v110
    %132 = vmatprep.subr.bf16.mxu0 0
    %133 = vmatpush1.bf16.msra.mxu0 %v111
    %134 = vmatprep.subr.bf16.mxu0 0
    %135 = vmatpush1.bf16.msra.mxu0 %v112
    %136 = vmatprep.subr.bf16.mxu0 0
    %137 = vmatpush1.bf16.msra.mxu0 %v113
    %138 = vmatprep.subr.bf16.mxu0 0
    %139 = vmatpush1.bf16.msra.mxu0 0
    %140 = vmatprep.subr.bf16.mxu0 0
    %141 = vmatpush1.bf16.msra.mxu0 0
    %142 = vmatprep.subr.bf16.mxu0 0
    %143 = vmatpush1.bf16.msra.mxu0 0
    %144 = vmatprep.subr.bf16.mxu0 0
    %145 = vmatpush1.bf16.msra.mxu0 0
    %146 = vmatprep.subr.bf16.mxu0 0
    %147 = vmatpush1.bf16.msra.mxu0 0
    %148 = vmatprep.subr.bf16.mxu0 0
    %149 = vmatpush1.bf16.msra.mxu0 0
    %150 = vmatprep.subr.bf16.mxu0 0
    %151 = vmatpush1.bf16.msra.mxu0 0
    %152 = vmatprep.subr.bf16.mxu0 0
    %153 = vmatpush1.bf16.msra.mxu0 0
    %154 = vmatprep.mubr.bf16.mxu0 0
    %155 = vmatmul.mubr.bf16.gmra.mrb[0].mxu0 %v70
    %v156 = vpop.f32.mrb[0].mxu0
    %v157 = vadd.f32 %v61, %v156
    %v158 = vpop.f32.mrb[0].mxu0
    %v159 = vpop.f32.mrb[0].mxu0
    %v160 = vadd.f32 %v61, %v159
    %v161 = vpop.f32.mrb[0].mxu0
    %162 = vmatprep.mubr.bf16.mxu0 0
    %163 = vmatmul.mubr.bf16.gmra.mrb[0].mxu0 %v71
    %v164 = vpop.f32.mrb[0].mxu0
    %v165 = vadd.f32 %v61, %v164
    %v166 = vpop.f32.mrb[0].mxu0
    %v167 = vpop.f32.mrb[0].mxu0
    %v168 = vadd.f32 %v61, %v167
    %v169 = vpop.f32.mrb[0].mxu0
    %170 = vdwg.mxu0
    %vm171 = vcmp.gt.f32.partialorder %v157, 0.0
    %vm172 = vcmp.gt.f32.partialorder %v160, 0.0
    %vm173 = vcmp.gt.f32.partialorder %v165, 0.0
    %vm174 = vcmp.gt.f32.partialorder %v168, 0.0
    %v175 = vlaneseq
    %v176 = vshrl.u32 %v175, 7
    %v177 = vsub.s32 1, %v176
    %v178 = vrot.slane %v57, %v177
    %v179 = vmul.f32 %v178, %v157
    %v180 = vmul.f32 %v178, %v160
    %v181 = vmul.f32 %v178, %v165
    %v182 = vmul.f32 %v178, %v168
    %v183 = vsel %vm171, %v157, %v179
    %v184 = vsel %vm172, %v160, %v180
    %v185 = vsel %vm173, %v165, %v181
    %v186 = vsel %vm174, %v168, %v182
    %v187 = vpack.c.bf16 %v184, %v183
    %v188 = vpack.c.bf16 %v186, %v185
    %v189 = vld [vmem:[%s4] sm:$0x3f]
    %vm190 = vcmask 261120
    %v192 = vsel %vm190, %v189, 0
    %v195 = vsel %vm190, %v183, 0
    %v198 = vsel %vm190, %v184, 0
    %v201 = vsel %vm190, %v185, 0
    %v204 = vsel %vm190, %v186, 0
    %206 = vmatprep.subr.mxu0 0.0
    %207 = vmatpush1.xpose.msra.mxu0 %v195
    %208 = vmatprep.subr.mxu0 0.0
    %209 = vmatpush1.xpose.msra.mxu0 %v198
    %210 = vmatprep.subr.mxu0 0.0
    %211 = vmatpush1.xpose.msra.mxu0 %v201
    %212 = vmatprep.subr.mxu0 0.0
    %213 = vmatpush1.xpose.msra.mxu0 %v204
    %214 = vmatprep.subr.mxu0 0.0
    %215 = vmatpush1.xpose.msra.mxu0 0.0
    %216 = vmatprep.subr.mxu0 0.0
    %217 = vmatpush1.xpose.msra.mxu0 0.0
    %218 = vmatprep.subr.mxu0 0.0
    %219 = vmatpush1.xpose.msra.mxu0 0.0
    %220 = vmatprep.subr.mxu0 0.0
    %221 = vmatpush1.xpose.msra.mxu0 0.0
    %222 = vmatprep.subr.mxu0 0.0
    %223 = vmatpush1.xpose.msra.mxu0 0.0
    %224 = vmatprep.subr.mxu0 0.0
    %225 = vmatpush1.xpose.msra.mxu0 0.0
    %226 = vmatprep.subr.mxu0 0.0
    %227 = vmatpush1.xpose.msra.mxu0 0.0
    %228 = vmatprep.subr.mxu0 0.0
    %229 = vmatpush1.xpose.msra.mxu0 0.0
    %230 = vmatprep.subr.mxu0 0.0
    %231 = vmatpush1.xpose.msra.mxu0 0.0
    %232 = vmatprep.subr.mxu0 0.0
    %233 = vmatpush1.xpose.msra.mxu0 0.0
    %234 = vmatprep.subr.mxu0 0.0
    %235 = vmatpush1.xpose.msra.mxu0 0.0
    %236 = vmatprep.subr.mxu0 0.0
    %237 = vmatpush1.xpose.msra.mxu0 0.0
    %238 = vmatprep.subr.mxu0 0.0
    %239 = vmatpush1.xpose.msra.mxu0 0.0
    %240 = vmatprep.subr.mxu0 0.0
    %241 = vmatpush1.xpose.msra.mxu0 0.0
    %242 = vmatprep.subr.mxu0 0.0
    %243 = vmatpush1.xpose.msra.mxu0 0.0
    %244 = vmatprep.subr.mxu0 0.0
    %245 = vmatpush1.xpose.msra.mxu0 0.0
    %246 = vmatprep.subr.mxu0 0.0
    %247 = vmatpush1.xpose.msra.mxu0 0.0
    %248 = vmatprep.subr.mxu0 0.0
    %249 = vmatpush1.xpose.msra.mxu0 0.0
    %250 = vmatprep.subr.mxu0 0.0
    %251 = vmatpush1.xpose.msra.mxu0 0.0
    %252 = vmatprep.subr.mxu0 0.0
    %253 = vmatpush1.xpose.msra.mxu0 0.0
    %254 = vmatprep.subr.mxu0 0.0
    %255 = vmatpush1.xpose.msra.mxu0 0.0
    %256 = vmatprep.subr.mxu0 0.0
    %257 = vmatpush1.xpose.msra.mxu0 0.0
    %258 = vmatprep.subr.mxu0 0.0
    %259 = vmatpush1.xpose.msra.mxu0 0.0
    %260 = vmatprep.subr.mxu0 0.0
    %261 = vmatpush1.xpose.msra.mxu0 0.0
    %262 = vmatprep.subr.mxu0 0.0
    %263 = vmatpush1.xpose.msra.mxu0 0.0
    %264 = vmatprep.subr.mxu0 0.0
    %265 = vmatpush1.xpose.msra.mxu0 0.0
    %266 = vmatprep.subr.mxu0 0.0
    %267 = vmatpush1.xpose.msra.mxu0 0.0
    %268 = vmatprep.subr.mxu0 0.0
    %269 = vmatpush1.xpose.msra.mxu0 0.0
    %270 = vmatprep.mubr.f32.mxu0 0.0
    %271 = vmatmul.mubr.f32.gmra.mrb[0].mxu0 %v192
    %v272 = vpop.f32.mrb[0].mxu0
    %v273 = vadd.f32 0.0, %v272
    %v274 = vpop.f32.mrb[0].mxu0
    %275 = vdwg.mxu0
    %v276 = vlaneseq
    %v277 = vshrl.u32 %v276, 7
    %v278 = vsub.s32 1, %v277
    %v279 = vrot.slane %v189, %v278
    %281 = vrot.lane.b32.xlu0 %v279, 32
    %v282 = vpop.permute.xlu0 %281
    %v284 = vmul.f32 %v183, %v282
    %v285 = vmul.f32 %v184, %v282
    %v286 = vmul.f32 %v185, %v282
    %v287 = vmul.f32 %v186, %v282
    %292 = vrot.lane.b32.xlu0 %v284, 96
    %v293 = vpop.permute.xlu0 %292
    %294 = vrot.lane.b32.xlu0 %v285, 96
    %v295 = vpop.permute.xlu0 %294
    %296 = vrot.lane.b32.xlu0 %v286, 96
    %v297 = vpop.permute.xlu0 %296
    %298 = vrot.lane.b32.xlu0 %v287, 96
    %v299 = vpop.permute.xlu0 %298
    %v304 = vsel %vm190, %v293, 0.0
    %305 = vadd.xlane.f32.xlu0 %v304
    %v306 = vpop.xlane.xlu0 %305
    %v307 = vsel %vm190, %v295, 0.0
    %308 = vadd.xlane.f32.xlu0 %v307
    %v309 = vpop.xlane.xlu0 %308
    %v310 = vsel %vm190, %v297, 0.0
    %311 = vadd.xlane.f32.xlu0 %v310
    %v312 = vpop.xlane.xlu0 %311
    %v313 = vsel %vm190, %v299, 0.0
    %314 = vadd.xlane.f32.xlu0 %v313
    %v315 = vpop.xlane.xlu0 %314
    %v316 = vld [vmem:[%s3] sm:$0xff]
    %v317 = vld [vmem:[%s3 + $0x8] sm:$0xff]
    %v318 = vld [vmem:[%s3 + $0x10] sm:$0xff]
    %v319 = vld [vmem:[%s3 + $0x18] sm:$0xff]
    %v320 = vlaneseq
    %v321 = vshrl.u32 %v320, 7
    %v322 = vsub.s32 0, %v321
    %v323 = vrot.slane %v273, %v322
    %v324 = vadd.f32 %v306, %v323
    %v325 = vadd.f32 %v309, %v323
    %v326 = vadd.f32 %v312, %v323
    %v327 = vadd.f32 %v315, %v323
    %vm328 = vcmp.gt.f32.partialorder %v324, 0.0
    %vm329 = vcmp.gt.f32.partialorder %v325, 0.0
    %vm330 = vcmp.gt.f32.partialorder %v326, 0.0
    %vm331 = vcmp.gt.f32.partialorder %v327, 0.0
    %v332 = vmul.f32 %v324, 0.01
    %v333 = vmul.f32 %v325, 0.01
    %v334 = vmul.f32 %v326, 0.01
    %v335 = vmul.f32 %v327, 0.01
    %v336 = vsel %vm328, %v324, %v332
    %v337 = vsel %vm329, %v325, %v333
    %v338 = vsel %vm330, %v326, %v334
    %v339 = vsel %vm331, %v327, %v335
    %v340 = vadd.f32 %v336, %v316
    %v341 = vadd.f32 %v337, %v317
    %v342 = vadd.f32 %v338, %v318
    %v343 = vadd.f32 %v339, %v319
    %v344 = vsel %vm190, %v340, -inf
    %345 = vmax.xlane.f32.xlu0 %v344
    %v346 = vpop.xlane.xlu0 %345
    %v347 = vsel %vm190, %v341, -inf
    %348 = vmax.xlane.f32.xlu0 %v347
    %v349 = vpop.xlane.xlu0 %348
    %v350 = vsel %vm190, %v342, -inf
    %351 = vmax.xlane.f32.xlu0 %v350
    %v352 = vpop.xlane.xlu0 %351
    %v353 = vsel %vm190, %v343, -inf
    %354 = vmax.xlane.f32.xlu0 %v353
    %v355 = vpop.xlane.xlu0 %354
    %v356 = vsub.f32 %v340, %v346
    %v357 = vsub.f32 %v341, %v349
    %v358 = vsub.f32 %v342, %v352
    %v359 = vsub.f32 %v343, %v355
    %v360 = vmul.f32 %v356, 1.442695
    %v361 = vpow.pop %v360
    %v362 = vmul.f32 %v357, 1.442695
    %v363 = vpow.pop %v362
    %v364 = vmul.f32 %v358, 1.442695
    %v365 = vpow.pop %v364
    %v366 = vmul.f32 %v359, 1.442695
    %v367 = vpow.pop %v366
    %v368 = vsel %vm190, %v361, 0.0
    %369 = vadd.xlane.f32.xlu0 %v368
    %v370 = vpop.xlane.xlu0 %369
    %v371 = vsel %vm190, %v363, 0.0
    %372 = vadd.xlane.f32.xlu0 %v371
    %v373 = vpop.xlane.xlu0 %372
    %v374 = vsel %vm190, %v365, 0.0
    %375 = vadd.xlane.f32.xlu0 %v374
    %v376 = vpop.xlane.xlu0 %375
    %v377 = vsel %vm190, %v367, 0.0
    %378 = vadd.xlane.f32.xlu0 %v377
    %v379 = vpop.xlane.xlu0 %378
    %v380 = vrcp.pop %v370
    %v381 = vrcp.pop %v373
    %v382 = vrcp.pop %v376
    %v383 = vrcp.pop %v379
    %v384 = vmul.f32 %v361, %v380
    %v385 = vmul.f32 %v363, %v381
    %v386 = vmul.f32 %v365, %v382
    %v387 = vmul.f32 %v367, %v383
    %s388 = scalar_lea.vmem %s4, 8
    %v389 = vld [vmem:[%s388] sm:$0x3f]
    %v391 = vsel %vm190, %v389, 0
    %393 = vmatprep.subr.mxu0 0.0
    %394 = vmatpush1.xpose.msra.mxu0 %v195
    %395 = vmatprep.subr.mxu0 0.0
    %396 = vmatpush1.xpose.msra.mxu0 %v198
    %397 = vmatprep.subr.mxu0 0.0
    %398 = vmatpush1.xpose.msra.mxu0 %v201
    %399 = vmatprep.subr.mxu0 0.0
    %400 = vmatpush1.xpose.msra.mxu0 %v204
    %401 = vmatprep.subr.mxu0 0.0
    %402 = vmatpush1.xpose.msra.mxu0 0.0
    %403 = vmatprep.subr.mxu0 0.0
    %404 = vmatpush1.xpose.msra.mxu0 0.0
    %405 = vmatprep.subr.mxu0 0.0
    %406 = vmatpush1.xpose.msra.mxu0 0.0
    %407 = vmatprep.subr.mxu0 0.0
    %408 = vmatpush1.xpose.msra.mxu0 0.0
    %409 = vmatprep.subr.mxu0 0.0
    %410 = vmatpush1.xpose.msra.mxu0 0.0
    %411 = vmatprep.subr.mxu0 0.0
    %412 = vmatpush1.xpose.msra.mxu0 0.0
    %413 = vmatprep.subr.mxu0 0.0
    %414 = vmatpush1.xpose.msra.mxu0 0.0
    %415 = vmatprep.subr.mxu0 0.0
    %416 = vmatpush1.xpose.msra.mxu0 0.0
    %417 = vmatprep.subr.mxu0 0.0
    %418 = vmatpush1.xpose.msra.mxu0 0.0
    %419 = vmatprep.subr.mxu0 0.0
    %420 = vmatpush1.xpose.msra.mxu0 0.0
    %421 = vmatprep.subr.mxu0 0.0
    %422 = vmatpush1.xpose.msra.mxu0 0.0
    %423 = vmatprep.subr.mxu0 0.0
    %424 = vmatpush1.xpose.msra.mxu0 0.0
    %425 = vmatprep.subr.mxu0 0.0
    %426 = vmatpush1.xpose.msra.mxu0 0.0
    %427 = vmatprep.subr.mxu0 0.0
    %428 = vmatpush1.xpose.msra.mxu0 0.0
    %429 = vmatprep.subr.mxu0 0.0
    %430 = vmatpush1.xpose.msra.mxu0 0.0
    %431 = vmatprep.subr.mxu0 0.0
    %432 = vmatpush1.xpose.msra.mxu0 0.0
    %433 = vmatprep.subr.mxu0 0.0
    %434 = vmatpush1.xpose.msra.mxu0 0.0
    %435 = vmatprep.subr.mxu0 0.0
    %436 = vmatpush1.xpose.msra.mxu0 0.0
    %437 = vmatprep.subr.mxu0 0.0
    %438 = vmatpush1.xpose.msra.mxu0 0.0
    %439 = vmatprep.subr.mxu0 0.0
    %440 = vmatpush1.xpose.msra.mxu0 0.0
    %441 = vmatprep.subr.mxu0 0.0
    %442 = vmatpush1.xpose.msra.mxu0 0.0
    %443 = vmatprep.subr.mxu0 0.0
    %444 = vmatpush1.xpose.msra.mxu0 0.0
    %445 = vmatprep.subr.mxu0 0.0
    %446 = vmatpush1.xpose.msra.mxu0 0.0
    %447 = vmatprep.subr.mxu0 0.0
    %448 = vmatpush1.xpose.msra.mxu0 0.0
    %449 = vmatprep.subr.mxu0 0.0
    %450 = vmatpush1.xpose.msra.mxu0 0.0
    %451 = vmatprep.subr.mxu0 0.0
    %452 = vmatpush1.xpose.msra.mxu0 0.0
    %453 = vmatprep.subr.mxu0 0.0
    %454 = vmatpush1.xpose.msra.mxu0 0.0
    %455 = vmatprep.subr.mxu0 0.0
    %456 = vmatpush1.xpose.msra.mxu0 0.0
    %457 = vmatprep.mubr.f32.mxu0 0.0
    %458 = vmatmul.mubr.f32.gmra.mrb[0].mxu0 %v391
    %v459 = vpop.f32.mrb[0].mxu0
    %v460 = vadd.f32 0.0, %v459
    %v461 = vpop.f32.mrb[0].mxu0
    %462 = vdwg.mxu0
    %v463 = vlaneseq
    %v464 = vshrl.u32 %v463, 7
    %v465 = vsub.s32 1, %v464
    %v466 = vrot.slane %v389, %v465
    %468 = vrot.lane.b32.xlu0 %v466, 64
    %v469 = vpop.permute.xlu0 %468
    %v471 = vmul.f32 %v183, %v469
    %v472 = vmul.f32 %v184, %v469
    %v473 = vmul.f32 %v185, %v469
    %v474 = vmul.f32 %v186, %v469
    %479 = vrot.lane.b32.xlu0 %v471, 64
    %v480 = vpop.permute.xlu0 %479
    %481 = vrot.lane.b32.xlu0 %v472, 64
    %v482 = vpop.permute.xlu0 %481
    %483 = vrot.lane.b32.xlu0 %v473, 64
    %v484 = vpop.permute.xlu0 %483
    %485 = vrot.lane.b32.xlu0 %v474, 64
    %v486 = vpop.permute.xlu0 %485
    %v491 = vsel %vm190, %v480, 0.0
    %492 = vadd.xlane.f32.xlu0 %v491
    %v493 = vpop.xlane.xlu0 %492
    %v494 = vsel %vm190, %v482, 0.0
    %495 = vadd.xlane.f32.xlu0 %v494
    %v496 = vpop.xlane.xlu0 %495
    %v497 = vsel %vm190, %v484, 0.0
    %498 = vadd.xlane.f32.xlu0 %v497
    %v499 = vpop.xlane.xlu0 %498
    %v500 = vsel %vm190, %v486, 0.0
    %501 = vadd.xlane.f32.xlu0 %v500
    %v502 = vpop.xlane.xlu0 %501
    %s503 = scalar_lea.vmem %s3, 32
    %v504 = vld [vmem:[%s503] sm:$0xff]
    %v505 = vld [vmem:[%s503 + $0x8] sm:$0xff]
    %v506 = vld [vmem:[%s503 + $0x10] sm:$0xff]
    %v507 = vld [vmem:[%s503 + $0x18] sm:$0xff]
    %v508 = vlaneseq
    %v509 = vshrl.u32 %v508, 7
    %v510 = vsub.s32 0, %v509
    %v511 = vrot.slane %v460, %v510
    %v512 = vadd.f32 %v493, %v511
    %v513 = vadd.f32 %v496, %v511
    %v514 = vadd.f32 %v499, %v511
    %v515 = vadd.f32 %v502, %v511
    %vm516 = vcmp.gt.f32.partialorder %v512, 0.0
    %vm517 = vcmp.gt.f32.partialorder %v513, 0.0
    %vm518 = vcmp.gt.f32.partialorder %v514, 0.0
    %vm519 = vcmp.gt.f32.partialorder %v515, 0.0
    %v520 = vmul.f32 %v512, 0.01
    %v521 = vmul.f32 %v513, 0.01
    %v522 = vmul.f32 %v514, 0.01
    %v523 = vmul.f32 %v515, 0.01
    %v524 = vsel %vm516, %v512, %v520
    %v525 = vsel %vm517, %v513, %v521
    %v526 = vsel %vm518, %v514, %v522
    %v527 = vsel %vm519, %v515, %v523
    %v528 = vadd.f32 %v524, %v504
    %v529 = vadd.f32 %v525, %v505
    %v530 = vadd.f32 %v526, %v506
    %v531 = vadd.f32 %v527, %v507
    %v532 = vsel %vm190, %v528, -inf
    %533 = vmax.xlane.f32.xlu0 %v532
    %v534 = vpop.xlane.xlu0 %533
    %v535 = vsel %vm190, %v529, -inf
    %536 = vmax.xlane.f32.xlu0 %v535
    %v537 = vpop.xlane.xlu0 %536
    %v538 = vsel %vm190, %v530, -inf
    %539 = vmax.xlane.f32.xlu0 %v538
    %v540 = vpop.xlane.xlu0 %539
    %v541 = vsel %vm190, %v531, -inf
    %542 = vmax.xlane.f32.xlu0 %v541
    %v543 = vpop.xlane.xlu0 %542
    %v544 = vsub.f32 %v528, %v534
    %v545 = vsub.f32 %v529, %v537
    %v546 = vsub.f32 %v530, %v540
    %v547 = vsub.f32 %v531, %v543
    %v548 = vmul.f32 %v544, 1.442695
    %v549 = vpow.pop %v548
    %v550 = vmul.f32 %v545, 1.442695
    %v551 = vpow.pop %v550
    %v552 = vmul.f32 %v546, 1.442695
    %v553 = vpow.pop %v552
    %v554 = vmul.f32 %v547, 1.442695
    %v555 = vpow.pop %v554
    %v556 = vsel %vm190, %v549, 0.0
    %557 = vadd.xlane.f32.xlu0 %v556
    %v558 = vpop.xlane.xlu0 %557
    %v559 = vsel %vm190, %v551, 0.0
    %560 = vadd.xlane.f32.xlu0 %v559
    %v561 = vpop.xlane.xlu0 %560
    %v562 = vsel %vm190, %v553, 0.0
    %563 = vadd.xlane.f32.xlu0 %v562
    %v564 = vpop.xlane.xlu0 %563
    %v565 = vsel %vm190, %v555, 0.0
    %566 = vadd.xlane.f32.xlu0 %v565
    %v567 = vpop.xlane.xlu0 %566
    %v568 = vrcp.pop %v558
    %v569 = vrcp.pop %v561
    %v570 = vrcp.pop %v564
    %v571 = vrcp.pop %v567
    %v572 = vmul.f32 %v549, %v568
    %v573 = vmul.f32 %v551, %v569
    %v574 = vmul.f32 %v553, %v570
    %v575 = vmul.f32 %v555, %v571
    %s576 = scalar_lea.vmem %s4, 16
    %v577 = vld [vmem:[%s576] sm:$0x3f]
    %v579 = vsel %vm190, %v577, 0
    %581 = vmatprep.subr.mxu0 0.0
    %582 = vmatpush1.xpose.msra.mxu0 %v195
    %583 = vmatprep.subr.mxu0 0.0
    %584 = vmatpush1.xpose.msra.mxu0 %v198
    %585 = vmatprep.subr.mxu0 0.0
    %586 = vmatpush1.xpose.msra.mxu0 %v201
    %587 = vmatprep.subr.mxu0 0.0
    %588 = vmatpush1.xpose.msra.mxu0 %v204
    %589 = vmatprep.subr.mxu0 0.0
    %590 = vmatpush1.xpose.msra.mxu0 0.0
    %591 = vmatprep.subr.mxu0 0.0
    %592 = vmatpush1.xpose.msra.mxu0 0.0
    %593 = vmatprep.subr.mxu0 0.0
    %594 = vmatpush1.xpose.msra.mxu0 0.0
    %595 = vmatprep.subr.mxu0 0.0
    %596 = vmatpush1.xpose.msra.mxu0 0.0
    %597 = vmatprep.subr.mxu0 0.0
    %598 = vmatpush1.xpose.msra.mxu0 0.0
    %599 = vmatprep.subr.mxu0 0.0
    %600 = vmatpush1.xpose.msra.mxu0 0.0
    %601 = vmatprep.subr.mxu0 0.0
    %602 = vmatpush1.xpose.msra.mxu0 0.0
    %603 = vmatprep.subr.mxu0 0.0
    %604 = vmatpush1.xpose.msra.mxu0 0.0
    %605 = vmatprep.subr.mxu0 0.0
    %606 = vmatpush1.xpose.msra.mxu0 0.0
    %607 = vmatprep.subr.mxu0 0.0
    %608 = vmatpush1.xpose.msra.mxu0 0.0
    %609 = vmatprep.subr.mxu0 0.0
    %610 = vmatpush1.xpose.msra.mxu0 0.0
    %611 = vmatprep.subr.mxu0 0.0
    %612 = vmatpush1.xpose.msra.mxu0 0.0
    %613 = vmatprep.subr.mxu0 0.0
    %614 = vmatpush1.xpose.msra.mxu0 0.0
    %615 = vmatprep.subr.mxu0 0.0
    %616 = vmatpush1.xpose.msra.mxu0 0.0
    %617 = vmatprep.subr.mxu0 0.0
    %618 = vmatpush1.xpose.msra.mxu0 0.0
    %619 = vmatprep.subr.mxu0 0.0
    %620 = vmatpush1.xpose.msra.mxu0 0.0
    %621 = vmatprep.subr.mxu0 0.0
    %622 = vmatpush1.xpose.msra.mxu0 0.0
    %623 = vmatprep.subr.mxu0 0.0
    %624 = vmatpush1.xpose.msra.mxu0 0.0
    %625 = vmatprep.subr.mxu0 0.0
    %626 = vmatpush1.xpose.msra.mxu0 0.0
    %627 = vmatprep.subr.mxu0 0.0
    %628 = vmatpush1.xpose.msra.mxu0 0.0
    %629 = vmatprep.subr.mxu0 0.0
    %630 = vmatpush1.xpose.msra.mxu0 0.0
    %631 = vmatprep.subr.mxu0 0.0
    %632 = vmatpush1.xpose.msra.mxu0 0.0
    %633 = vmatprep.subr.mxu0 0.0
    %634 = vmatpush1.xpose.msra.mxu0 0.0
    %635 = vmatprep.subr.mxu0 0.0
    %636 = vmatpush1.xpose.msra.mxu0 0.0
    %637 = vmatprep.subr.mxu0 0.0
    %638 = vmatpush1.xpose.msra.mxu0 0.0
    %639 = vmatprep.subr.mxu0 0.0
    %640 = vmatpush1.xpose.msra.mxu0 0.0
    %641 = vmatprep.subr.mxu0 0.0
    %642 = vmatpush1.xpose.msra.mxu0 0.0
    %643 = vmatprep.subr.mxu0 0.0
    %644 = vmatpush1.xpose.msra.mxu0 0.0
    %645 = vmatprep.mubr.f32.mxu0 0.0
    %646 = vmatmul.mubr.f32.gmra.mrb[0].mxu0 %v579
    %v647 = vpop.f32.mrb[0].mxu0
    %v648 = vadd.f32 0.0, %v647
    %v649 = vpop.f32.mrb[0].mxu0
    %650 = vdwg.mxu0
    %v651 = vlaneseq
    %v652 = vshrl.u32 %v651, 7
    %v653 = vsub.s32 1, %v652
    %v654 = vrot.slane %v577, %v653
    %656 = vrot.lane.b32.xlu0 %v654, 96
    %v657 = vpop.permute.xlu0 %656
    %v659 = vmul.f32 %v183, %v657
    %v660 = vmul.f32 %v184, %v657
    %v661 = vmul.f32 %v185, %v657
    %v662 = vmul.f32 %v186, %v657
    %667 = vrot.lane.b32.xlu0 %v659, 32
    %v668 = vpop.permute.xlu0 %667
    %669 = vrot.lane.b32.xlu0 %v660, 32
    %v670 = vpop.permute.xlu0 %669
    %671 = vrot.lane.b32.xlu0 %v661, 32
    %v672 = vpop.permute.xlu0 %671
    %673 = vrot.lane.b32.xlu0 %v662, 32
    %v674 = vpop.permute.xlu0 %673
    %v679 = vsel %vm190, %v668, 0.0
    %680 = vadd.xlane.f32.xlu0 %v679
    %v681 = vpop.xlane.xlu0 %680
    %v682 = vsel %vm190, %v670, 0.0
    %683 = vadd.xlane.f32.xlu0 %v682
    %v684 = vpop.xlane.xlu0 %683
    %v685 = vsel %vm190, %v672, 0.0
    %686 = vadd.xlane.f32.xlu0 %v685
    %v687 = vpop.xlane.xlu0 %686
    %v688 = vsel %vm190, %v674, 0.0
    %689 = vadd.xlane.f32.xlu0 %v688
    %v690 = vpop.xlane.xlu0 %689
    %s691 = scalar_lea.vmem %s3, 64
    %v692 = vld [vmem:[%s691] sm:$0xff]
    %v693 = vld [vmem:[%s691 + $0x8] sm:$0xff]
    %v694 = vld [vmem:[%s691 + $0x10] sm:$0xff]
    %v695 = vld [vmem:[%s691 + $0x18] sm:$0xff]
    %v696 = vlaneseq
    %v697 = vshrl.u32 %v696, 7
    %v698 = vsub.s32 0, %v697
    %v699 = vrot.slane %v648, %v698
    %v700 = vadd.f32 %v681, %v699
    %v701 = vadd.f32 %v684, %v699
    %v702 = vadd.f32 %v687, %v699
    %v703 = vadd.f32 %v690, %v699
    %vm704 = vcmp.gt.f32.partialorder %v700, 0.0
    %vm705 = vcmp.gt.f32.partialorder %v701, 0.0
    %vm706 = vcmp.gt.f32.partialorder %v702, 0.0
    %vm707 = vcmp.gt.f32.partialorder %v703, 0.0
    %v708 = vmul.f32 %v700, 0.01
    %v709 = vmul.f32 %v701, 0.01
    %v710 = vmul.f32 %v702, 0.01
    %v711 = vmul.f32 %v703, 0.01
    %v712 = vsel %vm704, %v700, %v708
    %v713 = vsel %vm705, %v701, %v709
    %v714 = vsel %vm706, %v702, %v710
    %v715 = vsel %vm707, %v703, %v711
    %v716 = vadd.f32 %v712, %v692
    %v717 = vadd.f32 %v713, %v693
    %v718 = vadd.f32 %v714, %v694
    %v719 = vadd.f32 %v715, %v695
    %v720 = vsel %vm190, %v716, -inf
    %721 = vmax.xlane.f32.xlu0 %v720
    %v722 = vpop.xlane.xlu0 %721
    %v723 = vsel %vm190, %v717, -inf
    %724 = vmax.xlane.f32.xlu0 %v723
    %v725 = vpop.xlane.xlu0 %724
    %v726 = vsel %vm190, %v718, -inf
    %727 = vmax.xlane.f32.xlu0 %v726
    %v728 = vpop.xlane.xlu0 %727
    %v729 = vsel %vm190, %v719, -inf
    %730 = vmax.xlane.f32.xlu0 %v729
    %v731 = vpop.xlane.xlu0 %730
    %v732 = vsub.f32 %v716, %v722
    %v733 = vsub.f32 %v717, %v725
    %v734 = vsub.f32 %v718, %v728
    %v735 = vsub.f32 %v719, %v731
    %v736 = vmul.f32 %v732, 1.442695
    %v737 = vpow.pop %v736
    %v738 = vmul.f32 %v733, 1.442695
    %v739 = vpow.pop %v738
    %v740 = vmul.f32 %v734, 1.442695
    %v741 = vpow.pop %v740
    %v742 = vmul.f32 %v735, 1.442695
    %v743 = vpow.pop %v742
    %v744 = vsel %vm190, %v737, 0.0
    %745 = vadd.xlane.f32.xlu0 %v744
    %v746 = vpop.xlane.xlu0 %745
    %v747 = vsel %vm190, %v739, 0.0
    %748 = vadd.xlane.f32.xlu0 %v747
    %v749 = vpop.xlane.xlu0 %748
    %v750 = vsel %vm190, %v741, 0.0
    %751 = vadd.xlane.f32.xlu0 %v750
    %v752 = vpop.xlane.xlu0 %751
    %v753 = vsel %vm190, %v743, 0.0
    %754 = vadd.xlane.f32.xlu0 %v753
    %v755 = vpop.xlane.xlu0 %754
    %v756 = vrcp.pop %v746
    %v757 = vrcp.pop %v749
    %v758 = vrcp.pop %v752
    %v759 = vrcp.pop %v755
    %v760 = vmul.f32 %v737, %v756
    %v761 = vmul.f32 %v739, %v757
    %v762 = vmul.f32 %v741, %v758
    %v763 = vmul.f32 %v743, %v759
    %v764 = vpack.c.bf16 %v385, %v384
    %v765 = vpack.c.bf16 %v387, %v386
    %v766 = vpack.c.bf16 %v573, %v572
    %v767 = vpack.c.bf16 %v575, %v574
    %v768 = vpack.c.bf16 %v761, %v760
    %v769 = vpack.c.bf16 %v763, %v762
    %v771 = vsel %vm190, %v764, 0
    %v774 = vsel %vm190, %v765, 0
    %v777 = vsel %vm190, %v766, 0
    %v780 = vsel %vm190, %v767, 0
    %v783 = vsel %vm190, %v768, 0
    %v786 = vsel %vm190, %v769, 0
    %788 = vmatprep.subr.bf16.mxu0 0
    %789 = vmatpush1.bf16.msra.mxu0 %v187
    %790 = vmatprep.subr.bf16.mxu0 0
    %791 = vmatpush1.bf16.msra.mxu0 %v188
    %792 = vmatprep.subr.bf16.mxu0 0
    %793 = vmatpush1.bf16.msra.mxu0 0
    %794 = vmatprep.subr.bf16.mxu0 0
    %795 = vmatpush1.bf16.msra.mxu0 0
    %796 = vmatprep.subr.bf16.mxu0 0
    %797 = vmatpush1.bf16.msra.mxu0 0
    %798 = vmatprep.subr.bf16.mxu0 0
    %799 = vmatpush1.bf16.msra.mxu0 0
    %800 = vmatprep.subr.bf16.mxu0 0
    %801 = vmatpush1.bf16.msra.mxu0 0
    %802 = vmatprep.subr.bf16.mxu0 0
    %803 = vmatpush1.bf16.msra.mxu0 0
    %804 = vmatprep.subr.bf16.mxu0 0
    %805 = vmatpush1.bf16.msra.mxu0 0
    %806 = vmatprep.subr.bf16.mxu0 0
    %807 = vmatpush1.bf16.msra.mxu0 0
    %808 = vmatprep.subr.bf16.mxu0 0
    %809 = vmatpush1.bf16.msra.mxu0 0
    %810 = vmatprep.subr.bf16.mxu0 0
    %811 = vmatpush1.bf16.msra.mxu0 0
    %812 = vmatprep.subr.bf16.mxu0 0
    %813 = vmatpush1.bf16.msra.mxu0 0
    %814 = vmatprep.subr.bf16.mxu0 0
    %815 = vmatpush1.bf16.msra.mxu0 0
    %816 = vmatprep.subr.bf16.mxu0 0
    %817 = vmatpush1.bf16.msra.mxu0 0
    %818 = vmatprep.subr.bf16.mxu0 0
    %819 = vmatpush1.bf16.msra.mxu0 0
    %820 = vmatprep.mubr.bf16.mxu0 0
    %821 = vmatmul.mubr.bf16.gmra.mrb[0].mxu0 %v771
    %v822 = vpop.f32.mrb[0].mxu0
    %v823 = vadd.f32 0.0, %v822
    %v824 = vpop.f32.mrb[0].mxu0
    %v825 = vpop.f32.mrb[0].mxu0
    %v826 = vadd.f32 0.0, %v825
    %v827 = vpop.f32.mrb[0].mxu0
    %828 = vmatprep.mubr.bf16.mxu0 0
    %829 = vmatmul.mubr.bf16.gmra.mrb[0].mxu0 %v774
    %v830 = vpop.f32.mrb[0].mxu0
    %v831 = vadd.f32 0.0, %v830
    %v832 = vpop.f32.mrb[0].mxu0
    %v833 = vpop.f32.mrb[0].mxu0
    %v834 = vadd.f32 0.0, %v833
    %v835 = vpop.f32.mrb[0].mxu0
    %836 = vmatprep.mubr.bf16.mxu0 0
    %837 = vmatmul.mubr.bf16.gmra.mrb[0].mxu0 %v777
    %v838 = vpop.f32.mrb[0].mxu0
    %v839 = vadd.f32 0.0, %v838
    %v840 = vpop.f32.mrb[0].mxu0
    %v841 = vpop.f32.mrb[0].mxu0
    %v842 = vadd.f32 0.0, %v841
    %v843 = vpop.f32.mrb[0].mxu0
    %844 = vmatprep.mubr.bf16.mxu0 0
    %845 = vmatmul.mubr.bf16.gmra.mrb[0].mxu0 %v780
    %v846 = vpop.f32.mrb[0].mxu0
    %v847 = vadd.f32 0.0, %v846
    %v848 = vpop.f32.mrb[0].mxu0
    %v849 = vpop.f32.mrb[0].mxu0
    %v850 = vadd.f32 0.0, %v849
    %v851 = vpop.f32.mrb[0].mxu0
    %852 = vmatprep.mubr.bf16.mxu0 0
    %853 = vmatmul.mubr.bf16.gmra.mrb[0].mxu0 %v783
    %v854 = vpop.f32.mrb[0].mxu0
    %v855 = vadd.f32 0.0, %v854
    %v856 = vpop.f32.mrb[0].mxu0
    %v857 = vpop.f32.mrb[0].mxu0
    %v858 = vadd.f32 0.0, %v857
    %v859 = vpop.f32.mrb[0].mxu0
    %860 = vmatprep.mubr.bf16.mxu0 0
    %861 = vmatmul.mubr.bf16.gmra.mrb[0].mxu0 %v786
    %v862 = vpop.f32.mrb[0].mxu0
    %v863 = vadd.f32 0.0, %v862
    %v864 = vpop.f32.mrb[0].mxu0
    %v865 = vpop.f32.mrb[0].mxu0
    %v866 = vadd.f32 0.0, %v865
    %v867 = vpop.f32.mrb[0].mxu0
    %868 = vdwg.mxu0
    %v869 = vlaneseq
    %v870 = vshrl.u32 %v869, 7
    %v871 = vsub.s32 2, %v870
    %v872 = vrot.slane %v189, %v871
    %v873 = vadd.f32 %v823, %v872
    %v874 = vadd.f32 %v826, %v872
    %v875 = vadd.f32 %v831, %v872
    %v876 = vadd.f32 %v834, %v872
    %v877 = vld [vmem:[%s5] sm:$0xff]
    %v878 = vld [vmem:[%s5 + $0x8] sm:$0xff]
    %v879 = vld [vmem:[%s5 + $0x10] sm:$0xff]
    %v880 = vld [vmem:[%s5 + $0x18] sm:$0xff]
    %vm881 = vcmask 7168
    %v882 = vsel %vm881, %v877, 0.0
    %v883 = vsel %vm881, %v878, 0.0
    %v884 = vadd.f32 %v882, %v883
    %v885 = vsel %vm881, %v879, 0.0
    %v886 = vadd.f32 %v884, %v885
    %v887 = vsel %vm881, %v880, 0.0
    %v888 = vadd.f32 %v886, %v887
    %v889 = vrot.slane %v888, 4
    %v890 = vadd.f32 %v888, %v889
    %v891 = vrot.slane %v890, 2
    %v892 = vadd.f32 %v890, %v891
    %v893 = vrot.slane %v892, 1
    %v894 = vadd.f32 %v892, %v893
    %v895 = vrcp.pop %v894
    %v896 = vmul.f32 1.0, %v895
    %898 = vset.pattern.permute.xlu0 0
    %899 = vperm.xlu0 %898, %v877
    %v900 = vpop.permute.xlu0 %899
    %903 = vset.pattern.permute.xlu0 0
    %904 = vperm.xlu0 %903, %v878
    %v905 = vpop.permute.xlu0 %904
    %908 = vset.pattern.permute.xlu0 0
    %909 = vperm.xlu0 %908, %v879
    %v910 = vpop.permute.xlu0 %909
    %913 = vset.pattern.permute.xlu0 0
    %914 = vperm.xlu0 %913, %v880
    %v915 = vpop.permute.xlu0 %914
    %v917 = vmul.f32 %v873, %v900
    %v918 = vmul.f32 %v874, %v905
    %v919 = vmul.f32 %v875, %v910
    %v920 = vmul.f32 %v876, %v915
    %v921 = vsel %vm190, %v917, 0.0
    %v922 = vsel %vm190, %v918, 0.0
    %v923 = vadd.f32 %v921, %v922
    %v924 = vsel %vm190, %v919, 0.0
    %v925 = vadd.f32 %v923, %v924
    %v926 = vsel %vm190, %v920, 0.0
    %v927 = vadd.f32 %v925, %v926
    %v928 = vrot.slane %v927, 4
    %v929 = vadd.f32 %v927, %v928
    %v930 = vrot.slane %v929, 2
    %v931 = vadd.f32 %v929, %v930
    %v932 = vrot.slane %v931, 1
    %v933 = vadd.f32 %v931, %v932
    %935 = vset.pattern.permute.xlu0 0
    %936 = vperm.xlu0 %935, %v896
    %v937 = vpop.permute.xlu0 %936
    %v939 = vmul.f32 %v933, %v937
    %v940 = vsub.f32 %v873, %v939
    %v941 = vsub.f32 %v874, %v939
    %v942 = vsub.f32 %v875, %v939
    %v943 = vsub.f32 %v876, %v939
    %v944 = vmul.f32 %v940, %v940
    %v945 = vmul.f32 %v941, %v941
    %v946 = vmul.f32 %v942, %v942
    %v947 = vmul.f32 %v943, %v943
    %v948 = vmul.f32 %v944, %v900
    %v949 = vmul.f32 %v945, %v905
    %v950 = vmul.f32 %v946, %v910
    %v951 = vmul.f32 %v947, %v915
    %v952 = vsel %vm190, %v948, 0.0
    %v953 = vsel %vm190, %v949, 0.0
    %v954 = vadd.f32 %v952, %v953
    %v955 = vsel %vm190, %v950, 0.0
    %v956 = vadd.f32 %v954, %v955
    %v957 = vsel %vm190, %v951, 0.0
    %v958 = vadd.f32 %v956, %v957
    %v959 = vrot.slane %v958, 4
    %v960 = vadd.f32 %v958, %v959
    %v961 = vrot.slane %v960, 2
    %v962 = vadd.f32 %v960, %v961
    %v963 = vrot.slane %v962, 1
    %v964 = vadd.f32 %v962, %v963
    %v965 = vmul.f32 %v964, %v937
    %v966 = vadd.f32 %v965, 1e-05
    %v967 = vrsqrt.pop %v966
    %v968 = vmul.f32 %v940, %v967
    %v969 = vmul.f32 %v941, %v967
    %v970 = vmul.f32 %v942, %v967
    %v971 = vmul.f32 %v943, %v967
    %v972 = vlaneseq
    %v973 = vshrl.u32 %v972, 7
    %v974 = vsub.s32 3, %v973
    %v975 = vrot.slane %v189, %v974
    %v976 = vmul.f32 %v968, %v975
    %v977 = vmul.f32 %v969, %v975
    %v978 = vmul.f32 %v970, %v975
    %v979 = vmul.f32 %v971, %v975
    %v980 = vlaneseq
    %v981 = vshrl.u32 %v980, 7
    %v982 = vsub.s32 4, %v981
    %v983 = vrot.slane %v189, %v982
    %v984 = vadd.f32 %v976, %v983
    %v985 = vadd.f32 %v977, %v983
    %v986 = vadd.f32 %v978, %v983
    %v987 = vadd.f32 %v979, %v983
    %vm988 = vcmp.gt.f32.partialorder %v984, 0.0
    %vm989 = vcmp.gt.f32.partialorder %v985, 0.0
    %vm990 = vcmp.gt.f32.partialorder %v986, 0.0
    %vm991 = vcmp.gt.f32.partialorder %v987, 0.0
    %v992 = vlaneseq
    %v993 = vshrl.u32 %v992, 7
    %v994 = vsub.s32 5, %v993
    %v995 = vrot.slane %v189, %v994
    %v996 = vmul.f32 %v995, %v984
    %v997 = vmul.f32 %v995, %v985
    %v998 = vmul.f32 %v995, %v986
    %v999 = vmul.f32 %v995, %v987
    %v1000 = vsel %vm988, %v984, %v996
    %v1001 = vsel %vm989, %v985, %v997
    %v1002 = vsel %vm990, %v986, %v998
    %v1003 = vsel %vm991, %v987, %v999
    %v1004 = vmul.f32 %v1000, %v900
    %v1005 = vmul.f32 %v1001, %v905
    %v1006 = vmul.f32 %v1002, %v910
    %v1007 = vmul.f32 %v1003, %v915
    %v1008 = vlaneseq
    %v1009 = vshrl.u32 %v1008, 7
    %v1010 = vsub.s32 2, %v1009
    %v1011 = vrot.slane %v389, %v1010
    %v1012 = vadd.f32 %v839, %v1011
    %v1013 = vadd.f32 %v842, %v1011
    %v1014 = vadd.f32 %v847, %v1011
    %v1015 = vadd.f32 %v850, %v1011
    %s1016 = scalar_lea.vmem %s5, 32
    %v1017 = vld [vmem:[%s1016] sm:$0xff]
    %v1018 = vld [vmem:[%s1016 + $0x8] sm:$0xff]
    %v1019 = vld [vmem:[%s1016 + $0x10] sm:$0xff]
    %v1020 = vld [vmem:[%s1016 + $0x18] sm:$0xff]
    %v1021 = vsel %vm881, %v1017, 0.0
    %v1022 = vsel %vm881, %v1018, 0.0
    %v1023 = vadd.f32 %v1021, %v1022
    %v1024 = vsel %vm881, %v1019, 0.0
    %v1025 = vadd.f32 %v1023, %v1024
    %v1026 = vsel %vm881, %v1020, 0.0
    %v1027 = vadd.f32 %v1025, %v1026
    %v1028 = vrot.slane %v1027, 4
    %v1029 = vadd.f32 %v1027, %v1028
    %v1030 = vrot.slane %v1029, 2
    %v1031 = vadd.f32 %v1029, %v1030
    %v1032 = vrot.slane %v1031, 1
    %v1033 = vadd.f32 %v1031, %v1032
    %v1034 = vrcp.pop %v1033
    %v1035 = vmul.f32 1.0, %v1034
    %1037 = vset.pattern.permute.xlu0 0
    %1038 = vperm.xlu0 %1037, %v1017
    %v1039 = vpop.permute.xlu0 %1038
    %1042 = vset.pattern.permute.xlu0 0
    %1043 = vperm.xlu0 %1042, %v1018
    %v1044 = vpop.permute.xlu0 %1043
    %1047 = vset.pattern.permute.xlu0 0
    %1048 = vperm.xlu0 %1047, %v1019
    %v1049 = vpop.permute.xlu0 %1048
    %1052 = vset.pattern.permute.xlu0 0
    %1053 = vperm.xlu0 %1052, %v1020
    %v1054 = vpop.permute.xlu0 %1053
    %v1056 = vmul.f32 %v1012, %v1039
    %v1057 = vmul.f32 %v1013, %v1044
    %v1058 = vmul.f32 %v1014, %v1049
    %v1059 = vmul.f32 %v1015, %v1054
    %v1060 = vsel %vm190, %v1056, 0.0
    %v1061 = vsel %vm190, %v1057, 0.0
    %v1062 = vadd.f32 %v1060, %v1061
    %v1063 = vsel %vm190, %v1058, 0.0
    %v1064 = vadd.f32 %v1062, %v1063
    %v1065 = vsel %vm190, %v1059, 0.0
    %v1066 = vadd.f32 %v1064, %v1065
    %v1067 = vrot.slane %v1066, 4
    %v1068 = vadd.f32 %v1066, %v1067
    %v1069 = vrot.slane %v1068, 2
    %v1070 = vadd.f32 %v1068, %v1069
    %v1071 = vrot.slane %v1070, 1
    %v1072 = vadd.f32 %v1070, %v1071
    %1074 = vset.pattern.permute.xlu0 0
    %1075 = vperm.xlu0 %1074, %v1035
    %v1076 = vpop.permute.xlu0 %1075
    %v1078 = vmul.f32 %v1072, %v1076
    %v1079 = vsub.f32 %v1012, %v1078
    %v1080 = vsub.f32 %v1013, %v1078
    %v1081 = vsub.f32 %v1014, %v1078
    %v1082 = vsub.f32 %v1015, %v1078
    %v1083 = vmul.f32 %v1079, %v1079
    %v1084 = vmul.f32 %v1080, %v1080
    %v1085 = vmul.f32 %v1081, %v1081
    %v1086 = vmul.f32 %v1082, %v1082
    %v1087 = vmul.f32 %v1083, %v1039
    %v1088 = vmul.f32 %v1084, %v1044
    %v1089 = vmul.f32 %v1085, %v1049
    %v1090 = vmul.f32 %v1086, %v1054
    %v1091 = vsel %vm190, %v1087, 0.0
    %v1092 = vsel %vm190, %v1088, 0.0
    %v1093 = vadd.f32 %v1091, %v1092
    %v1094 = vsel %vm190, %v1089, 0.0
    %v1095 = vadd.f32 %v1093, %v1094
    %v1096 = vsel %vm190, %v1090, 0.0
    %v1097 = vadd.f32 %v1095, %v1096
    %v1098 = vrot.slane %v1097, 4
    %v1099 = vadd.f32 %v1097, %v1098
    %v1100 = vrot.slane %v1099, 2
    %v1101 = vadd.f32 %v1099, %v1100
    %v1102 = vrot.slane %v1101, 1
    %v1103 = vadd.f32 %v1101, %v1102
    %v1104 = vmul.f32 %v1103, %v1076
    %v1105 = vadd.f32 %v1104, 1e-05
    %v1106 = vrsqrt.pop %v1105
    %v1107 = vmul.f32 %v1079, %v1106
    %v1108 = vmul.f32 %v1080, %v1106
    %v1109 = vmul.f32 %v1081, %v1106
    %v1110 = vmul.f32 %v1082, %v1106
    %v1111 = vlaneseq
    %v1112 = vshrl.u32 %v1111, 7
    %v1113 = vsub.s32 3, %v1112
    %v1114 = vrot.slane %v389, %v1113
    %v1115 = vmul.f32 %v1107, %v1114
    %v1116 = vmul.f32 %v1108, %v1114
    %v1117 = vmul.f32 %v1109, %v1114
    %v1118 = vmul.f32 %v1110, %v1114
    %v1119 = vlaneseq
    %v1120 = vshrl.u32 %v1119, 7
    %v1121 = vsub.s32 4, %v1120
    %v1122 = vrot.slane %v389, %v1121
    %v1123 = vadd.f32 %v1115, %v1122
    %v1124 = vadd.f32 %v1116, %v1122
    %v1125 = vadd.f32 %v1117, %v1122
    %v1126 = vadd.f32 %v1118, %v1122
    %vm1127 = vcmp.gt.f32.partialorder %v1123, 0.0
    %vm1128 = vcmp.gt.f32.partialorder %v1124, 0.0
    %vm1129 = vcmp.gt.f32.partialorder %v1125, 0.0
    %vm1130 = vcmp.gt.f32.partialorder %v1126, 0.0
    %v1131 = vlaneseq
    %v1132 = vshrl.u32 %v1131, 7
    %v1133 = vsub.s32 5, %v1132
    %v1134 = vrot.slane %v389, %v1133
    %v1135 = vmul.f32 %v1134, %v1123
    %v1136 = vmul.f32 %v1134, %v1124
    %v1137 = vmul.f32 %v1134, %v1125
    %v1138 = vmul.f32 %v1134, %v1126
    %v1139 = vsel %vm1127, %v1123, %v1135
    %v1140 = vsel %vm1128, %v1124, %v1136
    %v1141 = vsel %vm1129, %v1125, %v1137
    %v1142 = vsel %vm1130, %v1126, %v1138
    %v1143 = vmul.f32 %v1139, %v1039
    %v1144 = vmul.f32 %v1140, %v1044
    %v1145 = vmul.f32 %v1141, %v1049
    %v1146 = vmul.f32 %v1142, %v1054
    %v1147 = vlaneseq
    %v1148 = vshrl.u32 %v1147, 7
    %v1149 = vsub.s32 2, %v1148
    %v1150 = vrot.slane %v577, %v1149
    %v1151 = vadd.f32 %v855, %v1150
    %v1152 = vadd.f32 %v858, %v1150
    %v1153 = vadd.f32 %v863, %v1150
    %v1154 = vadd.f32 %v866, %v1150
    %s1155 = scalar_lea.vmem %s5, 64
    %v1156 = vld [vmem:[%s1155] sm:$0xff]
    %v1157 = vld [vmem:[%s1155 + $0x8] sm:$0xff]
    %v1158 = vld [vmem:[%s1155 + $0x10] sm:$0xff]
    %v1159 = vld [vmem:[%s1155 + $0x18] sm:$0xff]
    %v1160 = vsel %vm881, %v1156, 0.0
    %v1161 = vsel %vm881, %v1157, 0.0
    %v1162 = vadd.f32 %v1160, %v1161
    %v1163 = vsel %vm881, %v1158, 0.0
    %v1164 = vadd.f32 %v1162, %v1163
    %v1165 = vsel %vm881, %v1159, 0.0
    %v1166 = vadd.f32 %v1164, %v1165
    %v1167 = vrot.slane %v1166, 4
    %v1168 = vadd.f32 %v1166, %v1167
    %v1169 = vrot.slane %v1168, 2
    %v1170 = vadd.f32 %v1168, %v1169
    %v1171 = vrot.slane %v1170, 1
    %v1172 = vadd.f32 %v1170, %v1171
    %v1173 = vrcp.pop %v1172
    %v1174 = vmul.f32 1.0, %v1173
    %1176 = vset.pattern.permute.xlu0 0
    %1177 = vperm.xlu0 %1176, %v1156
    %v1178 = vpop.permute.xlu0 %1177
    %1181 = vset.pattern.permute.xlu0 0
    %1182 = vperm.xlu0 %1181, %v1157
    %v1183 = vpop.permute.xlu0 %1182
    %1186 = vset.pattern.permute.xlu0 0
    %1187 = vperm.xlu0 %1186, %v1158
    %v1188 = vpop.permute.xlu0 %1187
    %1191 = vset.pattern.permute.xlu0 0
    %1192 = vperm.xlu0 %1191, %v1159
    %v1193 = vpop.permute.xlu0 %1192
    %v1195 = vmul.f32 %v1151, %v1178
    %v1196 = vmul.f32 %v1152, %v1183
    %v1197 = vmul.f32 %v1153, %v1188
    %v1198 = vmul.f32 %v1154, %v1193
    %v1199 = vsel %vm190, %v1195, 0.0
    %v1200 = vsel %vm190, %v1196, 0.0
    %v1201 = vadd.f32 %v1199, %v1200
    %v1202 = vsel %vm190, %v1197, 0.0
    %v1203 = vadd.f32 %v1201, %v1202
    %v1204 = vsel %vm190, %v1198, 0.0
    %v1205 = vadd.f32 %v1203, %v1204
    %v1206 = vrot.slane %v1205, 4
    %v1207 = vadd.f32 %v1205, %v1206
    %v1208 = vrot.slane %v1207, 2
    %v1209 = vadd.f32 %v1207, %v1208
    %v1210 = vrot.slane %v1209, 1
    %v1211 = vadd.f32 %v1209, %v1210
    %1213 = vset.pattern.permute.xlu0 0
    %1214 = vperm.xlu0 %1213, %v1174
    %v1215 = vpop.permute.xlu0 %1214
    %v1217 = vmul.f32 %v1211, %v1215
    %v1218 = vsub.f32 %v1151, %v1217
    %v1219 = vsub.f32 %v1152, %v1217
    %v1220 = vsub.f32 %v1153, %v1217
    %v1221 = vsub.f32 %v1154, %v1217
    %v1222 = vmul.f32 %v1218, %v1218
    %v1223 = vmul.f32 %v1219, %v1219
    %v1224 = vmul.f32 %v1220, %v1220
    %v1225 = vmul.f32 %v1221, %v1221
    %v1226 = vmul.f32 %v1222, %v1178
    %v1227 = vmul.f32 %v1223, %v1183
    %v1228 = vmul.f32 %v1224, %v1188
    %v1229 = vmul.f32 %v1225, %v1193
    %v1230 = vsel %vm190, %v1226, 0.0
    %v1231 = vsel %vm190, %v1227, 0.0
    %v1232 = vadd.f32 %v1230, %v1231
    %v1233 = vsel %vm190, %v1228, 0.0
    %v1234 = vadd.f32 %v1232, %v1233
    %v1235 = vsel %vm190, %v1229, 0.0
    %v1236 = vadd.f32 %v1234, %v1235
    %v1237 = vrot.slane %v1236, 4
    %v1238 = vadd.f32 %v1236, %v1237
    %v1239 = vrot.slane %v1238, 2
    %v1240 = vadd.f32 %v1238, %v1239
    %v1241 = vrot.slane %v1240, 1
    %v1242 = vadd.f32 %v1240, %v1241
    %v1243 = vmul.f32 %v1242, %v1215
    %v1244 = vadd.f32 %v1243, 1e-05
    %v1245 = vrsqrt.pop %v1244
    %v1246 = vmul.f32 %v1218, %v1245
    %v1247 = vmul.f32 %v1219, %v1245
    %v1248 = vmul.f32 %v1220, %v1245
    %v1249 = vmul.f32 %v1221, %v1245
    %v1250 = vlaneseq
    %v1251 = vshrl.u32 %v1250, 7
    %v1252 = vsub.s32 3, %v1251
    %v1253 = vrot.slane %v577, %v1252
    %v1254 = vmul.f32 %v1246, %v1253
    %v1255 = vmul.f32 %v1247, %v1253
    %v1256 = vmul.f32 %v1248, %v1253
    %v1257 = vmul.f32 %v1249, %v1253
    %v1258 = vlaneseq
    %v1259 = vshrl.u32 %v1258, 7
    %v1260 = vsub.s32 4, %v1259
    %v1261 = vrot.slane %v577, %v1260
    %v1262 = vadd.f32 %v1254, %v1261
    %v1263 = vadd.f32 %v1255, %v1261
    %v1264 = vadd.f32 %v1256, %v1261
    %v1265 = vadd.f32 %v1257, %v1261
    %vm1266 = vcmp.gt.f32.partialorder %v1262, 0.0
    %vm1267 = vcmp.gt.f32.partialorder %v1263, 0.0
    %vm1268 = vcmp.gt.f32.partialorder %v1264, 0.0
    %vm1269 = vcmp.gt.f32.partialorder %v1265, 0.0
    %v1270 = vlaneseq
    %v1271 = vshrl.u32 %v1270, 7
    %v1272 = vsub.s32 5, %v1271
    %v1273 = vrot.slane %v577, %v1272
    %v1274 = vmul.f32 %v1273, %v1262
    %v1275 = vmul.f32 %v1273, %v1263
    %v1276 = vmul.f32 %v1273, %v1264
    %v1277 = vmul.f32 %v1273, %v1265
    %v1278 = vsel %vm1266, %v1262, %v1274
    %v1279 = vsel %vm1267, %v1263, %v1275
    %v1280 = vsel %vm1268, %v1264, %v1276
    %v1281 = vsel %vm1269, %v1265, %v1277
    %v1282 = vmul.f32 %v1278, %v1178
    %v1283 = vmul.f32 %v1279, %v1183
    %v1284 = vmul.f32 %v1280, %v1188
    %v1285 = vmul.f32 %v1281, %v1193
    %v1286 = vld [vmem:[%s8] sm:$0xff]
    %v1287 = vld [vmem:[%s8 + $0x8] sm:$0xff]
    %v1288 = vld [vmem:[%s8 + $0x10] sm:$0xff]
    %v1289 = vld [vmem:[%s8 + $0x18] sm:$0xff]
    %v1290 = vld [vmem:[%s7] sm:$0x3f]
    %v1292 = vsel %vm190, %v1290, 0
    %v1295 = vsel %vm190, %v1004, 0
    %v1298 = vsel %vm190, %v1005, 0
    %v1301 = vsel %vm190, %v1006, 0
    %v1304 = vsel %vm190, %v1007, 0
    %1306 = vmatprep.subr.mxu0 0.0
    %1307 = vmatpush1.xpose.msra.mxu0 %v1295
    %1308 = vmatprep.subr.mxu0 0.0
    %1309 = vmatpush1.xpose.msra.mxu0 %v1298
    %1310 = vmatprep.subr.mxu0 0.0
    %1311 = vmatpush1.xpose.msra.mxu0 %v1301
    %1312 = vmatprep.subr.mxu0 0.0
    %1313 = vmatpush1.xpose.msra.mxu0 %v1304
    %1314 = vmatprep.subr.mxu0 0.0
    %1315 = vmatpush1.xpose.msra.mxu0 0.0
    %1316 = vmatprep.subr.mxu0 0.0
    %1317 = vmatpush1.xpose.msra.mxu0 0.0
    %1318 = vmatprep.subr.mxu0 0.0
    %1319 = vmatpush1.xpose.msra.mxu0 0.0
    %1320 = vmatprep.subr.mxu0 0.0
    %1321 = vmatpush1.xpose.msra.mxu0 0.0
    %1322 = vmatprep.subr.mxu0 0.0
    %1323 = vmatpush1.xpose.msra.mxu0 0.0
    %1324 = vmatprep.subr.mxu0 0.0
    %1325 = vmatpush1.xpose.msra.mxu0 0.0
    %1326 = vmatprep.subr.mxu0 0.0
    %1327 = vmatpush1.xpose.msra.mxu0 0.0
    %1328 = vmatprep.subr.mxu0 0.0
    %1329 = vmatpush1.xpose.msra.mxu0 0.0
    %1330 = vmatprep.subr.mxu0 0.0
    %1331 = vmatpush1.xpose.msra.mxu0 0.0
    %1332 = vmatprep.subr.mxu0 0.0
    %1333 = vmatpush1.xpose.msra.mxu0 0.0
    %1334 = vmatprep.subr.mxu0 0.0
    %1335 = vmatpush1.xpose.msra.mxu0 0.0
    %1336 = vmatprep.subr.mxu0 0.0
    %1337 = vmatpush1.xpose.msra.mxu0 0.0
    %1338 = vmatprep.subr.mxu0 0.0
    %1339 = vmatpush1.xpose.msra.mxu0 0.0
    %1340 = vmatprep.subr.mxu0 0.0
    %1341 = vmatpush1.xpose.msra.mxu0 0.0
    %1342 = vmatprep.subr.mxu0 0.0
    %1343 = vmatpush1.xpose.msra.mxu0 0.0
    %1344 = vmatprep.subr.mxu0 0.0
    %1345 = vmatpush1.xpose.msra.mxu0 0.0
    %1346 = vmatprep.subr.mxu0 0.0
    %1347 = vmatpush1.xpose.msra.mxu0 0.0
    %1348 = vmatprep.subr.mxu0 0.0
    %1349 = vmatpush1.xpose.msra.mxu0 0.0
    %1350 = vmatprep.subr.mxu0 0.0
    %1351 = vmatpush1.xpose.msra.mxu0 0.0
    %1352 = vmatprep.subr.mxu0 0.0
    %1353 = vmatpush1.xpose.msra.mxu0 0.0
    %1354 = vmatprep.subr.mxu0 0.0
    %1355 = vmatpush1.xpose.msra.mxu0 0.0
    %1356 = vmatprep.subr.mxu0 0.0
    %1357 = vmatpush1.xpose.msra.mxu0 0.0
    %1358 = vmatprep.subr.mxu0 0.0
    %1359 = vmatpush1.xpose.msra.mxu0 0.0
    %1360 = vmatprep.subr.mxu0 0.0
    %1361 = vmatpush1.xpose.msra.mxu0 0.0
    %1362 = vmatprep.subr.mxu0 0.0
    %1363 = vmatpush1.xpose.msra.mxu0 0.0
    %1364 = vmatprep.subr.mxu0 0.0
    %1365 = vmatpush1.xpose.msra.mxu0 0.0
    %1366 = vmatprep.subr.mxu0 0.0
    %1367 = vmatpush1.xpose.msra.mxu0 0.0
    %1368 = vmatprep.subr.mxu0 0.0
    %1369 = vmatpush1.xpose.msra.mxu0 0.0
    %1370 = vmatprep.mubr.f32.mxu0 0.0
    %1371 = vmatmul.mubr.f32.gmra.mrb[0].mxu0 %v1292
    %v1372 = vpop.f32.mrb[0].mxu0
    %v1373 = vadd.f32 0.0, %v1372
    %v1374 = vpop.f32.mrb[0].mxu0
    %1375 = vdwg.mxu0
    %v1376 = vlaneseq
    %v1377 = vshrl.u32 %v1376, 7
    %v1378 = vsub.s32 1, %v1377
    %v1379 = vrot.slane %v1290, %v1378
    %v1380 = vmul.f32 %v183, %v1379
    %v1381 = vmul.f32 %v184, %v1379
    %v1382 = vmul.f32 %v185, %v1379
    %v1383 = vmul.f32 %v186, %v1379
    %v1384 = vsel %vm190, %v1380, 0.0
    %1385 = vadd.xlane.f32.xlu0 %v1384
    %v1386 = vpop.xlane.xlu0 %1385
    %v1387 = vsel %vm190, %v1381, 0.0
    %1388 = vadd.xlane.f32.xlu0 %v1387
    %v1389 = vpop.xlane.xlu0 %1388
    %v1390 = vsel %vm190, %v1382, 0.0
    %1391 = vadd.xlane.f32.xlu0 %v1390
    %v1392 = vpop.xlane.xlu0 %1391
    %v1393 = vsel %vm190, %v1383, 0.0
    %1394 = vadd.xlane.f32.xlu0 %v1393
    %v1395 = vpop.xlane.xlu0 %1394
    %v1396 = vld [vmem:[%s6] sm:$0xff]
    %v1397 = vld [vmem:[%s6 + $0x8] sm:$0xff]
    %v1398 = vld [vmem:[%s6 + $0x10] sm:$0xff]
    %v1399 = vld [vmem:[%s6 + $0x18] sm:$0xff]
    %s1400 = scalar_lea.vmem %s9, 32
    %v1401 = vld [vmem:[%s1400] sm:$0xff]
    %v1402 = vld [vmem:[%s1400 + $0x8] sm:$0xff]
    %v1403 = vld [vmem:[%s1400 + $0x10] sm:$0xff]
    %v1404 = vld [vmem:[%s1400 + $0x18] sm:$0xff]
    %v1405 = vsub.f32 1.0, %v1401
    %v1406 = vsub.f32 1.0, %v1402
    %v1407 = vsub.f32 1.0, %v1403
    %v1408 = vsub.f32 1.0, %v1404
    %v1409 = vlaneseq
    %v1410 = vshrl.u32 %v1409, 7
    %v1411 = vsub.s32 0, %v1410
    %v1412 = vrot.slane %v1373, %v1411
    %v1413 = vadd.f32 %v1386, %v1412
    %v1414 = vadd.f32 %v1389, %v1412
    %v1415 = vadd.f32 %v1392, %v1412
    %v1416 = vadd.f32 %v1395, %v1412
    %vm1417 = vcmp.gt.f32.partialorder %v1413, 0.0
    %vm1418 = vcmp.gt.f32.partialorder %v1414, 0.0
    %vm1419 = vcmp.gt.f32.partialorder %v1415, 0.0
    %vm1420 = vcmp.gt.f32.partialorder %v1416, 0.0
    %v1421 = vmul.f32 %v1413, 0.01
    %v1422 = vmul.f32 %v1414, 0.01
    %v1423 = vmul.f32 %v1415, 0.01
    %v1424 = vmul.f32 %v1416, 0.01
    %v1425 = vsel %vm1417, %v1413, %v1421
    %v1426 = vsel %vm1418, %v1414, %v1422
    %v1427 = vsel %vm1419, %v1415, %v1423
    %v1428 = vsel %vm1420, %v1416, %v1424
    %v1429 = vadd.f32 %v1425, %v1396
    %v1430 = vadd.f32 %v1426, %v1397
    %v1431 = vadd.f32 %v1427, %v1398
    %v1432 = vadd.f32 %v1428, %v1399
    %v1433 = vsel %vm190, %v1429, -inf
    %1434 = vmax.xlane.f32.xlu0 %v1433
    %v1435 = vpop.xlane.xlu0 %1434
    %v1436 = vsel %vm190, %v1430, -inf
    %1437 = vmax.xlane.f32.xlu0 %v1436
    %v1438 = vpop.xlane.xlu0 %1437
    %v1439 = vsel %vm190, %v1431, -inf
    %1440 = vmax.xlane.f32.xlu0 %v1439
    %v1441 = vpop.xlane.xlu0 %1440
    %v1442 = vsel %vm190, %v1432, -inf
    %1443 = vmax.xlane.f32.xlu0 %v1442
    %v1444 = vpop.xlane.xlu0 %1443
    %v1445 = vsub.f32 %v1429, %v1435
    %v1446 = vsub.f32 %v1430, %v1438
    %v1447 = vsub.f32 %v1431, %v1441
    %v1448 = vsub.f32 %v1432, %v1444
    %v1449 = vmul.f32 %v1445, 1.442695
    %v1450 = vpow.pop %v1449
    %v1451 = vmul.f32 %v1446, 1.442695
    %v1452 = vpow.pop %v1451
    %v1453 = vmul.f32 %v1447, 1.442695
    %v1454 = vpow.pop %v1453
    %v1455 = vmul.f32 %v1448, 1.442695
    %v1456 = vpow.pop %v1455
    %v1457 = vsel %vm190, %v1450, 0.0
    %1458 = vadd.xlane.f32.xlu0 %v1457
    %v1459 = vpop.xlane.xlu0 %1458
    %v1460 = vsel %vm190, %v1452, 0.0
    %1461 = vadd.xlane.f32.xlu0 %v1460
    %v1462 = vpop.xlane.xlu0 %1461
    %v1463 = vsel %vm190, %v1454, 0.0
    %1464 = vadd.xlane.f32.xlu0 %v1463
    %v1465 = vpop.xlane.xlu0 %1464
    %v1466 = vsel %vm190, %v1456, 0.0
    %1467 = vadd.xlane.f32.xlu0 %v1466
    %v1468 = vpop.xlane.xlu0 %1467
    %v1469 = vrcp.pop %v1459
    %v1470 = vrcp.pop %v1462
    %v1471 = vrcp.pop %v1465
    %v1472 = vrcp.pop %v1468
    %v1473 = vmul.f32 %v1450, %v1469
    %v1474 = vmul.f32 %v1452, %v1470
    %v1475 = vmul.f32 %v1454, %v1471
    %v1476 = vmul.f32 %v1456, %v1472
    %v1477 = vmul.f32 %v1386, %v1405
    %v1478 = vmul.f32 %v1389, %v1406
    %v1479 = vmul.f32 %v1392, %v1407
    %v1480 = vmul.f32 %v1395, %v1408
    %1482 = vset.pattern.permute.xlu0 0
    %1483 = vperm.xlu0 %1482, %v1477
    %v1484 = vpop.permute.xlu0 %1483
    %1487 = vset.pattern.permute.xlu0 0
    %1488 = vperm.xlu0 %1487, %v1478
    %v1489 = vpop.permute.xlu0 %1488
    %1492 = vset.pattern.permute.xlu0 0
    %1493 = vperm.xlu0 %1492, %v1479
    %v1494 = vpop.permute.xlu0 %1493
    %1497 = vset.pattern.permute.xlu0 0
    %1498 = vperm.xlu0 %1497, %v1480
    %v1499 = vpop.permute.xlu0 %1498
    %v1501 = vadd.f32 %v1484, %v1412
    %v1502 = vadd.f32 %v1489, %v1412
    %v1503 = vadd.f32 %v1494, %v1412
    %v1504 = vadd.f32 %v1499, %v1412
    %vm1505 = vcmp.gt.f32.partialorder %v1501, 0.0
    %vm1506 = vcmp.gt.f32.partialorder %v1502, 0.0
    %vm1507 = vcmp.gt.f32.partialorder %v1503, 0.0
    %vm1508 = vcmp.gt.f32.partialorder %v1504, 0.0
    %v1509 = vmul.f32 %v1501, 0.01
    %v1510 = vmul.f32 %v1502, 0.01
    %v1511 = vmul.f32 %v1503, 0.01
    %v1512 = vmul.f32 %v1504, 0.01
    %v1513 = vsel %vm1505, %v1501, %v1509
    %v1514 = vsel %vm1506, %v1502, %v1510
    %v1515 = vsel %vm1507, %v1503, %v1511
    %v1516 = vsel %vm1508, %v1504, %v1512
    %v1517 = vadd.f32 %v1513, %v1396
    %v1518 = vadd.f32 %v1514, %v1397
    %v1519 = vadd.f32 %v1515, %v1398
    %v1520 = vadd.f32 %v1516, %v1399
    %v1521 = vsel %vm190, %v1517, -inf
    %1522 = vmax.xlane.f32.xlu0 %v1521
    %v1523 = vpop.xlane.xlu0 %1522
    %v1524 = vsel %vm190, %v1518, -inf
    %1525 = vmax.xlane.f32.xlu0 %v1524
    %v1526 = vpop.xlane.xlu0 %1525
    %v1527 = vsel %vm190, %v1519, -inf
    %1528 = vmax.xlane.f32.xlu0 %v1527
    %v1529 = vpop.xlane.xlu0 %1528
    %v1530 = vsel %vm190, %v1520, -inf
    %1531 = vmax.xlane.f32.xlu0 %v1530
    %v1532 = vpop.xlane.xlu0 %1531
    %v1533 = vsub.f32 %v1517, %v1523
    %v1534 = vsub.f32 %v1518, %v1526
    %v1535 = vsub.f32 %v1519, %v1529
    %v1536 = vsub.f32 %v1520, %v1532
    %v1537 = vmul.f32 %v1533, 1.442695
    %v1538 = vpow.pop %v1537
    %v1539 = vmul.f32 %v1534, 1.442695
    %v1540 = vpow.pop %v1539
    %v1541 = vmul.f32 %v1535, 1.442695
    %v1542 = vpow.pop %v1541
    %v1543 = vmul.f32 %v1536, 1.442695
    %v1544 = vpow.pop %v1543
    %v1545 = vsel %vm190, %v1538, 0.0
    %1546 = vadd.xlane.f32.xlu0 %v1545
    %v1547 = vpop.xlane.xlu0 %1546
    %v1548 = vsel %vm190, %v1540, 0.0
    %1549 = vadd.xlane.f32.xlu0 %v1548
    %v1550 = vpop.xlane.xlu0 %1549
    %v1551 = vsel %vm190, %v1542, 0.0
    %1552 = vadd.xlane.f32.xlu0 %v1551
    %v1553 = vpop.xlane.xlu0 %1552
    %v1554 = vsel %vm190, %v1544, 0.0
    %1555 = vadd.xlane.f32.xlu0 %v1554
    %v1556 = vpop.xlane.xlu0 %1555
    %v1557 = vrcp.pop %v1547
    %v1558 = vrcp.pop %v1550
    %v1559 = vrcp.pop %v1553
    %v1560 = vrcp.pop %v1556
    %v1561 = vmul.f32 %v1538, %v1557
    %v1562 = vmul.f32 %v1540, %v1558
    %v1563 = vmul.f32 %v1542, %v1559
    %v1564 = vmul.f32 %v1544, %v1560
    %v1565 = vpack.c.bf16 %v1474, %v1473
    %v1566 = vpack.c.bf16 %v1476, %v1475
    %v1567 = vpack.c.bf16 %v1562, %v1561
    %v1568 = vpack.c.bf16 %v1564, %v1563
    %v1569 = vpack.c.bf16 %v1005, %v1004
    %v1570 = vpack.c.bf16 %v1007, %v1006
    %v1572 = vsel %vm190, %v1565, 0
    %v1575 = vsel %vm190, %v1566, 0
    %v1578 = vsel %vm190, %v1567, 0
    %v1581 = vsel %vm190, %v1568, 0
    %1583 = vmatprep.subr.bf16.mxu0 0
    %1584 = vmatpush1.bf16.msra.mxu0 %v1569
    %1585 = vmatprep.subr.bf16.mxu0 0
    %1586 = vmatpush1.bf16.msra.mxu0 %v1570
    %1587 = vmatprep.subr.bf16.mxu0 0
    %1588 = vmatpush1.bf16.msra.mxu0 0
    %1589 = vmatprep.subr.bf16.mxu0 0
    %1590 = vmatpush1.bf16.msra.mxu0 0
    %1591 = vmatprep.subr.bf16.mxu0 0
    %1592 = vmatpush1.bf16.msra.mxu0 0
    %1593 = vmatprep.subr.bf16.mxu0 0
    %1594 = vmatpush1.bf16.msra.mxu0 0
    %1595 = vmatprep.subr.bf16.mxu0 0
    %1596 = vmatpush1.bf16.msra.mxu0 0
    %1597 = vmatprep.subr.bf16.mxu0 0
    %1598 = vmatpush1.bf16.msra.mxu0 0
    %1599 = vmatprep.subr.bf16.mxu0 0
    %1600 = vmatpush1.bf16.msra.mxu0 0
    %1601 = vmatprep.subr.bf16.mxu0 0
    %1602 = vmatpush1.bf16.msra.mxu0 0
    %1603 = vmatprep.subr.bf16.mxu0 0
    %1604 = vmatpush1.bf16.msra.mxu0 0
    %1605 = vmatprep.subr.bf16.mxu0 0
    %1606 = vmatpush1.bf16.msra.mxu0 0
    %1607 = vmatprep.subr.bf16.mxu0 0
    %1608 = vmatpush1.bf16.msra.mxu0 0
    %1609 = vmatprep.subr.bf16.mxu0 0
    %1610 = vmatpush1.bf16.msra.mxu0 0
    %1611 = vmatprep.subr.bf16.mxu0 0
    %1612 = vmatpush1.bf16.msra.mxu0 0
    %1613 = vmatprep.subr.bf16.mxu0 0
    %1614 = vmatpush1.bf16.msra.mxu0 0
    %1615 = vmatprep.mubr.bf16.mxu0 0
    %1616 = vmatmul.mubr.bf16.gmra.mrb[0].mxu0 %v1572
    %v1617 = vpop.f32.mrb[0].mxu0
    %v1618 = vadd.f32 0.0, %v1617
    %v1619 = vpop.f32.mrb[0].mxu0
    %v1620 = vpop.f32.mrb[0].mxu0
    %v1621 = vadd.f32 0.0, %v1620
    %v1622 = vpop.f32.mrb[0].mxu0
    %1623 = vmatprep.mubr.bf16.mxu0 0
    %1624 = vmatmul.mubr.bf16.gmra.mrb[0].mxu0 %v1575
    %v1625 = vpop.f32.mrb[0].mxu0
    %v1626 = vadd.f32 0.0, %v1625
    %v1627 = vpop.f32.mrb[0].mxu0
    %v1628 = vpop.f32.mrb[0].mxu0
    %v1629 = vadd.f32 0.0, %v1628
    %v1630 = vpop.f32.mrb[0].mxu0
    %1631 = vmatprep.mubr.bf16.mxu0 0
    %1632 = vmatmul.mubr.bf16.gmra.mrb[0].mxu0 %v1578
    %v1633 = vpop.f32.mrb[0].mxu0
    %v1634 = vadd.f32 0.0, %v1633
    %v1635 = vpop.f32.mrb[0].mxu0
    %v1636 = vpop.f32.mrb[0].mxu0
    %v1637 = vadd.f32 0.0, %v1636
    %v1638 = vpop.f32.mrb[0].mxu0
    %1639 = vmatprep.mubr.bf16.mxu0 0
    %1640 = vmatmul.mubr.bf16.gmra.mrb[0].mxu0 %v1581
    %v1641 = vpop.f32.mrb[0].mxu0
    %v1642 = vadd.f32 0.0, %v1641
    %v1643 = vpop.f32.mrb[0].mxu0
    %v1644 = vpop.f32.mrb[0].mxu0
    %v1645 = vadd.f32 0.0, %v1644
    %v1646 = vpop.f32.mrb[0].mxu0
    %1647 = vdwg.mxu0
    %v1648 = vlaneseq
    %v1649 = vshrl.u32 %v1648, 7
    %v1650 = vsub.s32 2, %v1649
    %v1651 = vrot.slane %v1290, %v1650
    %v1652 = vadd.f32 %v1618, %v1651
    %v1653 = vadd.f32 %v1621, %v1651
    %v1654 = vadd.f32 %v1626, %v1651
    %v1655 = vadd.f32 %v1629, %v1651
    %v1656 = vsel %vm881, %v1286, 0.0
    %v1657 = vsel %vm881, %v1287, 0.0
    %v1658 = vadd.f32 %v1656, %v1657
    %v1659 = vsel %vm881, %v1288, 0.0
    %v1660 = vadd.f32 %v1658, %v1659
    %v1661 = vsel %vm881, %v1289, 0.0
    %v1662 = vadd.f32 %v1660, %v1661
    %v1663 = vrot.slane %v1662, 4
    %v1664 = vadd.f32 %v1662, %v1663
    %v1665 = vrot.slane %v1664, 2
    %v1666 = vadd.f32 %v1664, %v1665
    %v1667 = vrot.slane %v1666, 1
    %v1668 = vadd.f32 %v1666, %v1667
    %v1669 = vrcp.pop %v1668
    %v1670 = vmul.f32 1.0, %v1669
    %1672 = vset.pattern.permute.xlu0 0
    %1673 = vperm.xlu0 %1672, %v1286
    %v1674 = vpop.permute.xlu0 %1673
    %1677 = vset.pattern.permute.xlu0 0
    %1678 = vperm.xlu0 %1677, %v1287
    %v1679 = vpop.permute.xlu0 %1678
    %1682 = vset.pattern.permute.xlu0 0
    %1683 = vperm.xlu0 %1682, %v1288
    %v1684 = vpop.permute.xlu0 %1683
    %1687 = vset.pattern.permute.xlu0 0
    %1688 = vperm.xlu0 %1687, %v1289
    %v1689 = vpop.permute.xlu0 %1688
    %v1691 = vmul.f32 %v1652, %v1674
    %v1692 = vmul.f32 %v1653, %v1679
    %v1693 = vmul.f32 %v1654, %v1684
    %v1694 = vmul.f32 %v1655, %v1689
    %v1695 = vsel %vm190, %v1691, 0.0
    %v1696 = vsel %vm190, %v1692, 0.0
    %v1697 = vadd.f32 %v1695, %v1696
    %v1698 = vsel %vm190, %v1693, 0.0
    %v1699 = vadd.f32 %v1697, %v1698
    %v1700 = vsel %vm190, %v1694, 0.0
    %v1701 = vadd.f32 %v1699, %v1700
    %v1702 = vrot.slane %v1701, 4
    %v1703 = vadd.f32 %v1701, %v1702
    %v1704 = vrot.slane %v1703, 2
    %v1705 = vadd.f32 %v1703, %v1704
    %v1706 = vrot.slane %v1705, 1
    %v1707 = vadd.f32 %v1705, %v1706
    %1709 = vset.pattern.permute.xlu0 0
    %1710 = vperm.xlu0 %1709, %v1670
    %v1711 = vpop.permute.xlu0 %1710
    %v1713 = vmul.f32 %v1707, %v1711
    %v1714 = vsub.f32 %v1652, %v1713
    %v1715 = vsub.f32 %v1653, %v1713
    %v1716 = vsub.f32 %v1654, %v1713
    %v1717 = vsub.f32 %v1655, %v1713
    %v1718 = vmul.f32 %v1714, %v1714
    %v1719 = vmul.f32 %v1715, %v1715
    %v1720 = vmul.f32 %v1716, %v1716
    %v1721 = vmul.f32 %v1717, %v1717
    %v1722 = vmul.f32 %v1718, %v1674
    %v1723 = vmul.f32 %v1719, %v1679
    %v1724 = vmul.f32 %v1720, %v1684
    %v1725 = vmul.f32 %v1721, %v1689
    %v1726 = vsel %vm190, %v1722, 0.0
    %v1727 = vsel %vm190, %v1723, 0.0
    %v1728 = vadd.f32 %v1726, %v1727
    %v1729 = vsel %vm190, %v1724, 0.0
    %v1730 = vadd.f32 %v1728, %v1729
    %v1731 = vsel %vm190, %v1725, 0.0
    %v1732 = vadd.f32 %v1730, %v1731
    %v1733 = vrot.slane %v1732, 4
    %v1734 = vadd.f32 %v1732, %v1733
    %v1735 = vrot.slane %v1734, 2
    %v1736 = vadd.f32 %v1734, %v1735
    %v1737 = vrot.slane %v1736, 1
    %v1738 = vadd.f32 %v1736, %v1737
    %v1739 = vmul.f32 %v1738, %v1711
    %v1740 = vadd.f32 %v1739, 1e-05
    %v1741 = vrsqrt.pop %v1740
    %v1742 = vmul.f32 %v1714, %v1741
    %v1743 = vmul.f32 %v1715, %v1741
    %v1744 = vmul.f32 %v1716, %v1741
    %v1745 = vmul.f32 %v1717, %v1741
    %v1746 = vlaneseq
    %v1747 = vshrl.u32 %v1746, 7
    %v1748 = vsub.s32 3, %v1747
    %v1749 = vrot.slane %v1290, %v1748
    %v1750 = vmul.f32 %v1742, %v1749
    %v1751 = vmul.f32 %v1743, %v1749
    %v1752 = vmul.f32 %v1744, %v1749
    %v1753 = vmul.f32 %v1745, %v1749
    %v1754 = vlaneseq
    %v1755 = vshrl.u32 %v1754, 7
    %v1756 = vsub.s32 4, %v1755
    %v1757 = vrot.slane %v1290, %v1756
    %v1758 = vadd.f32 %v1750, %v1757
    %v1759 = vadd.f32 %v1751, %v1757
    %v1760 = vadd.f32 %v1752, %v1757
    %v1761 = vadd.f32 %v1753, %v1757
    %vm1762 = vcmp.gt.f32.partialorder %v1758, 0.0
    %vm1763 = vcmp.gt.f32.partialorder %v1759, 0.0
    %vm1764 = vcmp.gt.f32.partialorder %v1760, 0.0
    %vm1765 = vcmp.gt.f32.partialorder %v1761, 0.0
    %v1766 = vlaneseq
    %v1767 = vshrl.u32 %v1766, 7
    %v1768 = vsub.s32 5, %v1767
    %v1769 = vrot.slane %v1290, %v1768
    %v1770 = vmul.f32 %v1769, %v1758
    %v1771 = vmul.f32 %v1769, %v1759
    %v1772 = vmul.f32 %v1769, %v1760
    %v1773 = vmul.f32 %v1769, %v1761
    %v1774 = vsel %vm1762, %v1758, %v1770
    %v1775 = vsel %vm1763, %v1759, %v1771
    %v1776 = vsel %vm1764, %v1760, %v1772
    %v1777 = vsel %vm1765, %v1761, %v1773
    %v1778 = vmul.f32 %v1774, %v1674
    %v1779 = vmul.f32 %v1775, %v1679
    %v1780 = vmul.f32 %v1776, %v1684
    %v1781 = vmul.f32 %v1777, %v1689
    %v1782 = vadd.f32 %v1634, %v1651
    %v1783 = vadd.f32 %v1637, %v1651
    %v1784 = vadd.f32 %v1642, %v1651
    %v1785 = vadd.f32 %v1645, %v1651
    %v1786 = vmul.f32 %v1782, %v1674
    %v1787 = vmul.f32 %v1783, %v1679
    %v1788 = vmul.f32 %v1784, %v1684
    %v1789 = vmul.f32 %v1785, %v1689
    %v1790 = vsel %vm190, %v1786, 0.0
    %v1791 = vsel %vm190, %v1787, 0.0
    %v1792 = vadd.f32 %v1790, %v1791
    %v1793 = vsel %vm190, %v1788, 0.0
    %v1794 = vadd.f32 %v1792, %v1793
    %v1795 = vsel %vm190, %v1789, 0.0
    %v1796 = vadd.f32 %v1794, %v1795
    %v1797 = vrot.slane %v1796, 4
    %v1798 = vadd.f32 %v1796, %v1797
    %v1799 = vrot.slane %v1798, 2
    %v1800 = vadd.f32 %v1798, %v1799
    %v1801 = vrot.slane %v1800, 1
    %v1802 = vadd.f32 %v1800, %v1801
    %v1803 = vmul.f32 %v1802, %v1711
    %v1804 = vsub.f32 %v1782, %v1803
    %v1805 = vsub.f32 %v1783, %v1803
    %v1806 = vsub.f32 %v1784, %v1803
    %v1807 = vsub.f32 %v1785, %v1803
    %v1808 = vmul.f32 %v1804, %v1804
    %v1809 = vmul.f32 %v1805, %v1805
    %v1810 = vmul.f32 %v1806, %v1806
    %v1811 = vmul.f32 %v1807, %v1807
    %v1812 = vmul.f32 %v1808, %v1674
    %v1813 = vmul.f32 %v1809, %v1679
    %v1814 = vmul.f32 %v1810, %v1684
    %v1815 = vmul.f32 %v1811, %v1689
    %v1816 = vsel %vm190, %v1812, 0.0
    %v1817 = vsel %vm190, %v1813, 0.0
    %v1818 = vadd.f32 %v1816, %v1817
    %v1819 = vsel %vm190, %v1814, 0.0
    %v1820 = vadd.f32 %v1818, %v1819
    %v1821 = vsel %vm190, %v1815, 0.0
    %v1822 = vadd.f32 %v1820, %v1821
    %v1823 = vrot.slane %v1822, 4
    %v1824 = vadd.f32 %v1822, %v1823
    %v1825 = vrot.slane %v1824, 2
    %v1826 = vadd.f32 %v1824, %v1825
    %v1827 = vrot.slane %v1826, 1
    %v1828 = vadd.f32 %v1826, %v1827
    %v1829 = vmul.f32 %v1828, %v1711
    %v1830 = vadd.f32 %v1829, 1e-05
    %v1831 = vrsqrt.pop %v1830
    %v1832 = vmul.f32 %v1804, %v1831
    %v1833 = vmul.f32 %v1805, %v1831
    %v1834 = vmul.f32 %v1806, %v1831
    %v1835 = vmul.f32 %v1807, %v1831
    %v1836 = vmul.f32 %v1832, %v1749
    %v1837 = vmul.f32 %v1833, %v1749
    %v1838 = vmul.f32 %v1834, %v1749
    %v1839 = vmul.f32 %v1835, %v1749
    %v1840 = vadd.f32 %v1836, %v1757
    %v1841 = vadd.f32 %v1837, %v1757
    %v1842 = vadd.f32 %v1838, %v1757
    %v1843 = vadd.f32 %v1839, %v1757
    %vm1844 = vcmp.gt.f32.partialorder %v1840, 0.0
    %vm1845 = vcmp.gt.f32.partialorder %v1841, 0.0
    %vm1846 = vcmp.gt.f32.partialorder %v1842, 0.0
    %vm1847 = vcmp.gt.f32.partialorder %v1843, 0.0
    %v1848 = vmul.f32 %v1769, %v1840
    %v1849 = vmul.f32 %v1769, %v1841
    %v1850 = vmul.f32 %v1769, %v1842
    %v1851 = vmul.f32 %v1769, %v1843
    %v1852 = vsel %vm1844, %v1840, %v1848
    %v1853 = vsel %vm1845, %v1841, %v1849
    %v1854 = vsel %vm1846, %v1842, %v1850
    %v1855 = vsel %vm1847, %v1843, %v1851
    %v1856 = vmul.f32 %v1852, %v1674
    %v1857 = vmul.f32 %v1853, %v1679
    %v1858 = vmul.f32 %v1854, %v1684
    %v1859 = vmul.f32 %v1855, %v1689
    %s1860 = scalar_lea.vmem %s7, 8
    %v1861 = vld [vmem:[%s1860] sm:$0x3f]
    %v1863 = vsel %vm190, %v1861, 0
    %v1866 = vsel %vm190, %v1143, 0
    %v1869 = vsel %vm190, %v1144, 0
    %v1872 = vsel %vm190, %v1145, 0
    %v1875 = vsel %vm190, %v1146, 0
    %1877 = vmatprep.subr.mxu0 0.0
    %1878 = vmatpush1.xpose.msra.mxu0 %v1866
    %1879 = vmatprep.subr.mxu0 0.0
    %1880 = vmatpush1.xpose.msra.mxu0 %v1869
    %1881 = vmatprep.subr.mxu0 0.0
    %1882 = vmatpush1.xpose.msra.mxu0 %v1872
    %1883 = vmatprep.subr.mxu0 0.0
    %1884 = vmatpush1.xpose.msra.mxu0 %v1875
    %1885 = vmatprep.subr.mxu0 0.0
    %1886 = vmatpush1.xpose.msra.mxu0 0.0
    %1887 = vmatprep.subr.mxu0 0.0
    %1888 = vmatpush1.xpose.msra.mxu0 0.0
    %1889 = vmatprep.subr.mxu0 0.0
    %1890 = vmatpush1.xpose.msra.mxu0 0.0
    %1891 = vmatprep.subr.mxu0 0.0
    %1892 = vmatpush1.xpose.msra.mxu0 0.0
    %1893 = vmatprep.subr.mxu0 0.0
    %1894 = vmatpush1.xpose.msra.mxu0 0.0
    %1895 = vmatprep.subr.mxu0 0.0
    %1896 = vmatpush1.xpose.msra.mxu0 0.0
    %1897 = vmatprep.subr.mxu0 0.0
    %1898 = vmatpush1.xpose.msra.mxu0 0.0
    %1899 = vmatprep.subr.mxu0 0.0
    %1900 = vmatpush1.xpose.msra.mxu0 0.0
    %1901 = vmatprep.subr.mxu0 0.0
    %1902 = vmatpush1.xpose.msra.mxu0 0.0
    %1903 = vmatprep.subr.mxu0 0.0
    %1904 = vmatpush1.xpose.msra.mxu0 0.0
    %1905 = vmatprep.subr.mxu0 0.0
    %1906 = vmatpush1.xpose.msra.mxu0 0.0
    %1907 = vmatprep.subr.mxu0 0.0
    %1908 = vmatpush1.xpose.msra.mxu0 0.0
    %1909 = vmatprep.subr.mxu0 0.0
    %1910 = vmatpush1.xpose.msra.mxu0 0.0
    %1911 = vmatprep.subr.mxu0 0.0
    %1912 = vmatpush1.xpose.msra.mxu0 0.0
    %1913 = vmatprep.subr.mxu0 0.0
    %1914 = vmatpush1.xpose.msra.mxu0 0.0
    %1915 = vmatprep.subr.mxu0 0.0
    %1916 = vmatpush1.xpose.msra.mxu0 0.0
    %1917 = vmatprep.subr.mxu0 0.0
    %1918 = vmatpush1.xpose.msra.mxu0 0.0
    %1919 = vmatprep.subr.mxu0 0.0
    %1920 = vmatpush1.xpose.msra.mxu0 0.0
    %1921 = vmatprep.subr.mxu0 0.0
    %1922 = vmatpush1.xpose.msra.mxu0 0.0
    %1923 = vmatprep.subr.mxu0 0.0
    %1924 = vmatpush1.xpose.msra.mxu0 0.0
    %1925 = vmatprep.subr.mxu0 0.0
    %1926 = vmatpush1.xpose.msra.mxu0 0.0
    %1927 = vmatprep.subr.mxu0 0.0
    %1928 = vmatpush1.xpose.msra.mxu0 0.0
    %1929 = vmatprep.subr.mxu0 0.0
    %1930 = vmatpush1.xpose.msra.mxu0 0.0
    %1931 = vmatprep.subr.mxu0 0.0
    %1932 = vmatpush1.xpose.msra.mxu0 0.0
    %1933 = vmatprep.subr.mxu0 0.0
    %1934 = vmatpush1.xpose.msra.mxu0 0.0
    %1935 = vmatprep.subr.mxu0 0.0
    %1936 = vmatpush1.xpose.msra.mxu0 0.0
    %1937 = vmatprep.subr.mxu0 0.0
    %1938 = vmatpush1.xpose.msra.mxu0 0.0
    %1939 = vmatprep.subr.mxu0 0.0
    %1940 = vmatpush1.xpose.msra.mxu0 0.0
    %1941 = vmatprep.mubr.f32.mxu0 0.0
    %1942 = vmatmul.mubr.f32.gmra.mrb[0].mxu0 %v1863
    %v1943 = vpop.f32.mrb[0].mxu0
    %v1944 = vadd.f32 0.0, %v1943
    %v1945 = vpop.f32.mrb[0].mxu0
    %1946 = vdwg.mxu0
    %v1947 = vlaneseq
    %v1948 = vshrl.u32 %v1947, 7
    %v1949 = vsub.s32 1, %v1948
    %v1950 = vrot.slane %v1861, %v1949
    %v1951 = vmul.f32 %v183, %v1950
    %v1952 = vmul.f32 %v184, %v1950
    %v1953 = vmul.f32 %v185, %v1950
    %v1954 = vmul.f32 %v186, %v1950
    %v1955 = vsel %vm190, %v1951, 0.0
    %1956 = vadd.xlane.f32.xlu0 %v1955
    %v1957 = vpop.xlane.xlu0 %1956
    %v1958 = vsel %vm190, %v1952, 0.0
    %1959 = vadd.xlane.f32.xlu0 %v1958
    %v1960 = vpop.xlane.xlu0 %1959
    %v1961 = vsel %vm190, %v1953, 0.0
    %1962 = vadd.xlane.f32.xlu0 %v1961
    %v1963 = vpop.xlane.xlu0 %1962
    %v1964 = vsel %vm190, %v1954, 0.0
    %1965 = vadd.xlane.f32.xlu0 %v1964
    %v1966 = vpop.xlane.xlu0 %1965
    %s1967 = scalar_lea.vmem %s6, 32
    %v1968 = vld [vmem:[%s1967] sm:$0xff]
    %v1969 = vld [vmem:[%s1967 + $0x8] sm:$0xff]
    %v1970 = vld [vmem:[%s1967 + $0x10] sm:$0xff]
    %v1971 = vld [vmem:[%s1967 + $0x18] sm:$0xff]
    %v1972 = vld [vmem:[%s9] sm:$0xff]
    %v1973 = vld [vmem:[%s9 + $0x8] sm:$0xff]
    %v1974 = vld [vmem:[%s9 + $0x10] sm:$0xff]
    %v1975 = vld [vmem:[%s9 + $0x18] sm:$0xff]
    %v1976 = vsub.f32 1.0, %v1972
    %v1977 = vsub.f32 1.0, %v1973
    %v1978 = vsub.f32 1.0, %v1974
    %v1979 = vsub.f32 1.0, %v1975
    %v1980 = vlaneseq
    %v1981 = vshrl.u32 %v1980, 7
    %v1982 = vsub.s32 0, %v1981
    %v1983 = vrot.slane %v1944, %v1982
    %v1984 = vadd.f32 %v1957, %v1983
    %v1985 = vadd.f32 %v1960, %v1983
    %v1986 = vadd.f32 %v1963, %v1983
    %v1987 = vadd.f32 %v1966, %v1983
    %vm1988 = vcmp.gt.f32.partialorder %v1984, 0.0
    %vm1989 = vcmp.gt.f32.partialorder %v1985, 0.0
    %vm1990 = vcmp.gt.f32.partialorder %v1986, 0.0
    %vm1991 = vcmp.gt.f32.partialorder %v1987, 0.0
    %v1992 = vmul.f32 %v1984, 0.01
    %v1993 = vmul.f32 %v1985, 0.01
    %v1994 = vmul.f32 %v1986, 0.01
    %v1995 = vmul.f32 %v1987, 0.01
    %v1996 = vsel %vm1988, %v1984, %v1992
    %v1997 = vsel %vm1989, %v1985, %v1993
    %v1998 = vsel %vm1990, %v1986, %v1994
    %v1999 = vsel %vm1991, %v1987, %v1995
    %v2000 = vadd.f32 %v1996, %v1968
    %v2001 = vadd.f32 %v1997, %v1969
    %v2002 = vadd.f32 %v1998, %v1970
    %v2003 = vadd.f32 %v1999, %v1971
    %v2004 = vsel %vm190, %v2000, -inf
    %2005 = vmax.xlane.f32.xlu0 %v2004
    %v2006 = vpop.xlane.xlu0 %2005
    %v2007 = vsel %vm190, %v2001, -inf
    %2008 = vmax.xlane.f32.xlu0 %v2007
    %v2009 = vpop.xlane.xlu0 %2008
    %v2010 = vsel %vm190, %v2002, -inf
    %2011 = vmax.xlane.f32.xlu0 %v2010
    %v2012 = vpop.xlane.xlu0 %2011
    %v2013 = vsel %vm190, %v2003, -inf
    %2014 = vmax.xlane.f32.xlu0 %v2013
    %v2015 = vpop.xlane.xlu0 %2014
    %v2016 = vsub.f32 %v2000, %v2006
    %v2017 = vsub.f32 %v2001, %v2009
    %v2018 = vsub.f32 %v2002, %v2012
    %v2019 = vsub.f32 %v2003, %v2015
    %v2020 = vmul.f32 %v2016, 1.442695
    %v2021 = vpow.pop %v2020
    %v2022 = vmul.f32 %v2017, 1.442695
    %v2023 = vpow.pop %v2022
    %v2024 = vmul.f32 %v2018, 1.442695
    %v2025 = vpow.pop %v2024
    %v2026 = vmul.f32 %v2019, 1.442695
    %v2027 = vpow.pop %v2026
    %v2028 = vsel %vm190, %v2021, 0.0
    %2029 = vadd.xlane.f32.xlu0 %v2028
    %v2030 = vpop.xlane.xlu0 %2029
    %v2031 = vsel %vm190, %v2023, 0.0
    %2032 = vadd.xlane.f32.xlu0 %v2031
    %v2033 = vpop.xlane.xlu0 %2032
    %v2034 = vsel %vm190, %v2025, 0.0
    %2035 = vadd.xlane.f32.xlu0 %v2034
    %v2036 = vpop.xlane.xlu0 %2035
    %v2037 = vsel %vm190, %v2027, 0.0
    %2038 = vadd.xlane.f32.xlu0 %v2037
    %v2039 = vpop.xlane.xlu0 %2038
    %v2040 = vrcp.pop %v2030
    %v2041 = vrcp.pop %v2033
    %v2042 = vrcp.pop %v2036
    %v2043 = vrcp.pop %v2039
    %v2044 = vmul.f32 %v2021, %v2040
    %v2045 = vmul.f32 %v2023, %v2041
    %v2046 = vmul.f32 %v2025, %v2042
    %v2047 = vmul.f32 %v2027, %v2043
    %v2048 = vmul.f32 %v1957, %v1976
    %v2049 = vmul.f32 %v1960, %v1977
    %v2050 = vmul.f32 %v1963, %v1978
    %v2051 = vmul.f32 %v1966, %v1979
    %2053 = vset.pattern.permute.xlu0 0
    %2054 = vperm.xlu0 %2053, %v2048
    %v2055 = vpop.permute.xlu0 %2054
    %2058 = vset.pattern.permute.xlu0 0
    %2059 = vperm.xlu0 %2058, %v2049
    %v2060 = vpop.permute.xlu0 %2059
    %2063 = vset.pattern.permute.xlu0 0
    %2064 = vperm.xlu0 %2063, %v2050
    %v2065 = vpop.permute.xlu0 %2064
    %2068 = vset.pattern.permute.xlu0 0
    %2069 = vperm.xlu0 %2068, %v2051
    %v2070 = vpop.permute.xlu0 %2069
    %v2072 = vadd.f32 %v2055, %v1983
    %v2073 = vadd.f32 %v2060, %v1983
    %v2074 = vadd.f32 %v2065, %v1983
    %v2075 = vadd.f32 %v2070, %v1983
    %vm2076 = vcmp.gt.f32.partialorder %v2072, 0.0
    %vm2077 = vcmp.gt.f32.partialorder %v2073, 0.0
    %vm2078 = vcmp.gt.f32.partialorder %v2074, 0.0
    %vm2079 = vcmp.gt.f32.partialorder %v2075, 0.0
    %v2080 = vmul.f32 %v2072, 0.01
    %v2081 = vmul.f32 %v2073, 0.01
    %v2082 = vmul.f32 %v2074, 0.01
    %v2083 = vmul.f32 %v2075, 0.01
    %v2084 = vsel %vm2076, %v2072, %v2080
    %v2085 = vsel %vm2077, %v2073, %v2081
    %v2086 = vsel %vm2078, %v2074, %v2082
    %v2087 = vsel %vm2079, %v2075, %v2083
    %v2088 = vadd.f32 %v2084, %v1968
    %v2089 = vadd.f32 %v2085, %v1969
    %v2090 = vadd.f32 %v2086, %v1970
    %v2091 = vadd.f32 %v2087, %v1971
    %v2092 = vsel %vm190, %v2088, -inf
    %2093 = vmax.xlane.f32.xlu0 %v2092
    %v2094 = vpop.xlane.xlu0 %2093
    %v2095 = vsel %vm190, %v2089, -inf
    %2096 = vmax.xlane.f32.xlu0 %v2095
    %v2097 = vpop.xlane.xlu0 %2096
    %v2098 = vsel %vm190, %v2090, -inf
    %2099 = vmax.xlane.f32.xlu0 %v2098
    %v2100 = vpop.xlane.xlu0 %2099
    %v2101 = vsel %vm190, %v2091, -inf
    %2102 = vmax.xlane.f32.xlu0 %v2101
    %v2103 = vpop.xlane.xlu0 %2102
    %v2104 = vsub.f32 %v2088, %v2094
    %v2105 = vsub.f32 %v2089, %v2097
    %v2106 = vsub.f32 %v2090, %v2100
    %v2107 = vsub.f32 %v2091, %v2103
    %v2108 = vmul.f32 %v2104, 1.442695
    %v2109 = vpow.pop %v2108
    %v2110 = vmul.f32 %v2105, 1.442695
    %v2111 = vpow.pop %v2110
    %v2112 = vmul.f32 %v2106, 1.442695
    %v2113 = vpow.pop %v2112
    %v2114 = vmul.f32 %v2107, 1.442695
    %v2115 = vpow.pop %v2114
    %v2116 = vsel %vm190, %v2109, 0.0
    %2117 = vadd.xlane.f32.xlu0 %v2116
    %v2118 = vpop.xlane.xlu0 %2117
    %v2119 = vsel %vm190, %v2111, 0.0
    %2120 = vadd.xlane.f32.xlu0 %v2119
    %v2121 = vpop.xlane.xlu0 %2120
    %v2122 = vsel %vm190, %v2113, 0.0
    %2123 = vadd.xlane.f32.xlu0 %v2122
    %v2124 = vpop.xlane.xlu0 %2123
    %v2125 = vsel %vm190, %v2115, 0.0
    %2126 = vadd.xlane.f32.xlu0 %v2125
    %v2127 = vpop.xlane.xlu0 %2126
    %v2128 = vrcp.pop %v2118
    %v2129 = vrcp.pop %v2121
    %v2130 = vrcp.pop %v2124
    %v2131 = vrcp.pop %v2127
    %v2132 = vmul.f32 %v2109, %v2128
    %v2133 = vmul.f32 %v2111, %v2129
    %v2134 = vmul.f32 %v2113, %v2130
    %v2135 = vmul.f32 %v2115, %v2131
    %v2136 = vpack.c.bf16 %v2045, %v2044
    %v2137 = vpack.c.bf16 %v2047, %v2046
    %v2138 = vpack.c.bf16 %v2133, %v2132
    %v2139 = vpack.c.bf16 %v2135, %v2134
    %v2140 = vpack.c.bf16 %v1144, %v1143
    %v2141 = vpack.c.bf16 %v1146, %v1145
    %v2143 = vsel %vm190, %v2136, 0
    %v2146 = vsel %vm190, %v2137, 0
    %v2149 = vsel %vm190, %v2138, 0
    %v2152 = vsel %vm190, %v2139, 0
    %2154 = vmatprep.subr.bf16.mxu0 0
    %2155 = vmatpush1.bf16.msra.mxu0 %v2140
    %2156 = vmatprep.subr.bf16.mxu0 0
    %2157 = vmatpush1.bf16.msra.mxu0 %v2141
    %2158 = vmatprep.subr.bf16.mxu0 0
    %2159 = vmatpush1.bf16.msra.mxu0 0
    %2160 = vmatprep.subr.bf16.mxu0 0
    %2161 = vmatpush1.bf16.msra.mxu0 0
    %2162 = vmatprep.subr.bf16.mxu0 0
    %2163 = vmatpush1.bf16.msra.mxu0 0
    %2164 = vmatprep.subr.bf16.mxu0 0
    %2165 = vmatpush1.bf16.msra.mxu0 0
    %2166 = vmatprep.subr.bf16.mxu0 0
    %2167 = vmatpush1.bf16.msra.mxu0 0
    %2168 = vmatprep.subr.bf16.mxu0 0
    %2169 = vmatpush1.bf16.msra.mxu0 0
    %2170 = vmatprep.subr.bf16.mxu0 0
    %2171 = vmatpush1.bf16.msra.mxu0 0
    %2172 = vmatprep.subr.bf16.mxu0 0
    %2173 = vmatpush1.bf16.msra.mxu0 0
    %2174 = vmatprep.subr.bf16.mxu0 0
    %2175 = vmatpush1.bf16.msra.mxu0 0
    %2176 = vmatprep.subr.bf16.mxu0 0
    %2177 = vmatpush1.bf16.msra.mxu0 0
    %2178 = vmatprep.subr.bf16.mxu0 0
    %2179 = vmatpush1.bf16.msra.mxu0 0
    %2180 = vmatprep.subr.bf16.mxu0 0
    %2181 = vmatpush1.bf16.msra.mxu0 0
    %2182 = vmatprep.subr.bf16.mxu0 0
    %2183 = vmatpush1.bf16.msra.mxu0 0
    %2184 = vmatprep.subr.bf16.mxu0 0
    %2185 = vmatpush1.bf16.msra.mxu0 0
    %2186 = vmatprep.mubr.bf16.mxu0 0
    %2187 = vmatmul.mubr.bf16.gmra.mrb[0].mxu0 %v2143
    %v2188 = vpop.f32.mrb[0].mxu0
    %v2189 = vadd.f32 0.0, %v2188
    %v2190 = vpop.f32.mrb[0].mxu0
    %v2191 = vpop.f32.mrb[0].mxu0
    %v2192 = vadd.f32 0.0, %v2191
    %v2193 = vpop.f32.mrb[0].mxu0
    %2194 = vmatprep.mubr.bf16.mxu0 0
    %2195 = vmatmul.mubr.bf16.gmra.mrb[0].mxu0 %v2146
    %v2196 = vpop.f32.mrb[0].mxu0
    %v2197 = vadd.f32 0.0, %v2196
    %v2198 = vpop.f32.mrb[0].mxu0
    %v2199 = vpop.f32.mrb[0].mxu0
    %v2200 = vadd.f32 0.0, %v2199
    %v2201 = vpop.f32.mrb[0].mxu0
    %2202 = vmatprep.mubr.bf16.mxu0 0
    %2203 = vmatmul.mubr.bf16.gmra.mrb[0].mxu0 %v2149
    %v2204 = vpop.f32.mrb[0].mxu0
    %v2205 = vadd.f32 0.0, %v2204
    %v2206 = vpop.f32.mrb[0].mxu0
    %v2207 = vpop.f32.mrb[0].mxu0
    %v2208 = vadd.f32 0.0, %v2207
    %v2209 = vpop.f32.mrb[0].mxu0
    %2210 = vmatprep.mubr.bf16.mxu0 0
    %2211 = vmatmul.mubr.bf16.gmra.mrb[0].mxu0 %v2152
    %v2212 = vpop.f32.mrb[0].mxu0
    %v2213 = vadd.f32 0.0, %v2212
    %v2214 = vpop.f32.mrb[0].mxu0
    %v2215 = vpop.f32.mrb[0].mxu0
    %v2216 = vadd.f32 0.0, %v2215
    %v2217 = vpop.f32.mrb[0].mxu0
    %2218 = vdwg.mxu0
    %v2219 = vlaneseq
    %v2220 = vshrl.u32 %v2219, 7
    %v2221 = vsub.s32 2, %v2220
    %v2222 = vrot.slane %v1861, %v2221
    %v2223 = vadd.f32 %v2189, %v2222
    %v2224 = vadd.f32 %v2192, %v2222
    %v2225 = vadd.f32 %v2197, %v2222
    %v2226 = vadd.f32 %v2200, %v2222
    %v2227 = vmul.f32 %v2223, %v1674
    %v2228 = vmul.f32 %v2224, %v1679
    %v2229 = vmul.f32 %v2225, %v1684
    %v2230 = vmul.f32 %v2226, %v1689
    %v2231 = vsel %vm190, %v2227, 0.0
    %v2232 = vsel %vm190, %v2228, 0.0
    %v2233 = vadd.f32 %v2231, %v2232
    %v2234 = vsel %vm190, %v2229, 0.0
    %v2235 = vadd.f32 %v2233, %v2234
    %v2236 = vsel %vm190, %v2230, 0.0
    %v2237 = vadd.f32 %v2235, %v2236
    %v2238 = vrot.slane %v2237, 4
    %v2239 = vadd.f32 %v2237, %v2238
    %v2240 = vrot.slane %v2239, 2
    %v2241 = vadd.f32 %v2239, %v2240
    %v2242 = vrot.slane %v2241, 1
    %v2243 = vadd.f32 %v2241, %v2242
    %v2244 = vmul.f32 %v2243, %v1711
    %v2245 = vsub.f32 %v2223, %v2244
    %v2246 = vsub.f32 %v2224, %v2244
    %v2247 = vsub.f32 %v2225, %v2244
    %v2248 = vsub.f32 %v2226, %v2244
    %v2249 = vmul.f32 %v2245, %v2245
    %v2250 = vmul.f32 %v2246, %v2246
    %v2251 = vmul.f32 %v2247, %v2247
    %v2252 = vmul.f32 %v2248, %v2248
    %v2253 = vmul.f32 %v2249, %v1674
    %v2254 = vmul.f32 %v2250, %v1679
    %v2255 = vmul.f32 %v2251, %v1684
    %v2256 = vmul.f32 %v2252, %v1689
    %v2257 = vsel %vm190, %v2253, 0.0
    %v2258 = vsel %vm190, %v2254, 0.0
    %v2259 = vadd.f32 %v2257, %v2258
    %v2260 = vsel %vm190, %v2255, 0.0
    %v2261 = vadd.f32 %v2259, %v2260
    %v2262 = vsel %vm190, %v2256, 0.0
    %v2263 = vadd.f32 %v2261, %v2262
    %v2264 = vrot.slane %v2263, 4
    %v2265 = vadd.f32 %v2263, %v2264
    %v2266 = vrot.slane %v2265, 2
    %v2267 = vadd.f32 %v2265, %v2266
    %v2268 = vrot.slane %v2267, 1
    %v2269 = vadd.f32 %v2267, %v2268
    %v2270 = vmul.f32 %v2269, %v1711
    %v2271 = vadd.f32 %v2270, 1e-05
    %v2272 = vrsqrt.pop %v2271
    %v2273 = vmul.f32 %v2245, %v2272
    %v2274 = vmul.f32 %v2246, %v2272
    %v2275 = vmul.f32 %v2247, %v2272
    %v2276 = vmul.f32 %v2248, %v2272
    %v2277 = vlaneseq
    %v2278 = vshrl.u32 %v2277, 7
    %v2279 = vsub.s32 3, %v2278
    %v2280 = vrot.slane %v1861, %v2279
    %v2281 = vmul.f32 %v2273, %v2280
    %v2282 = vmul.f32 %v2274, %v2280
    %v2283 = vmul.f32 %v2275, %v2280
    %v2284 = vmul.f32 %v2276, %v2280
    %v2285 = vlaneseq
    %v2286 = vshrl.u32 %v2285, 7
    %v2287 = vsub.s32 4, %v2286
    %v2288 = vrot.slane %v1861, %v2287
    %v2289 = vadd.f32 %v2281, %v2288
    %v2290 = vadd.f32 %v2282, %v2288
    %v2291 = vadd.f32 %v2283, %v2288
    %v2292 = vadd.f32 %v2284, %v2288
    %vm2293 = vcmp.gt.f32.partialorder %v2289, 0.0
    %vm2294 = vcmp.gt.f32.partialorder %v2290, 0.0
    %vm2295 = vcmp.gt.f32.partialorder %v2291, 0.0
    %vm2296 = vcmp.gt.f32.partialorder %v2292, 0.0
    %v2297 = vlaneseq
    %v2298 = vshrl.u32 %v2297, 7
    %v2299 = vsub.s32 5, %v2298
    %v2300 = vrot.slane %v1861, %v2299
    %v2301 = vmul.f32 %v2300, %v2289
    %v2302 = vmul.f32 %v2300, %v2290
    %v2303 = vmul.f32 %v2300, %v2291
    %v2304 = vmul.f32 %v2300, %v2292
    %v2305 = vsel %vm2293, %v2289, %v2301
    %v2306 = vsel %vm2294, %v2290, %v2302
    %v2307 = vsel %vm2295, %v2291, %v2303
    %v2308 = vsel %vm2296, %v2292, %v2304
    %v2309 = vmul.f32 %v2305, %v1674
    %v2310 = vmul.f32 %v2306, %v1679
    %v2311 = vmul.f32 %v2307, %v1684
    %v2312 = vmul.f32 %v2308, %v1689
    %v2313 = vadd.f32 %v2205, %v2222
    %v2314 = vadd.f32 %v2208, %v2222
    %v2315 = vadd.f32 %v2213, %v2222
    %v2316 = vadd.f32 %v2216, %v2222
    %v2317 = vmul.f32 %v2313, %v1674
    %v2318 = vmul.f32 %v2314, %v1679
    %v2319 = vmul.f32 %v2315, %v1684
    %v2320 = vmul.f32 %v2316, %v1689
    %v2321 = vsel %vm190, %v2317, 0.0
    %v2322 = vsel %vm190, %v2318, 0.0
    %v2323 = vadd.f32 %v2321, %v2322
    %v2324 = vsel %vm190, %v2319, 0.0
    %v2325 = vadd.f32 %v2323, %v2324
    %v2326 = vsel %vm190, %v2320, 0.0
    %v2327 = vadd.f32 %v2325, %v2326
    %v2328 = vrot.slane %v2327, 4
    %v2329 = vadd.f32 %v2327, %v2328
    %v2330 = vrot.slane %v2329, 2
    %v2331 = vadd.f32 %v2329, %v2330
    %v2332 = vrot.slane %v2331, 1
    %v2333 = vadd.f32 %v2331, %v2332
    %v2334 = vmul.f32 %v2333, %v1711
    %v2335 = vsub.f32 %v2313, %v2334
    %v2336 = vsub.f32 %v2314, %v2334
    %v2337 = vsub.f32 %v2315, %v2334
    %v2338 = vsub.f32 %v2316, %v2334
    %v2339 = vmul.f32 %v2335, %v2335
    %v2340 = vmul.f32 %v2336, %v2336
    %v2341 = vmul.f32 %v2337, %v2337
    %v2342 = vmul.f32 %v2338, %v2338
    %v2343 = vmul.f32 %v2339, %v1674
    %v2344 = vmul.f32 %v2340, %v1679
    %v2345 = vmul.f32 %v2341, %v1684
    %v2346 = vmul.f32 %v2342, %v1689
    %v2347 = vsel %vm190, %v2343, 0.0
    %v2348 = vsel %vm190, %v2344, 0.0
    %v2349 = vadd.f32 %v2347, %v2348
    %v2350 = vsel %vm190, %v2345, 0.0
    %v2351 = vadd.f32 %v2349, %v2350
    %v2352 = vsel %vm190, %v2346, 0.0
    %v2353 = vadd.f32 %v2351, %v2352
    %v2354 = vrot.slane %v2353, 4
    %v2355 = vadd.f32 %v2353, %v2354
    %v2356 = vrot.slane %v2355, 2
    %v2357 = vadd.f32 %v2355, %v2356
    %v2358 = vrot.slane %v2357, 1
    %v2359 = vadd.f32 %v2357, %v2358
    %v2360 = vmul.f32 %v2359, %v1711
    %v2361 = vadd.f32 %v2360, 1e-05
    %v2362 = vrsqrt.pop %v2361
    %v2363 = vmul.f32 %v2335, %v2362
    %v2364 = vmul.f32 %v2336, %v2362
    %v2365 = vmul.f32 %v2337, %v2362
    %v2366 = vmul.f32 %v2338, %v2362
    %v2367 = vmul.f32 %v2363, %v2280
    %v2368 = vmul.f32 %v2364, %v2280
    %v2369 = vmul.f32 %v2365, %v2280
    %v2370 = vmul.f32 %v2366, %v2280
    %v2371 = vadd.f32 %v2367, %v2288
    %v2372 = vadd.f32 %v2368, %v2288
    %v2373 = vadd.f32 %v2369, %v2288
    %v2374 = vadd.f32 %v2370, %v2288
    %vm2375 = vcmp.gt.f32.partialorder %v2371, 0.0
    %vm2376 = vcmp.gt.f32.partialorder %v2372, 0.0
    %vm2377 = vcmp.gt.f32.partialorder %v2373, 0.0
    %vm2378 = vcmp.gt.f32.partialorder %v2374, 0.0
    %v2379 = vmul.f32 %v2300, %v2371
    %v2380 = vmul.f32 %v2300, %v2372
    %v2381 = vmul.f32 %v2300, %v2373
    %v2382 = vmul.f32 %v2300, %v2374
    %v2383 = vsel %vm2375, %v2371, %v2379
    %v2384 = vsel %vm2376, %v2372, %v2380
    %v2385 = vsel %vm2377, %v2373, %v2381
    %v2386 = vsel %vm2378, %v2374, %v2382
    %v2387 = vmul.f32 %v2383, %v1674
    %v2388 = vmul.f32 %v2384, %v1679
    %v2389 = vmul.f32 %v2385, %v1684
    %v2390 = vmul.f32 %v2386, %v1689
    %s2391 = scalar_lea.vmem %s7, 16
    %v2392 = vld [vmem:[%s2391] sm:$0x3f]
    %v2394 = vsel %vm190, %v2392, 0
    %v2397 = vsel %vm190, %v1282, 0
    %v2400 = vsel %vm190, %v1283, 0
    %v2403 = vsel %vm190, %v1284, 0
    %v2406 = vsel %vm190, %v1285, 0
    %2408 = vmatprep.subr.mxu0 0.0
    %2409 = vmatpush1.xpose.msra.mxu0 %v2397
    %2410 = vmatprep.subr.mxu0 0.0
    %2411 = vmatpush1.xpose.msra.mxu0 %v2400
    %2412 = vmatprep.subr.mxu0 0.0
    %2413 = vmatpush1.xpose.msra.mxu0 %v2403
    %2414 = vmatprep.subr.mxu0 0.0
    %2415 = vmatpush1.xpose.msra.mxu0 %v2406
    %2416 = vmatprep.subr.mxu0 0.0
    %2417 = vmatpush1.xpose.msra.mxu0 0.0
    %2418 = vmatprep.subr.mxu0 0.0
    %2419 = vmatpush1.xpose.msra.mxu0 0.0
    %2420 = vmatprep.subr.mxu0 0.0
    %2421 = vmatpush1.xpose.msra.mxu0 0.0
    %2422 = vmatprep.subr.mxu0 0.0
    %2423 = vmatpush1.xpose.msra.mxu0 0.0
    %2424 = vmatprep.subr.mxu0 0.0
    %2425 = vmatpush1.xpose.msra.mxu0 0.0
    %2426 = vmatprep.subr.mxu0 0.0
    %2427 = vmatpush1.xpose.msra.mxu0 0.0
    %2428 = vmatprep.subr.mxu0 0.0
    %2429 = vmatpush1.xpose.msra.mxu0 0.0
    %2430 = vmatprep.subr.mxu0 0.0
    %2431 = vmatpush1.xpose.msra.mxu0 0.0
    %2432 = vmatprep.subr.mxu0 0.0
    %2433 = vmatpush1.xpose.msra.mxu0 0.0
    %2434 = vmatprep.subr.mxu0 0.0
    %2435 = vmatpush1.xpose.msra.mxu0 0.0
    %2436 = vmatprep.subr.mxu0 0.0
    %2437 = vmatpush1.xpose.msra.mxu0 0.0
    %2438 = vmatprep.subr.mxu0 0.0
    %2439 = vmatpush1.xpose.msra.mxu0 0.0
    %2440 = vmatprep.subr.mxu0 0.0
    %2441 = vmatpush1.xpose.msra.mxu0 0.0
    %2442 = vmatprep.subr.mxu0 0.0
    %2443 = vmatpush1.xpose.msra.mxu0 0.0
    %2444 = vmatprep.subr.mxu0 0.0
    %2445 = vmatpush1.xpose.msra.mxu0 0.0
    %2446 = vmatprep.subr.mxu0 0.0
    %2447 = vmatpush1.xpose.msra.mxu0 0.0
    %2448 = vmatprep.subr.mxu0 0.0
    %2449 = vmatpush1.xpose.msra.mxu0 0.0
    %2450 = vmatprep.subr.mxu0 0.0
    %2451 = vmatpush1.xpose.msra.mxu0 0.0
    %2452 = vmatprep.subr.mxu0 0.0
    %2453 = vmatpush1.xpose.msra.mxu0 0.0
    %2454 = vmatprep.subr.mxu0 0.0
    %2455 = vmatpush1.xpose.msra.mxu0 0.0
    %2456 = vmatprep.subr.mxu0 0.0
    %2457 = vmatpush1.xpose.msra.mxu0 0.0
    %2458 = vmatprep.subr.mxu0 0.0
    %2459 = vmatpush1.xpose.msra.mxu0 0.0
    %2460 = vmatprep.subr.mxu0 0.0
    %2461 = vmatpush1.xpose.msra.mxu0 0.0
    %2462 = vmatprep.subr.mxu0 0.0
    %2463 = vmatpush1.xpose.msra.mxu0 0.0
    %2464 = vmatprep.subr.mxu0 0.0
    %2465 = vmatpush1.xpose.msra.mxu0 0.0
    %2466 = vmatprep.subr.mxu0 0.0
    %2467 = vmatpush1.xpose.msra.mxu0 0.0
    %2468 = vmatprep.subr.mxu0 0.0
    %2469 = vmatpush1.xpose.msra.mxu0 0.0
    %2470 = vmatprep.subr.mxu0 0.0
    %2471 = vmatpush1.xpose.msra.mxu0 0.0
    %2472 = vmatprep.mubr.f32.mxu0 0.0
    %2473 = vmatmul.mubr.f32.gmra.mrb[0].mxu0 %v2394
    %v2474 = vpop.f32.mrb[0].mxu0
    %v2475 = vadd.f32 0.0, %v2474
    %v2476 = vpop.f32.mrb[0].mxu0
    %2477 = vdwg.mxu0
    %v2478 = vlaneseq
    %v2479 = vshrl.u32 %v2478, 7
    %v2480 = vsub.s32 1, %v2479
    %v2481 = vrot.slane %v2392, %v2480
    %v2482 = vmul.f32 %v183, %v2481
    %v2483 = vmul.f32 %v184, %v2481
    %v2484 = vmul.f32 %v185, %v2481
    %v2485 = vmul.f32 %v186, %v2481
    %v2486 = vsel %vm190, %v2482, 0.0
    %2487 = vadd.xlane.f32.xlu0 %v2486
    %v2488 = vpop.xlane.xlu0 %2487
    %v2489 = vsel %vm190, %v2483, 0.0
    %2490 = vadd.xlane.f32.xlu0 %v2489
    %v2491 = vpop.xlane.xlu0 %2490
    %v2492 = vsel %vm190, %v2484, 0.0
    %2493 = vadd.xlane.f32.xlu0 %v2492
    %v2494 = vpop.xlane.xlu0 %2493
    %v2495 = vsel %vm190, %v2485, 0.0
    %2496 = vadd.xlane.f32.xlu0 %v2495
    %v2497 = vpop.xlane.xlu0 %2496
    %s2498 = scalar_lea.vmem %s6, 64
    %v2499 = vld [vmem:[%s2498] sm:$0xff]
    %v2500 = vld [vmem:[%s2498 + $0x8] sm:$0xff]
    %v2501 = vld [vmem:[%s2498 + $0x10] sm:$0xff]
    %v2502 = vld [vmem:[%s2498 + $0x18] sm:$0xff]
    %s2503 = scalar_lea.vmem %s9, 64
    %v2504 = vld [vmem:[%s2503] sm:$0xff]
    %v2505 = vld [vmem:[%s2503 + $0x8] sm:$0xff]
    %v2506 = vld [vmem:[%s2503 + $0x10] sm:$0xff]
    %v2507 = vld [vmem:[%s2503 + $0x18] sm:$0xff]
    %v2508 = vsub.f32 1.0, %v2504
    %v2509 = vsub.f32 1.0, %v2505
    %v2510 = vsub.f32 1.0, %v2506
    %v2511 = vsub.f32 1.0, %v2507
    %v2512 = vlaneseq
    %v2513 = vshrl.u32 %v2512, 7
    %v2514 = vsub.s32 0, %v2513
    %v2515 = vrot.slane %v2475, %v2514
    %v2516 = vadd.f32 %v2488, %v2515
    %v2517 = vadd.f32 %v2491, %v2515
    %v2518 = vadd.f32 %v2494, %v2515
    %v2519 = vadd.f32 %v2497, %v2515
    %vm2520 = vcmp.gt.f32.partialorder %v2516, 0.0
    %vm2521 = vcmp.gt.f32.partialorder %v2517, 0.0
    %vm2522 = vcmp.gt.f32.partialorder %v2518, 0.0
    %vm2523 = vcmp.gt.f32.partialorder %v2519, 0.0
    %v2524 = vmul.f32 %v2516, 0.01
    %v2525 = vmul.f32 %v2517, 0.01
    %v2526 = vmul.f32 %v2518, 0.01
    %v2527 = vmul.f32 %v2519, 0.01
    %v2528 = vsel %vm2520, %v2516, %v2524
    %v2529 = vsel %vm2521, %v2517, %v2525
    %v2530 = vsel %vm2522, %v2518, %v2526
    %v2531 = vsel %vm2523, %v2519, %v2527
    %v2532 = vadd.f32 %v2528, %v2499
    %v2533 = vadd.f32 %v2529, %v2500
    %v2534 = vadd.f32 %v2530, %v2501
    %v2535 = vadd.f32 %v2531, %v2502
    %v2536 = vsel %vm190, %v2532, -inf
    %2537 = vmax.xlane.f32.xlu0 %v2536
    %v2538 = vpop.xlane.xlu0 %2537
    %v2539 = vsel %vm190, %v2533, -inf
    %2540 = vmax.xlane.f32.xlu0 %v2539
    %v2541 = vpop.xlane.xlu0 %2540
    %v2542 = vsel %vm190, %v2534, -inf
    %2543 = vmax.xlane.f32.xlu0 %v2542
    %v2544 = vpop.xlane.xlu0 %2543
    %v2545 = vsel %vm190, %v2535, -inf
    %2546 = vmax.xlane.f32.xlu0 %v2545
    %v2547 = vpop.xlane.xlu0 %2546
    %v2548 = vsub.f32 %v2532, %v2538
    %v2549 = vsub.f32 %v2533, %v2541
    %v2550 = vsub.f32 %v2534, %v2544
    %v2551 = vsub.f32 %v2535, %v2547
    %v2552 = vmul.f32 %v2548, 1.442695
    %v2553 = vpow.pop %v2552
    %v2554 = vmul.f32 %v2549, 1.442695
    %v2555 = vpow.pop %v2554
    %v2556 = vmul.f32 %v2550, 1.442695
    %v2557 = vpow.pop %v2556
    %v2558 = vmul.f32 %v2551, 1.442695
    %v2559 = vpow.pop %v2558
    %v2560 = vsel %vm190, %v2553, 0.0
    %2561 = vadd.xlane.f32.xlu0 %v2560
    %v2562 = vpop.xlane.xlu0 %2561
    %v2563 = vsel %vm190, %v2555, 0.0
    %2564 = vadd.xlane.f32.xlu0 %v2563
    %v2565 = vpop.xlane.xlu0 %2564
    %v2566 = vsel %vm190, %v2557, 0.0
    %2567 = vadd.xlane.f32.xlu0 %v2566
    %v2568 = vpop.xlane.xlu0 %2567
    %v2569 = vsel %vm190, %v2559, 0.0
    %2570 = vadd.xlane.f32.xlu0 %v2569
    %v2571 = vpop.xlane.xlu0 %2570
    %v2572 = vrcp.pop %v2562
    %v2573 = vrcp.pop %v2565
    %v2574 = vrcp.pop %v2568
    %v2575 = vrcp.pop %v2571
    %v2576 = vmul.f32 %v2553, %v2572
    %v2577 = vmul.f32 %v2555, %v2573
    %v2578 = vmul.f32 %v2557, %v2574
    %v2579 = vmul.f32 %v2559, %v2575
    %v2580 = vmul.f32 %v2488, %v2508
    %v2581 = vmul.f32 %v2491, %v2509
    %v2582 = vmul.f32 %v2494, %v2510
    %v2583 = vmul.f32 %v2497, %v2511
    %2585 = vset.pattern.permute.xlu0 0
    %2586 = vperm.xlu0 %2585, %v2580
    %v2587 = vpop.permute.xlu0 %2586
    %2590 = vset.pattern.permute.xlu0 0
    %2591 = vperm.xlu0 %2590, %v2581
    %v2592 = vpop.permute.xlu0 %2591
    %2595 = vset.pattern.permute.xlu0 0
    %2596 = vperm.xlu0 %2595, %v2582
    %v2597 = vpop.permute.xlu0 %2596
    %2600 = vset.pattern.permute.xlu0 0
    %2601 = vperm.xlu0 %2600, %v2583
    %v2602 = vpop.permute.xlu0 %2601
    %v2604 = vadd.f32 %v2587, %v2515
    %v2605 = vadd.f32 %v2592, %v2515
    %v2606 = vadd.f32 %v2597, %v2515
    %v2607 = vadd.f32 %v2602, %v2515
    %vm2608 = vcmp.gt.f32.partialorder %v2604, 0.0
    %vm2609 = vcmp.gt.f32.partialorder %v2605, 0.0
    %vm2610 = vcmp.gt.f32.partialorder %v2606, 0.0
    %vm2611 = vcmp.gt.f32.partialorder %v2607, 0.0
    %v2612 = vmul.f32 %v2604, 0.01
    %v2613 = vmul.f32 %v2605, 0.01
    %v2614 = vmul.f32 %v2606, 0.01
    %v2615 = vmul.f32 %v2607, 0.01
    %v2616 = vsel %vm2608, %v2604, %v2612
    %v2617 = vsel %vm2609, %v2605, %v2613
    %v2618 = vsel %vm2610, %v2606, %v2614
    %v2619 = vsel %vm2611, %v2607, %v2615
    %v2620 = vadd.f32 %v2616, %v2499
    %v2621 = vadd.f32 %v2617, %v2500
    %v2622 = vadd.f32 %v2618, %v2501
    %v2623 = vadd.f32 %v2619, %v2502
    %v2624 = vsel %vm190, %v2620, -inf
    %2625 = vmax.xlane.f32.xlu0 %v2624
    %v2626 = vpop.xlane.xlu0 %2625
    %v2627 = vsel %vm190, %v2621, -inf
    %2628 = vmax.xlane.f32.xlu0 %v2627
    %v2629 = vpop.xlane.xlu0 %2628
    %v2630 = vsel %vm190, %v2622, -inf
    %2631 = vmax.xlane.f32.xlu0 %v2630
    %v2632 = vpop.xlane.xlu0 %2631
    %v2633 = vsel %vm190, %v2623, -inf
    %2634 = vmax.xlane.f32.xlu0 %v2633
    %v2635 = vpop.xlane.xlu0 %2634
    %v2636 = vsub.f32 %v2620, %v2626
    %v2637 = vsub.f32 %v2621, %v2629
    %v2638 = vsub.f32 %v2622, %v2632
    %v2639 = vsub.f32 %v2623, %v2635
    %v2640 = vmul.f32 %v2636, 1.442695
    %v2641 = vpow.pop %v2640
    %v2642 = vmul.f32 %v2637, 1.442695
    %v2643 = vpow.pop %v2642
    %v2644 = vmul.f32 %v2638, 1.442695
    %v2645 = vpow.pop %v2644
    %v2646 = vmul.f32 %v2639, 1.442695
    %v2647 = vpow.pop %v2646
    %v2648 = vsel %vm190, %v2641, 0.0
    %2649 = vadd.xlane.f32.xlu0 %v2648
    %v2650 = vpop.xlane.xlu0 %2649
    %v2651 = vsel %vm190, %v2643, 0.0
    %2652 = vadd.xlane.f32.xlu0 %v2651
    %v2653 = vpop.xlane.xlu0 %2652
    %v2654 = vsel %vm190, %v2645, 0.0
    %2655 = vadd.xlane.f32.xlu0 %v2654
    %v2656 = vpop.xlane.xlu0 %2655
    %v2657 = vsel %vm190, %v2647, 0.0
    %2658 = vadd.xlane.f32.xlu0 %v2657
    %v2659 = vpop.xlane.xlu0 %2658
    %v2660 = vrcp.pop %v2650
    %v2661 = vrcp.pop %v2653
    %v2662 = vrcp.pop %v2656
    %v2663 = vrcp.pop %v2659
    %v2664 = vmul.f32 %v2641, %v2660
    %v2665 = vmul.f32 %v2643, %v2661
    %v2666 = vmul.f32 %v2645, %v2662
    %v2667 = vmul.f32 %v2647, %v2663
    %v2668 = vpack.c.bf16 %v2577, %v2576
    %v2669 = vpack.c.bf16 %v2579, %v2578
    %v2670 = vpack.c.bf16 %v2665, %v2664
    %v2671 = vpack.c.bf16 %v2667, %v2666
    %v2672 = vpack.c.bf16 %v1283, %v1282
    %v2673 = vpack.c.bf16 %v1285, %v1284
    %v2675 = vsel %vm190, %v2668, 0
    %v2678 = vsel %vm190, %v2669, 0
    %v2681 = vsel %vm190, %v2670, 0
    %v2684 = vsel %vm190, %v2671, 0
    %2686 = vmatprep.subr.bf16.mxu0 0
    %2687 = vmatpush1.bf16.msra.mxu0 %v2672
    %2688 = vmatprep.subr.bf16.mxu0 0
    %2689 = vmatpush1.bf16.msra.mxu0 %v2673
    %2690 = vmatprep.subr.bf16.mxu0 0
    %2691 = vmatpush1.bf16.msra.mxu0 0
    %2692 = vmatprep.subr.bf16.mxu0 0
    %2693 = vmatpush1.bf16.msra.mxu0 0
    %2694 = vmatprep.subr.bf16.mxu0 0
    %2695 = vmatpush1.bf16.msra.mxu0 0
    %2696 = vmatprep.subr.bf16.mxu0 0
    %2697 = vmatpush1.bf16.msra.mxu0 0
    %2698 = vmatprep.subr.bf16.mxu0 0
    %2699 = vmatpush1.bf16.msra.mxu0 0
    %2700 = vmatprep.subr.bf16.mxu0 0
    %2701 = vmatpush1.bf16.msra.mxu0 0
    %2702 = vmatprep.subr.bf16.mxu0 0
    %2703 = vmatpush1.bf16.msra.mxu0 0
    %2704 = vmatprep.subr.bf16.mxu0 0
    %2705 = vmatpush1.bf16.msra.mxu0 0
    %2706 = vmatprep.subr.bf16.mxu0 0
    %2707 = vmatpush1.bf16.msra.mxu0 0
    %2708 = vmatprep.subr.bf16.mxu0 0
    %2709 = vmatpush1.bf16.msra.mxu0 0
    %2710 = vmatprep.subr.bf16.mxu0 0
    %2711 = vmatpush1.bf16.msra.mxu0 0
    %2712 = vmatprep.subr.bf16.mxu0 0
    %2713 = vmatpush1.bf16.msra.mxu0 0
    %2714 = vmatprep.subr.bf16.mxu0 0
    %2715 = vmatpush1.bf16.msra.mxu0 0
    %2716 = vmatprep.subr.bf16.mxu0 0
    %2717 = vmatpush1.bf16.msra.mxu0 0
    %2718 = vmatprep.mubr.bf16.mxu0 0
    %2719 = vmatmul.mubr.bf16.gmra.mrb[0].mxu0 %v2675
    %v2720 = vpop.f32.mrb[0].mxu0
    %v2721 = vadd.f32 0.0, %v2720
    %v2722 = vpop.f32.mrb[0].mxu0
    %v2723 = vpop.f32.mrb[0].mxu0
    %v2724 = vadd.f32 0.0, %v2723
    %v2725 = vpop.f32.mrb[0].mxu0
    %2726 = vmatprep.mubr.bf16.mxu0 0
    %2727 = vmatmul.mubr.bf16.gmra.mrb[0].mxu0 %v2678
    %v2728 = vpop.f32.mrb[0].mxu0
    %v2729 = vadd.f32 0.0, %v2728
    %v2730 = vpop.f32.mrb[0].mxu0
    %v2731 = vpop.f32.mrb[0].mxu0
    %v2732 = vadd.f32 0.0, %v2731
    %v2733 = vpop.f32.mrb[0].mxu0
    %2734 = vmatprep.mubr.bf16.mxu0 0
    %2735 = vmatmul.mubr.bf16.gmra.mrb[0].mxu0 %v2681
    %v2736 = vpop.f32.mrb[0].mxu0
    %v2737 = vadd.f32 0.0, %v2736
    %v2738 = vpop.f32.mrb[0].mxu0
    %v2739 = vpop.f32.mrb[0].mxu0
    %v2740 = vadd.f32 0.0, %v2739
    %v2741 = vpop.f32.mrb[0].mxu0
    %2742 = vmatprep.mubr.bf16.mxu0 0
    %2743 = vmatmul.mubr.bf16.gmra.mrb[0].mxu0 %v2684
    %v2744 = vpop.f32.mrb[0].mxu0
    %v2745 = vadd.f32 0.0, %v2744
    %v2746 = vpop.f32.mrb[0].mxu0
    %v2747 = vpop.f32.mrb[0].mxu0
    %v2748 = vadd.f32 0.0, %v2747
    %v2749 = vpop.f32.mrb[0].mxu0
    %2750 = vdwg.mxu0
    %v2751 = vlaneseq
    %v2752 = vshrl.u32 %v2751, 7
    %v2753 = vsub.s32 2, %v2752
    %v2754 = vrot.slane %v2392, %v2753
    %v2755 = vadd.f32 %v2721, %v2754
    %v2756 = vadd.f32 %v2724, %v2754
    %v2757 = vadd.f32 %v2729, %v2754
    %v2758 = vadd.f32 %v2732, %v2754
    %v2759 = vmul.f32 %v2755, %v1674
    %v2760 = vmul.f32 %v2756, %v1679
    %v2761 = vmul.f32 %v2757, %v1684
    %v2762 = vmul.f32 %v2758, %v1689
    %v2763 = vsel %vm190, %v2759, 0.0
    %v2764 = vsel %vm190, %v2760, 0.0
    %v2765 = vadd.f32 %v2763, %v2764
    %v2766 = vsel %vm190, %v2761, 0.0
    %v2767 = vadd.f32 %v2765, %v2766
    %v2768 = vsel %vm190, %v2762, 0.0
    %v2769 = vadd.f32 %v2767, %v2768
    %v2770 = vrot.slane %v2769, 4
    %v2771 = vadd.f32 %v2769, %v2770
    %v2772 = vrot.slane %v2771, 2
    %v2773 = vadd.f32 %v2771, %v2772
    %v2774 = vrot.slane %v2773, 1
    %v2775 = vadd.f32 %v2773, %v2774
    %v2776 = vmul.f32 %v2775, %v1711
    %v2777 = vsub.f32 %v2755, %v2776
    %v2778 = vsub.f32 %v2756, %v2776
    %v2779 = vsub.f32 %v2757, %v2776
    %v2780 = vsub.f32 %v2758, %v2776
    %v2781 = vmul.f32 %v2777, %v2777
    %v2782 = vmul.f32 %v2778, %v2778
    %v2783 = vmul.f32 %v2779, %v2779
    %v2784 = vmul.f32 %v2780, %v2780
    %v2785 = vmul.f32 %v2781, %v1674
    %v2786 = vmul.f32 %v2782, %v1679
    %v2787 = vmul.f32 %v2783, %v1684
    %v2788 = vmul.f32 %v2784, %v1689
    %v2789 = vsel %vm190, %v2785, 0.0
    %v2790 = vsel %vm190, %v2786, 0.0
    %v2791 = vadd.f32 %v2789, %v2790
    %v2792 = vsel %vm190, %v2787, 0.0
    %v2793 = vadd.f32 %v2791, %v2792
    %v2794 = vsel %vm190, %v2788, 0.0
    %v2795 = vadd.f32 %v2793, %v2794
    %v2796 = vrot.slane %v2795, 4
    %v2797 = vadd.f32 %v2795, %v2796
    %v2798 = vrot.slane %v2797, 2
    %v2799 = vadd.f32 %v2797, %v2798
    %v2800 = vrot.slane %v2799, 1
    %v2801 = vadd.f32 %v2799, %v2800
    %v2802 = vmul.f32 %v2801, %v1711
    %v2803 = vadd.f32 %v2802, 1e-05
    %v2804 = vrsqrt.pop %v2803
    %v2805 = vmul.f32 %v2777, %v2804
    %v2806 = vmul.f32 %v2778, %v2804
    %v2807 = vmul.f32 %v2779, %v2804
    %v2808 = vmul.f32 %v2780, %v2804
    %v2809 = vlaneseq
    %v2810 = vshrl.u32 %v2809, 7
    %v2811 = vsub.s32 3, %v2810
    %v2812 = vrot.slane %v2392, %v2811
    %v2813 = vmul.f32 %v2805, %v2812
    %v2814 = vmul.f32 %v2806, %v2812
    %v2815 = vmul.f32 %v2807, %v2812
    %v2816 = vmul.f32 %v2808, %v2812
    %v2817 = vlaneseq
    %v2818 = vshrl.u32 %v2817, 7
    %v2819 = vsub.s32 4, %v2818
    %v2820 = vrot.slane %v2392, %v2819
    %v2821 = vadd.f32 %v2813, %v2820
    %v2822 = vadd.f32 %v2814, %v2820
    %v2823 = vadd.f32 %v2815, %v2820
    %v2824 = vadd.f32 %v2816, %v2820
    %vm2825 = vcmp.gt.f32.partialorder %v2821, 0.0
    %vm2826 = vcmp.gt.f32.partialorder %v2822, 0.0
    %vm2827 = vcmp.gt.f32.partialorder %v2823, 0.0
    %vm2828 = vcmp.gt.f32.partialorder %v2824, 0.0
    %v2829 = vlaneseq
    %v2830 = vshrl.u32 %v2829, 7
    %v2831 = vsub.s32 5, %v2830
    %v2832 = vrot.slane %v2392, %v2831
    %v2833 = vmul.f32 %v2832, %v2821
    %v2834 = vmul.f32 %v2832, %v2822
    %v2835 = vmul.f32 %v2832, %v2823
    %v2836 = vmul.f32 %v2832, %v2824
    %v2837 = vsel %vm2825, %v2821, %v2833
    %v2838 = vsel %vm2826, %v2822, %v2834
    %v2839 = vsel %vm2827, %v2823, %v2835
    %v2840 = vsel %vm2828, %v2824, %v2836
    %v2841 = vmul.f32 %v2837, %v1674
    %v2842 = vmul.f32 %v2838, %v1679
    %v2843 = vmul.f32 %v2839, %v1684
    %v2844 = vmul.f32 %v2840, %v1689
    %v2845 = vadd.f32 %v2737, %v2754
    %v2846 = vadd.f32 %v2740, %v2754
    %v2847 = vadd.f32 %v2745, %v2754
    %v2848 = vadd.f32 %v2748, %v2754
    %v2849 = vmul.f32 %v2845, %v1674
    %v2850 = vmul.f32 %v2846, %v1679
    %v2851 = vmul.f32 %v2847, %v1684
    %v2852 = vmul.f32 %v2848, %v1689
    %v2853 = vsel %vm190, %v2849, 0.0
    %v2854 = vsel %vm190, %v2850, 0.0
    %v2855 = vadd.f32 %v2853, %v2854
    %v2856 = vsel %vm190, %v2851, 0.0
    %v2857 = vadd.f32 %v2855, %v2856
    %v2858 = vsel %vm190, %v2852, 0.0
    %v2859 = vadd.f32 %v2857, %v2858
    %v2860 = vrot.slane %v2859, 4
    %v2861 = vadd.f32 %v2859, %v2860
    %v2862 = vrot.slane %v2861, 2
    %v2863 = vadd.f32 %v2861, %v2862
    %v2864 = vrot.slane %v2863, 1
    %v2865 = vadd.f32 %v2863, %v2864
    %v2866 = vmul.f32 %v2865, %v1711
    %v2867 = vsub.f32 %v2845, %v2866
    %v2868 = vsub.f32 %v2846, %v2866
    %v2869 = vsub.f32 %v2847, %v2866
    %v2870 = vsub.f32 %v2848, %v2866
    %v2871 = vmul.f32 %v2867, %v2867
    %v2872 = vmul.f32 %v2868, %v2868
    %v2873 = vmul.f32 %v2869, %v2869
    %v2874 = vmul.f32 %v2870, %v2870
    %v2875 = vmul.f32 %v2871, %v1674
    %v2876 = vmul.f32 %v2872, %v1679
    %v2877 = vmul.f32 %v2873, %v1684
    %v2878 = vmul.f32 %v2874, %v1689
    %v2879 = vsel %vm190, %v2875, 0.0
    %v2880 = vsel %vm190, %v2876, 0.0
    %v2881 = vadd.f32 %v2879, %v2880
    %v2882 = vsel %vm190, %v2877, 0.0
    %v2883 = vadd.f32 %v2881, %v2882
    %v2884 = vsel %vm190, %v2878, 0.0
    %v2885 = vadd.f32 %v2883, %v2884
    %v2886 = vrot.slane %v2885, 4
    %v2887 = vadd.f32 %v2885, %v2886
    %v2888 = vrot.slane %v2887, 2
    %v2889 = vadd.f32 %v2887, %v2888
    %v2890 = vrot.slane %v2889, 1
    %v2891 = vadd.f32 %v2889, %v2890
    %v2892 = vmul.f32 %v2891, %v1711
    %v2893 = vadd.f32 %v2892, 1e-05
    %v2894 = vrsqrt.pop %v2893
    %v2895 = vmul.f32 %v2867, %v2894
    %v2896 = vmul.f32 %v2868, %v2894
    %v2897 = vmul.f32 %v2869, %v2894
    %v2898 = vmul.f32 %v2870, %v2894
    %v2899 = vmul.f32 %v2895, %v2812
    %v2900 = vmul.f32 %v2896, %v2812
    %v2901 = vmul.f32 %v2897, %v2812
    %v2902 = vmul.f32 %v2898, %v2812
    %v2903 = vadd.f32 %v2899, %v2820
    %v2904 = vadd.f32 %v2900, %v2820
    %v2905 = vadd.f32 %v2901, %v2820
    %v2906 = vadd.f32 %v2902, %v2820
    %vm2907 = vcmp.gt.f32.partialorder %v2903, 0.0
    %vm2908 = vcmp.gt.f32.partialorder %v2904, 0.0
    %vm2909 = vcmp.gt.f32.partialorder %v2905, 0.0
    %vm2910 = vcmp.gt.f32.partialorder %v2906, 0.0
    %v2911 = vmul.f32 %v2832, %v2903
    %v2912 = vmul.f32 %v2832, %v2904
    %v2913 = vmul.f32 %v2832, %v2905
    %v2914 = vmul.f32 %v2832, %v2906
    %v2915 = vsel %vm2907, %v2903, %v2911
    %v2916 = vsel %vm2908, %v2904, %v2912
    %v2917 = vsel %vm2909, %v2905, %v2913
    %v2918 = vsel %vm2910, %v2906, %v2914
    %v2919 = vmul.f32 %v2915, %v1674
    %v2920 = vmul.f32 %v2916, %v1679
    %v2921 = vmul.f32 %v2917, %v1684
    %v2922 = vmul.f32 %v2918, %v1689
    %v2923 = vadd.f32 %v1778, %v2841
    %v2924 = vadd.f32 %v1779, %v2842
    %v2925 = vadd.f32 %v1780, %v2843
    %v2926 = vadd.f32 %v1781, %v2844
    %v2927 = vmul.f32 %v2387, %v2387
    %v2928 = vmul.f32 %v2388, %v2388
    %v2929 = vmul.f32 %v2389, %v2389
    %v2930 = vmul.f32 %v2390, %v2390
    %v2931 = vsel %vm190, %v2927, 0.0
    %2932 = vadd.xlane.f32.xlu0 %v2931
    %v2933 = vpop.xlane.xlu0 %2932
    %v2934 = vsel %vm190, %v2928, 0.0
    %2935 = vadd.xlane.f32.xlu0 %v2934
    %v2936 = vpop.xlane.xlu0 %2935
    %v2937 = vsel %vm190, %v2929, 0.0
    %2938 = vadd.xlane.f32.xlu0 %v2937
    %v2939 = vpop.xlane.xlu0 %2938
    %v2940 = vsel %vm190, %v2930, 0.0
    %2941 = vadd.xlane.f32.xlu0 %v2940
    %v2942 = vpop.xlane.xlu0 %2941
    %v2943 = vmax.f32 %v2933, 1e-24
    %v2944 = vmax.f32 %v2936, 1e-24
    %v2945 = vmax.f32 %v2939, 1e-24
    %v2946 = vmax.f32 %v2942, 1e-24
    %v2947 = vrsqrt.pop %v2943
    %v2948 = vrsqrt.pop %v2944
    %v2949 = vrsqrt.pop %v2945
    %v2950 = vrsqrt.pop %v2946
    %v2951 = vmul.f32 %v2387, %v2947
    %v2952 = vmul.f32 %v2388, %v2948
    %v2953 = vmul.f32 %v2389, %v2949
    %v2954 = vmul.f32 %v2390, %v2950
    %v2955 = vmul.f32 %v2923, %v2923
    %v2956 = vmul.f32 %v2924, %v2924
    %v2957 = vmul.f32 %v2925, %v2925
    %v2958 = vmul.f32 %v2926, %v2926
    %v2959 = vsel %vm190, %v2955, 0.0
    %2960 = vadd.xlane.f32.xlu0 %v2959
    %v2961 = vpop.xlane.xlu0 %2960
    %v2962 = vsel %vm190, %v2956, 0.0
    %2963 = vadd.xlane.f32.xlu0 %v2962
    %v2964 = vpop.xlane.xlu0 %2963
    %v2965 = vsel %vm190, %v2957, 0.0
    %2966 = vadd.xlane.f32.xlu0 %v2965
    %v2967 = vpop.xlane.xlu0 %2966
    %v2968 = vsel %vm190, %v2958, 0.0
    %2969 = vadd.xlane.f32.xlu0 %v2968
    %v2970 = vpop.xlane.xlu0 %2969
    %v2971 = vmax.f32 %v2961, 1e-24
    %v2972 = vmax.f32 %v2964, 1e-24
    %v2973 = vmax.f32 %v2967, 1e-24
    %v2974 = vmax.f32 %v2970, 1e-24
    %v2975 = vrsqrt.pop %v2971
    %v2976 = vrsqrt.pop %v2972
    %v2977 = vrsqrt.pop %v2973
    %v2978 = vrsqrt.pop %v2974
    %v2979 = vmul.f32 %v2923, %v2975
    %v2980 = vmul.f32 %v2924, %v2976
    %v2981 = vmul.f32 %v2925, %v2977
    %v2982 = vmul.f32 %v2926, %v2978
    %v2983 = vmul.f32 %v2951, %v2979
    %v2984 = vmul.f32 %v2952, %v2980
    %v2985 = vmul.f32 %v2953, %v2981
    %v2986 = vmul.f32 %v2954, %v2982
    %v2987 = vsel %vm190, %v2983, 0.0
    %2988 = vadd.xlane.f32.xlu0 %v2987
    %v2989 = vpop.xlane.xlu0 %2988
    %v2990 = vsel %vm190, %v2984, 0.0
    %2991 = vadd.xlane.f32.xlu0 %v2990
    %v2992 = vpop.xlane.xlu0 %2991
    %v2993 = vsel %vm190, %v2985, 0.0
    %2994 = vadd.xlane.f32.xlu0 %v2993
    %v2995 = vpop.xlane.xlu0 %2994
    %v2996 = vsel %vm190, %v2986, 0.0
    %2997 = vadd.xlane.f32.xlu0 %v2996
    %v2998 = vpop.xlane.xlu0 %2997
    %v2999 = vsel %vm881, %v1972, 0.0
    %v3000 = vsel %vm881, %v1973, 0.0
    %v3001 = vadd.f32 %v2999, %v3000
    %v3002 = vsel %vm881, %v1974, 0.0
    %v3003 = vadd.f32 %v3001, %v3002
    %v3004 = vsel %vm881, %v1975, 0.0
    %v3005 = vadd.f32 %v3003, %v3004
    %v3006 = vrot.slane %v3005, 4
    %v3007 = vadd.f32 %v3005, %v3006
    %v3008 = vrot.slane %v3007, 2
    %v3009 = vadd.f32 %v3007, %v3008
    %v3010 = vrot.slane %v3009, 1
    %v3011 = vadd.f32 %v3009, %v3010
    %v3012 = vsub.f32 1.0, %v2989
    %v3013 = vsub.f32 1.0, %v2992
    %v3014 = vsub.f32 1.0, %v2995
    %v3015 = vsub.f32 1.0, %v2998
    %v3016 = vmul.f32 %v3012, %v1972
    %v3017 = vmul.f32 %v3013, %v1973
    %v3018 = vmul.f32 %v3014, %v1974
    %v3019 = vmul.f32 %v3015, %v1975
    %v3020 = vsel %vm881, %v3016, 0.0
    %v3021 = vsel %vm881, %v3017, 0.0
    %v3022 = vadd.f32 %v3020, %v3021
    %v3023 = vsel %vm881, %v3018, 0.0
    %v3024 = vadd.f32 %v3022, %v3023
    %v3025 = vsel %vm881, %v3019, 0.0
    %v3026 = vadd.f32 %v3024, %v3025
    %v3027 = vrot.slane %v3026, 4
    %v3028 = vadd.f32 %v3026, %v3027
    %v3029 = vrot.slane %v3028, 2
    %v3030 = vadd.f32 %v3028, %v3029
    %v3031 = vrot.slane %v3030, 1
    %v3032 = vadd.f32 %v3030, %v3031
    %v3033 = vrcp.pop %v3011
    %v3034 = vmul.f32 %v3032, %v3033
    %v3035 = vadd.f32 %v3034, 0.0
    %v3036 = vadd.f32 %v2309, %v2841
    %v3037 = vadd.f32 %v2310, %v2842
    %v3038 = vadd.f32 %v2311, %v2843
    %v3039 = vadd.f32 %v2312, %v2844
    %v3040 = vmul.f32 %v1856, %v1856
    %v3041 = vmul.f32 %v1857, %v1857
    %v3042 = vmul.f32 %v1858, %v1858
    %v3043 = vmul.f32 %v1859, %v1859
    %v3044 = vsel %vm190, %v3040, 0.0
    %3045 = vadd.xlane.f32.xlu0 %v3044
    %v3046 = vpop.xlane.xlu0 %3045
    %v3047 = vsel %vm190, %v3041, 0.0
    %3048 = vadd.xlane.f32.xlu0 %v3047
    %v3049 = vpop.xlane.xlu0 %3048
    %v3050 = vsel %vm190, %v3042, 0.0
    %3051 = vadd.xlane.f32.xlu0 %v3050
    %v3052 = vpop.xlane.xlu0 %3051
    %v3053 = vsel %vm190, %v3043, 0.0
    %3054 = vadd.xlane.f32.xlu0 %v3053
    %v3055 = vpop.xlane.xlu0 %3054
    %v3056 = vmax.f32 %v3046, 1e-24
    %v3057 = vmax.f32 %v3049, 1e-24
    %v3058 = vmax.f32 %v3052, 1e-24
    %v3059 = vmax.f32 %v3055, 1e-24
    %v3060 = vrsqrt.pop %v3056
    %v3061 = vrsqrt.pop %v3057
    %v3062 = vrsqrt.pop %v3058
    %v3063 = vrsqrt.pop %v3059
    %v3064 = vmul.f32 %v1856, %v3060
    %v3065 = vmul.f32 %v1857, %v3061
    %v3066 = vmul.f32 %v1858, %v3062
    %v3067 = vmul.f32 %v1859, %v3063
    %v3068 = vmul.f32 %v3036, %v3036
    %v3069 = vmul.f32 %v3037, %v3037
    %v3070 = vmul.f32 %v3038, %v3038
    %v3071 = vmul.f32 %v3039, %v3039
    %v3072 = vsel %vm190, %v3068, 0.0
    %3073 = vadd.xlane.f32.xlu0 %v3072
    %v3074 = vpop.xlane.xlu0 %3073
    %v3075 = vsel %vm190, %v3069, 0.0
    %3076 = vadd.xlane.f32.xlu0 %v3075
    %v3077 = vpop.xlane.xlu0 %3076
    %v3078 = vsel %vm190, %v3070, 0.0
    %3079 = vadd.xlane.f32.xlu0 %v3078
    %v3080 = vpop.xlane.xlu0 %3079
    %v3081 = vsel %vm190, %v3071, 0.0
    %3082 = vadd.xlane.f32.xlu0 %v3081
    %v3083 = vpop.xlane.xlu0 %3082
    %v3084 = vmax.f32 %v3074, 1e-24
    %v3085 = vmax.f32 %v3077, 1e-24
    %v3086 = vmax.f32 %v3080, 1e-24
    %v3087 = vmax.f32 %v3083, 1e-24
    %v3088 = vrsqrt.pop %v3084
    %v3089 = vrsqrt.pop %v3085
    %v3090 = vrsqrt.pop %v3086
    %v3091 = vrsqrt.pop %v3087
    %v3092 = vmul.f32 %v3036, %v3088
    %v3093 = vmul.f32 %v3037, %v3089
    %v3094 = vmul.f32 %v3038, %v3090
    %v3095 = vmul.f32 %v3039, %v3091
    %v3096 = vmul.f32 %v3064, %v3092
    %v3097 = vmul.f32 %v3065, %v3093
    %v3098 = vmul.f32 %v3066, %v3094
    %v3099 = vmul.f32 %v3067, %v3095
    %v3100 = vsel %vm190, %v3096, 0.0
    %3101 = vadd.xlane.f32.xlu0 %v3100
    %v3102 = vpop.xlane.xlu0 %3101
    %v3103 = vsel %vm190, %v3097, 0.0
    %3104 = vadd.xlane.f32.xlu0 %v3103
    %v3105 = vpop.xlane.xlu0 %3104
    %v3106 = vsel %vm190, %v3098, 0.0
    %3107 = vadd.xlane.f32.xlu0 %v3106
    %v3108 = vpop.xlane.xlu0 %3107
    %v3109 = vsel %vm190, %v3099, 0.0
    %3110 = vadd.xlane.f32.xlu0 %v3109
    %v3111 = vpop.xlane.xlu0 %3110
    %v3112 = vsel %vm881, %v1401, 0.0
    %v3113 = vsel %vm881, %v1402, 0.0
    %v3114 = vadd.f32 %v3112, %v3113
    %v3115 = vsel %vm881, %v1403, 0.0
    %v3116 = vadd.f32 %v3114, %v3115
    %v3117 = vsel %vm881, %v1404, 0.0
    %v3118 = vadd.f32 %v3116, %v3117
    %v3119 = vrot.slane %v3118, 4
    %v3120 = vadd.f32 %v3118, %v3119
    %v3121 = vrot.slane %v3120, 2
    %v3122 = vadd.f32 %v3120, %v3121
    %v3123 = vrot.slane %v3122, 1
    %v3124 = vadd.f32 %v3122, %v3123
    %v3125 = vsub.f32 1.0, %v3102
    %v3126 = vsub.f32 1.0, %v3105
    %v3127 = vsub.f32 1.0, %v3108
    %v3128 = vsub.f32 1.0, %v3111
    %v3129 = vmul.f32 %v3125, %v1401
    %v3130 = vmul.f32 %v3126, %v1402
    %v3131 = vmul.f32 %v3127, %v1403
    %v3132 = vmul.f32 %v3128, %v1404
    %v3133 = vsel %vm881, %v3129, 0.0
    %v3134 = vsel %vm881, %v3130, 0.0
    %v3135 = vadd.f32 %v3133, %v3134
    %v3136 = vsel %vm881, %v3131, 0.0
    %v3137 = vadd.f32 %v3135, %v3136
    %v3138 = vsel %vm881, %v3132, 0.0
    %v3139 = vadd.f32 %v3137, %v3138
    %v3140 = vrot.slane %v3139, 4
    %v3141 = vadd.f32 %v3139, %v3140
    %v3142 = vrot.slane %v3141, 2
    %v3143 = vadd.f32 %v3141, %v3142
    %v3144 = vrot.slane %v3143, 1
    %v3145 = vadd.f32 %v3143, %v3144
    %v3146 = vrcp.pop %v3124
    %v3147 = vmul.f32 %v3145, %v3146
    %v3148 = vadd.f32 %v3035, %v3147
    %v3149 = vadd.f32 %v1778, %v2309
    %v3150 = vadd.f32 %v1779, %v2310
    %v3151 = vadd.f32 %v1780, %v2311
    %v3152 = vadd.f32 %v1781, %v2312
    %v3153 = vmul.f32 %v2919, %v2919
    %v3154 = vmul.f32 %v2920, %v2920
    %v3155 = vmul.f32 %v2921, %v2921
    %v3156 = vmul.f32 %v2922, %v2922
    %v3157 = vsel %vm190, %v3153, 0.0
    %3158 = vadd.xlane.f32.xlu0 %v3157
    %v3159 = vpop.xlane.xlu0 %3158
    %v3160 = vsel %vm190, %v3154, 0.0
    %3161 = vadd.xlane.f32.xlu0 %v3160
    %v3162 = vpop.xlane.xlu0 %3161
    %v3163 = vsel %vm190, %v3155, 0.0
    %3164 = vadd.xlane.f32.xlu0 %v3163
    %v3165 = vpop.xlane.xlu0 %3164
    %v3166 = vsel %vm190, %v3156, 0.0
    %3167 = vadd.xlane.f32.xlu0 %v3166
    %v3168 = vpop.xlane.xlu0 %3167
    %v3169 = vmax.f32 %v3159, 1e-24
    %v3170 = vmax.f32 %v3162, 1e-24
    %v3171 = vmax.f32 %v3165, 1e-24
    %v3172 = vmax.f32 %v3168, 1e-24
    %v3173 = vrsqrt.pop %v3169
    %v3174 = vrsqrt.pop %v3170
    %v3175 = vrsqrt.pop %v3171
    %v3176 = vrsqrt.pop %v3172
    %v3177 = vmul.f32 %v2919, %v3173
    %v3178 = vmul.f32 %v2920, %v3174
    %v3179 = vmul.f32 %v2921, %v3175
    %v3180 = vmul.f32 %v2922, %v3176
    %v3181 = vmul.f32 %v3149, %v3149
    %v3182 = vmul.f32 %v3150, %v3150
    %v3183 = vmul.f32 %v3151, %v3151
    %v3184 = vmul.f32 %v3152, %v3152
    %v3185 = vsel %vm190, %v3181, 0.0
    %3186 = vadd.xlane.f32.xlu0 %v3185
    %v3187 = vpop.xlane.xlu0 %3186
    %v3188 = vsel %vm190, %v3182, 0.0
    %3189 = vadd.xlane.f32.xlu0 %v3188
    %v3190 = vpop.xlane.xlu0 %3189
    %v3191 = vsel %vm190, %v3183, 0.0
    %3192 = vadd.xlane.f32.xlu0 %v3191
    %v3193 = vpop.xlane.xlu0 %3192
    %v3194 = vsel %vm190, %v3184, 0.0
    %3195 = vadd.xlane.f32.xlu0 %v3194
    %v3196 = vpop.xlane.xlu0 %3195
    %v3197 = vmax.f32 %v3187, 1e-24
    %v3198 = vmax.f32 %v3190, 1e-24
    %v3199 = vmax.f32 %v3193, 1e-24
    %v3200 = vmax.f32 %v3196, 1e-24
    %v3201 = vrsqrt.pop %v3197
    %v3202 = vrsqrt.pop %v3198
    %v3203 = vrsqrt.pop %v3199
    %v3204 = vrsqrt.pop %v3200
    %v3205 = vmul.f32 %v3149, %v3201
    %v3206 = vmul.f32 %v3150, %v3202
    %v3207 = vmul.f32 %v3151, %v3203
    %v3208 = vmul.f32 %v3152, %v3204
    %v3209 = vmul.f32 %v3177, %v3205
    %v3210 = vmul.f32 %v3178, %v3206
    %v3211 = vmul.f32 %v3179, %v3207
    %v3212 = vmul.f32 %v3180, %v3208
    %v3213 = vsel %vm190, %v3209, 0.0
    %3214 = vadd.xlane.f32.xlu0 %v3213
    %v3215 = vpop.xlane.xlu0 %3214
    %v3216 = vsel %vm190, %v3210, 0.0
    %3217 = vadd.xlane.f32.xlu0 %v3216
    %v3218 = vpop.xlane.xlu0 %3217
    %v3219 = vsel %vm190, %v3211, 0.0
    %3220 = vadd.xlane.f32.xlu0 %v3219
    %v3221 = vpop.xlane.xlu0 %3220
    %v3222 = vsel %vm190, %v3212, 0.0
    %3223 = vadd.xlane.f32.xlu0 %v3222
    %v3224 = vpop.xlane.xlu0 %3223
    %v3225 = vsel %vm881, %v2504, 0.0
    %v3226 = vsel %vm881, %v2505, 0.0
    %v3227 = vadd.f32 %v3225, %v3226
    %v3228 = vsel %vm881, %v2506, 0.0
    %v3229 = vadd.f32 %v3227, %v3228
    %v3230 = vsel %vm881, %v2507, 0.0
    %v3231 = vadd.f32 %v3229, %v3230
    %v3232 = vrot.slane %v3231, 4
    %v3233 = vadd.f32 %v3231, %v3232
    %v3234 = vrot.slane %v3233, 2
    %v3235 = vadd.f32 %v3233, %v3234
    %v3236 = vrot.slane %v3235, 1
    %v3237 = vadd.f32 %v3235, %v3236
    %v3238 = vsub.f32 1.0, %v3215
    %v3239 = vsub.f32 1.0, %v3218
    %v3240 = vsub.f32 1.0, %v3221
    %v3241 = vsub.f32 1.0, %v3224
    %v3242 = vmul.f32 %v3238, %v2504
    %v3243 = vmul.f32 %v3239, %v2505
    %v3244 = vmul.f32 %v3240, %v2506
    %v3245 = vmul.f32 %v3241, %v2507
    %v3246 = vsel %vm881, %v3242, 0.0
    %v3247 = vsel %vm881, %v3243, 0.0
    %v3248 = vadd.f32 %v3246, %v3247
    %v3249 = vsel %vm881, %v3244, 0.0
    %v3250 = vadd.f32 %v3248, %v3249
    %v3251 = vsel %vm881, %v3245, 0.0
    %v3252 = vadd.f32 %v3250, %v3251
    %v3253 = vrot.slane %v3252, 4
    %v3254 = vadd.f32 %v3252, %v3253
    %v3255 = vrot.slane %v3254, 2
    %v3256 = vadd.f32 %v3254, %v3255
    %v3257 = vrot.slane %v3256, 1
    %v3258 = vadd.f32 %v3256, %v3257
    %v3259 = vrcp.pop %v3237
    %v3260 = vmul.f32 %v3258, %v3259
    %v3261 = vadd.f32 %v3148, %v3260
    %vm3262 = vcmask 0
    %3263 = vst.msk [vmem:[#allocation2] sm:$0x1] %vm3262, %v3261
    // Predicated region
    $region42: #{cross_view_forward.1} parent=1 // pred_check
      _
    $region43: #{cross_view_forward.1} parent=1 // pred_check_branch
      %3265 = sbr.rel (0) target = $region45
    $region44: #{cross_view_forward.1} parent=1 // pred_region
      %s3267 = ssub.s32 16, 16
      %3268 = vsyncadd [#allocation3], %s3267
      %s3270 = sshll.u32 [#allocation2], 4
      %s3271 = int_to_ptr.vmem [resolvable:$true] %s3270
      %3273 = dma.vmem_to_hbm [thread:$0]  %s3271, 16, %s10, [#allocation3]
    $region45: #{cross_view_forward.1} parent=1 // pred_fallthru
      _
    // Predicated region
    $region46: #{cross_view_forward.1} parent=1 // pred_check
      _
    $region47: #{cross_view_forward.1} parent=1 // pred_check_branch
      %3275 = sbr.rel (0) target = $region49
    $region48: #{cross_view_forward.1} parent=1 // pred_region
      %3276 = dma.done [#allocation3], 16
    $region49: #{cross_view_forward.1} parent=1 // pred_fallthru
      _
    %3277 = vsyncpa [#allocation3], 1

</llo_original>
